<compile_context>
chip_gen: v6e
topology: v6e:2x2x1
jax: 0.10.0
libtpu: 0.0.40
codegen_flags: <defaults>
</compile_context>

<pallas_src>
import functools
import math

import jax
import jax.numpy as jnp
from jax.experimental import pallas as pl
from jax.experimental.pallas import tpu as pltpu


def _neighbor_agg_kernel(q_ref, k_ref, wq_ref, wk_ref, wv_ref, o_ref, *, inv_trans_d):
    # q_ref: (TB, Lq, E)  k_ref: (TB, Lk, E)  w*_ref: (E, H)  o_ref: (TB, Lq, H)
    tb, lq, emb = q_ref.shape
    _, lk, _ = k_ref.shape
    h = wq_ref.shape[1]

    # Fold the batch tile into the matmul M dimension.  These reshapes only merge
    # leading dims (lane/feature axis unchanged, Lq/Lk multiples of 8), so they are
    # layout no-ops.
    q2 = q_ref[...].reshape(tb * lq, emb)
    k2 = k_ref[...].reshape(tb * lk, emb)

    tq = jnp.dot(q2, wq_ref[...], preferred_element_type=jnp.float32).reshape(tb, lq, h)
    tv = jnp.dot(q2, wv_ref[...], preferred_element_type=jnp.float32).reshape(tb, lq, h)
    tk = jnp.dot(k2, wk_ref[...], preferred_element_type=jnp.float32).reshape(tb, lk, h)

    # Batched Q @ K^T without materializing a transpose of K.
    logits = jnp.einsum("bqh,bkh->bqk", tq, tk,
                        preferred_element_type=jnp.float32) * inv_trans_d   # (TB, Lq, Lk)

    # Softmax along the last axis.
    m = jnp.max(logits, axis=-1, keepdims=True)
    ex = jnp.exp(logits - m)
    s = jnp.sum(ex, axis=-1, keepdims=True)
    score = ex * pl.reciprocal(s, approx=True)                              # (TB, Lq, Lk)

    # torch.mul(trans_V, score): elementwise (broadcast) multiply; Lk == H here.
    o_ref[...] = (tv * score).astype(o_ref.dtype)


def neighbor_aggregation(query, key, wq, wk, wv, *, batch_tile=256):
    """query: (B, Lq, E), key: (B, Lk, E), w*: (H, E) PyTorch-style Linear weights."""
    B, Lq, E = query.shape
    Bk, Lk, Ek = key.shape
    H = wq.shape[0]
    assert Bk == B and Ek == E
    # torch.mul(trans_V, score) requires (Lq, H) * (Lq, Lk) to broadcast.
    assert Lk == H or Lk == 1 or H == 1, "elementwise mul requires broadcastable shapes"

    # Batch tiling: TB batches per grid step; pad B up to a multiple of TB.
    tb = min(batch_tile, B)
    n_tiles = pl.cdiv(B, tb)
    b_pad = n_tiles * tb
    if b_pad != B:
        query = jnp.pad(query, ((0, b_pad - B), (0, 0), (0, 0)))
        key = jnp.pad(key, ((0, b_pad - B), (0, 0), (0, 0)))

    # Pre-transpose Linear weights so the kernel does x @ W (glue, not hot path).
    wq_t = wq.T  # (E, H)
    wk_t = wk.T
    wv_t = wv.T

    inv_trans_d = 1.0 / math.sqrt(H)
    kernel = functools.partial(_neighbor_agg_kernel, inv_trans_d=inv_trans_d)

    out = pl.pallas_call(
        kernel,
        out_shape=jax.ShapeDtypeStruct((b_pad, Lq, H), query.dtype),
        grid_spec=pltpu.PrefetchScalarGridSpec(
            num_scalar_prefetch=0,
            grid=(n_tiles,),
            in_specs=[
                pl.BlockSpec((tb, Lq, E), lambda b: (b, 0, 0)),
                pl.BlockSpec((tb, Lk, E), lambda b: (b, 0, 0)),
                pl.BlockSpec((E, H), lambda b: (0, 0)),   # weights stay resident
                pl.BlockSpec((E, H), lambda b: (0, 0)),
                pl.BlockSpec((E, H), lambda b: (0, 0)),
            ],
            out_specs=pl.BlockSpec((tb, Lq, H), lambda b: (b, 0, 0)),
        ),
        compiler_params=pltpu.CompilerParams(
            dimension_semantics=("parallel",),
        ),
    )(query, key, wq_t, wk_t, wv_t)

    return out[:B] if b_pad != B else out


def _reference(query, key, wq, wk, wv):
    tq = query @ wq.T
    tk = key @ wk.T
    tv = query @ wv.T
    logits = jnp.einsum("bqh,bkh->bqk", tq, tk) / math.sqrt(wq.shape[0])
    score = jax.nn.softmax(logits, axis=-1)
    return tv * score


if __name__ == "__main__":
    embed_dim = 8
    hidden_dim = 8
    B, Lq = 48, 16
    Lk = hidden_dim  # key sequence length must equal hidden_dim for torch.mul to broadcast

    key0 = jax.random.PRNGKey(0)
    k1, k2, k3, k4, k5 = jax.random.split(key0, 5)

    query = jax.random.normal(k1, (B, Lq, embed_dim), dtype=jnp.float32)
    key_in = jax.random.normal(k2, (B, Lk, embed_dim), dtype=jnp.float32)

    # Deterministic parameter init (PyTorch nn.Linear weight shape: (hidden_dim, embed_dim)).
    bound = 1.0 / math.sqrt(embed_dim)
    wq = jax.random.uniform(k3, (hidden_dim, embed_dim), jnp.float32, -bound, bound)
    wk = jax.random.uniform(k4, (hidden_dim, embed_dim), jnp.float32, -bound, bound)
    wv = jax.random.uniform(k5, (hidden_dim, embed_dim), jnp.float32, -bound, bound)

    # batch_tile=32 -> grid of 2 tiles (even, good for v7x) and exercises batch padding.
    out = neighbor_aggregation(query, key_in, wq, wk, wv, batch_tile=32)
    out = jax.block_until_ready(out)

    ref = _reference(query, key_in, wq, wk, wv)
    assert out.shape == (B, Lq, hidden_dim)
    # Slightly relaxed tolerance to accommodate the approximate EUP reciprocal.
    assert jnp.allclose(out, ref, atol=1e-3, rtol=1e-3), float(jnp.max(jnp.abs(out - ref)))

    print("KERNEL_OK")
</pallas_src>

<mosaic_0001>
module attributes {stable_mosaic.version = 11 : i64} {
  func.func @_neighbor_agg_kernel(%arg0: i32, %arg1: memref<32x16x8xf32, #tpu.memory_space<vmem>>, %arg2: memref<32x8x8xf32, #tpu.memory_space<vmem>>, %arg3: memref<8x8xf32, #tpu.memory_space<vmem>>, %arg4: memref<8x8xf32, #tpu.memory_space<vmem>>, %arg5: memref<8x8xf32, #tpu.memory_space<vmem>>, %arg6: memref<32x16x8xf32, #tpu.memory_space<vmem>>) attributes {dimension_semantics = [#tpu.dimension_semantics<parallel>], iteration_bounds = array<i64: 2>, scalar_prefetch = 0 : i64, scratch_operands = 0 : i64, tpu.core_type = #tpu.core_type<tc>, window_params = [{transform_indices = @transform_0, window_bounds = array<i64: 32, 16, 8>}, {transform_indices = @transform_1, window_bounds = array<i64: 32, 8, 8>}, {pipeline_mode = #tpu.pipeline_mode<synchronous>, transform_indices = @transform_2, window_bounds = array<i64: 8, 8>}, {pipeline_mode = #tpu.pipeline_mode<synchronous>, transform_indices = @transform_3, window_bounds = array<i64: 8, 8>}, {pipeline_mode = #tpu.pipeline_mode<synchronous>, transform_indices = @transform_4, window_bounds = array<i64: 8, 8>}, {transform_indices = @transform_5, window_bounds = array<i64: 32, 16, 8>}]} {
    %c0 = arith.constant 0 : index
    %c0_0 = arith.constant 0 : index
    %c0_1 = arith.constant 0 : index
    %0 = vector.load %arg1[%c0, %c0_0, %c0_1] : memref<32x16x8xf32, #tpu.memory_space<vmem>>, vector<32x16x8xf32>
    %1 = vector.shape_cast %0 : vector<32x16x8xf32> to vector<512x8xf32>
    %c0_2 = arith.constant 0 : index
    %c0_3 = arith.constant 0 : index
    %c0_4 = arith.constant 0 : index
    %2 = vector.load %arg2[%c0_2, %c0_3, %c0_4] : memref<32x8x8xf32, #tpu.memory_space<vmem>>, vector<32x8x8xf32>
    %3 = vector.shape_cast %2 : vector<32x8x8xf32> to vector<256x8xf32>
    %c0_5 = arith.constant 0 : index
    %c0_6 = arith.constant 0 : index
    %4 = vector.load %arg3[%c0_5, %c0_6] : memref<8x8xf32, #tpu.memory_space<vmem>>, vector<8x8xf32>
    %cst = arith.constant dense<0.000000e+00> : vector<512x8xf32>
    %5 = tpu.matmul %1, %4, %cst {dimension_numbers = #tpu.dot_dimension_numbers<[1], [0], [0], [1], [0, 0, 1, 1], [], []>} : vector<512x8xf32>, vector<8x8xf32>, vector<512x8xf32> -> vector<512x8xf32>
    %6 = vector.shape_cast %5 : vector<512x8xf32> to vector<32x16x8xf32>
    %c0_7 = arith.constant 0 : index
    %c0_8 = arith.constant 0 : index
    %7 = vector.load %arg5[%c0_7, %c0_8] : memref<8x8xf32, #tpu.memory_space<vmem>>, vector<8x8xf32>
    %cst_9 = arith.constant dense<0.000000e+00> : vector<512x8xf32>
    %8 = tpu.matmul %1, %7, %cst_9 {dimension_numbers = #tpu.dot_dimension_numbers<[1], [0], [0], [1], [0, 0, 1, 1], [], []>} : vector<512x8xf32>, vector<8x8xf32>, vector<512x8xf32> -> vector<512x8xf32>
    %9 = vector.shape_cast %8 : vector<512x8xf32> to vector<32x16x8xf32>
    %c0_10 = arith.constant 0 : index
    %c0_11 = arith.constant 0 : index
    %10 = vector.load %arg4[%c0_10, %c0_11] : memref<8x8xf32, #tpu.memory_space<vmem>>, vector<8x8xf32>
    %cst_12 = arith.constant dense<0.000000e+00> : vector<256x8xf32>
    %11 = tpu.matmul %3, %10, %cst_12 {dimension_numbers = #tpu.dot_dimension_numbers<[1], [0], [0], [1], [0, 0, 1, 1], [], []>} : vector<256x8xf32>, vector<8x8xf32>, vector<256x8xf32> -> vector<256x8xf32>
    %12 = vector.shape_cast %11 : vector<256x8xf32> to vector<32x8x8xf32>
    "tpu.trace_start"() <{level = 10 : i32, message = "bqh,bkh->bqk"}> : () -> ()
    %cst_13 = arith.constant dense<0.000000e+00> : vector<32x16x8xf32>
    %13 = tpu.matmul %6, %12, %cst_13 {dimension_numbers = #tpu.dot_dimension_numbers<[2], [2], [1], [1], [0, 0, 0, 1, 1, 1], [0], [0]>} : vector<32x16x8xf32>, vector<32x8x8xf32>, vector<32x16x8xf32> -> vector<32x16x8xf32>
    "tpu.trace_stop"() : () -> ()
    %cst_14 = arith.constant 0.353553385 : f32
    %14 = vector.broadcast %cst_14 : f32 to vector<32x16x8xf32>
    %15 = arith.mulf %13, %14 : vector<32x16x8xf32>
    %cst_15 = arith.constant dense<0xFF800000> : vector<32x16xf32>
    %16 = vector.multi_reduction <maximumf>, %15, %cst_15 [2] : vector<32x16x8xf32> to vector<32x16xf32>
    %17 = vector.shape_cast %16 : vector<32x16xf32> to vector<32x16x1xf32>
    %18 = vector.broadcast %17 : vector<32x16x1xf32> to vector<32x16x8xf32>
    %19 = arith.subf %15, %18 : vector<32x16x8xf32>
    %20 = math.exp %19 : vector<32x16x8xf32>
    %cst_16 = arith.constant dense<0.000000e+00> : vector<32x16xf32>
    %21 = vector.multi_reduction <add>, %20, %cst_16 [2] : vector<32x16x8xf32> to vector<32x16xf32>
    %22 = vector.shape_cast %21 : vector<32x16xf32> to vector<32x16x1xf32>
    %23 = tpu.reciprocal %22 {approx = true} : vector<32x16x1xf32> -> vector<32x16x1xf32>
    %24 = vector.broadcast %23 : vector<32x16x1xf32> to vector<32x16x8xf32>
    %25 = arith.mulf %20, %24 : vector<32x16x8xf32>
    %26 = arith.mulf %9, %25 : vector<32x16x8xf32>
    %c0_17 = arith.constant 0 : index
    %c0_18 = arith.constant 0 : index
    %c0_19 = arith.constant 0 : index
    %27 = vector.load %arg6[%c0_17, %c0_18, %c0_19] : memref<32x16x8xf32, #tpu.memory_space<vmem>>, vector<32x16x8xf32>
    tpu.vector_store %arg6[%c0_17, %c0_18, %c0_19], %26 {strides = array<i32>} : memref<32x16x8xf32, #tpu.memory_space<vmem>>, vector<32x16x8xf32>,
    return
  }
  func.func @transform_0(%arg0: i32) -> (i32, i32, i32) {
    %c0_i32 = arith.constant 0 : i32
    %c0_i32_0 = arith.constant 0 : i32
    %c0_i32_1 = arith.constant 0 : i32
    return %arg0, %c0_i32, %c0_i32_0 : i32, i32, i32
  }
  func.func @transform_1(%arg0: i32) -> (i32, i32, i32) {
    %c0_i32 = arith.constant 0 : i32
    %c0_i32_0 = arith.constant 0 : i32
    %c0_i32_1 = arith.constant 0 : i32
    return %arg0, %c0_i32, %c0_i32_0 : i32, i32, i32
  }
  func.func @transform_2(%arg0: i32) -> (i32, i32) {
    %c0_i32 = arith.constant 0 : i32
    %c0_i32_0 = arith.constant 0 : i32
    %c0_i32_1 = arith.constant 0 : i32
    return %c0_i32, %c0_i32_0 : i32, i32
  }
  func.func @transform_3(%arg0: i32) -> (i32, i32) {
    %c0_i32 = arith.constant 0 : i32
    %c0_i32_0 = arith.constant 0 : i32
    %c0_i32_1 = arith.constant 0 : i32
    return %c0_i32, %c0_i32_0 : i32, i32
  }
  func.func @transform_4(%arg0: i32) -> (i32, i32) {
    %c0_i32 = arith.constant 0 : i32
    %c0_i32_0 = arith.constant 0 : i32
    %c0_i32_1 = arith.constant 0 : i32
    return %c0_i32, %c0_i32_0 : i32, i32
  }
  func.func @transform_5(%arg0: i32) -> (i32, i32, i32) {
    %c0_i32 = arith.constant 0 : i32
    %c0_i32_0 = arith.constant 0 : i32
    %c0_i32_1 = arith.constant 0 : i32
    return %arg0, %c0_i32, %c0_i32_0 : i32, i32, i32
  }
}

</mosaic_0001>

<llo_original>
// kernel: tpu_custom_call.1
$region0: #{tpu_custom_call.1}
  #allocation0 [shape = 'u32[]', space=smem, size = 0x4, offset = 0x4, fixed_abs, tag = 'smem constant byte address 0x4 - core index']
  #allocation1 [shape = 'u32[144,128]{1,0:T(1,128)}', space=vmem, size = 0x12000, scoped, tag = 'internal scratch']
  %s0 = inlined_call_operand.vmem [shape: f32[64,16,8], index: 0, kind: input, shape index: {}]
  %s1 = inlined_call_operand.vmem [shape: f32[64,8,8], index: 1, kind: input, shape index: {}]
  %s2 = inlined_call_operand.vmem [shape: f32[8,8], index: 2, kind: input, shape index: {}]
  %s3 = inlined_call_operand.vmem [shape: f32[8,8], index: 3, kind: input, shape index: {}]
  %s4 = inlined_call_operand.vmem [shape: f32[8,8], index: 4, kind: input, shape index: {}]
  %s5 = inlined_call_operand.vmem [shape: f32[64,16,8], index: 5, kind: output, shape index: {}]
  %s6 = sld [smem:[#allocation0]]
  $region53: #{tpu_custom_call.1} parent=0
    _
  %s8 = ssub.s32 1, %s6
  %s9 = scalar_select 0, %s8, %s6
  loop: start=0, step=1, limit=4
  $region2: #{tpu_custom_call.1} parent=0 // loop_pre_header
    _
  $region3: #{tpu_custom_call.1} parent=0 // loop_header
    %s11 = sphi 0, %s15
    %p12 = scmp.ge.s32.totalorder %s11, 4
    %s21 = sphi 0, %s23
    %s24 = sphi 0, %s21
    %s25 = sphi 0, %s24
    %s41 = sphi 0, %s25
    %s47 = sphi 0, %s49
    %s50 = sphi 0, %s47
    %s51 = sphi 0, %s50
    %s67 = sphi 0, %s51
    %s71 = sphi 0, %s71
    %s73 = sphi 0, %s71
    %s74 = sphi 0, %s73
    %s88 = sphi 0, %s74
    %s92 = sphi 0, %s92
    %s94 = sphi 0, %s92
    %s95 = sphi 0, %s94
    %s109 = sphi 0, %s95
    %s113 = sphi 0, %s113
    %s115 = sphi 0, %s113
    %s116 = sphi 0, %s115
    %s130 = sphi 0, %s116
    %s136 = sphi 0, %s138
    %s139 = sphi 0, %s136
    %s140 = sphi 0, %s139
    %s156 = sphi 0, %s140
  $region4: #{tpu_custom_call.1} parent=0 // loop_header_branch
    %14 = sbr.rel (%p12) target = $region8
  $region5: #{tpu_custom_call.1} parent=0 // loop_body
    %s16 = ssub.s32 %s11, 1
    %s17 = ssub.s32 %s11, 2
    %s18 = sadd.s32 %s11, 1
    %s19 = ssub.s32 %s11, %s18
    %p20 = scmp.eq.s32.totalorder %s19, 0
    %s22 = sadd.s32 %s21, 1
    %s23 = scalar_select %p20, %s21, %s22
    %p26 = pneg %p20
    %p27 = scmp.eq.s32.totalorder %s11, 1
    %p28 = por %p26, %p27
    %p29 = scmp.ne.s32.totalorder %s21, %s24
    %p30 = scmp.eq.s32.totalorder %s11, 0
    %p31 = por %p29, %p30
    %p32 = scmp.ne.s32.totalorder %s21, %s24
    %p33 = scmp.eq.s32.totalorder %s16, 1
    %p34 = por %p32, %p33
    %p35 = scmp.ne.s32.totalorder %s24, %s25
    %p36 = scmp.eq.s32.totalorder %s16, 0
    %p37 = por %p35, %p36
    %p38 = scmp.ne.s32.totalorder %s24, %s25
    %p39 = scmp.eq.s32.totalorder %s17, 1
    %p40 = por %p38, %p39
    %p42 = scmp.ne.s32.totalorder %s25, %s41
    %p43 = scmp.eq.s32.totalorder %s17, 0
    %p44 = por %p42, %p43
    %s45 = ssub.s32 %s11, %s18
    %p46 = scmp.eq.s32.totalorder %s45, 0
    %s48 = sadd.s32 %s47, 1
    %s49 = scalar_select %p46, %s47, %s48
    %p52 = pneg %p46
    %p53 = scmp.eq.s32.totalorder %s11, 1
    %p54 = por %p52, %p53
    %p55 = scmp.ne.s32.totalorder %s47, %s50
    %p56 = scmp.eq.s32.totalorder %s11, 0
    %p57 = por %p55, %p56
    %p58 = scmp.ne.s32.totalorder %s47, %s50
    %p59 = scmp.eq.s32.totalorder %s16, 1
    %p60 = por %p58, %p59
    %p61 = scmp.ne.s32.totalorder %s50, %s51
    %p62 = scmp.eq.s32.totalorder %s16, 0
    %p63 = por %p61, %p62
    %p64 = scmp.ne.s32.totalorder %s50, %s51
    %p65 = scmp.eq.s32.totalorder %s17, 1
    %p66 = por %p64, %p65
    %p68 = scmp.ne.s32.totalorder %s51, %s67
    %p69 = scmp.eq.s32.totalorder %s17, 0
    %p70 = por %p68, %p69
    %s72 = sadd.s32 %s71, 1
    %p75 = scmp.eq.s32.totalorder %s11, 1
    %p76 = scmp.ne.s32.totalorder %s71, %s73
    %p77 = scmp.eq.s32.totalorder %s11, 0
    %p78 = por %p76, %p77
    %p79 = scmp.ne.s32.totalorder %s71, %s73
    %p80 = scmp.eq.s32.totalorder %s16, 1
    %p81 = por %p79, %p80
    %p82 = scmp.ne.s32.totalorder %s73, %s74
    %p83 = scmp.eq.s32.totalorder %s16, 0
    %p84 = por %p82, %p83
    %p85 = scmp.ne.s32.totalorder %s73, %s74
    %p86 = scmp.eq.s32.totalorder %s17, 1
    %p87 = por %p85, %p86
    %p89 = scmp.ne.s32.totalorder %s74, %s88
    %p90 = scmp.eq.s32.totalorder %s17, 0
    %p91 = por %p89, %p90
    %s93 = sadd.s32 %s92, 1
    %p96 = scmp.eq.s32.totalorder %s11, 1
    %p97 = scmp.ne.s32.totalorder %s92, %s94
    %p98 = scmp.eq.s32.totalorder %s11, 0
    %p99 = por %p97, %p98
    %p100 = scmp.ne.s32.totalorder %s92, %s94
    %p101 = scmp.eq.s32.totalorder %s16, 1
    %p102 = por %p100, %p101
    %p103 = scmp.ne.s32.totalorder %s94, %s95
    %p104 = scmp.eq.s32.totalorder %s16, 0
    %p105 = por %p103, %p104
    %p106 = scmp.ne.s32.totalorder %s94, %s95
    %p107 = scmp.eq.s32.totalorder %s17, 1
    %p108 = por %p106, %p107
    %p110 = scmp.ne.s32.totalorder %s95, %s109
    %p111 = scmp.eq.s32.totalorder %s17, 0
    %p112 = por %p110, %p111
    %s114 = sadd.s32 %s113, 1
    %p117 = scmp.eq.s32.totalorder %s11, 1
    %p118 = scmp.ne.s32.totalorder %s113, %s115
    %p119 = scmp.eq.s32.totalorder %s11, 0
    %p120 = por %p118, %p119
    %p121 = scmp.ne.s32.totalorder %s113, %s115
    %p122 = scmp.eq.s32.totalorder %s16, 1
    %p123 = por %p121, %p122
    %p124 = scmp.ne.s32.totalorder %s115, %s116
    %p125 = scmp.eq.s32.totalorder %s16, 0
    %p126 = por %p124, %p125
    %p127 = scmp.ne.s32.totalorder %s115, %s116
    %p128 = scmp.eq.s32.totalorder %s17, 1
    %p129 = por %p127, %p128
    %p131 = scmp.ne.s32.totalorder %s116, %s130
    %p132 = scmp.eq.s32.totalorder %s17, 0
    %p133 = por %p131, %p132
    %s134 = ssub.s32 %s11, %s18
    %p135 = scmp.eq.s32.totalorder %s134, 0
    %s137 = sadd.s32 %s136, 1
    %s138 = scalar_select %p135, %s136, %s137
    %p141 = pneg %p135
    %p142 = scmp.eq.s32.totalorder %s11, 1
    %p143 = por %p141, %p142
    %p144 = scmp.ne.s32.totalorder %s136, %s139
    %p145 = scmp.eq.s32.totalorder %s11, 0
    %p146 = por %p144, %p145
    %p147 = scmp.ne.s32.totalorder %s136, %s139
    %p148 = scmp.eq.s32.totalorder %s16, 1
    %p149 = por %p147, %p148
    %p150 = scmp.ne.s32.totalorder %s139, %s140
    %p151 = scmp.eq.s32.totalorder %s16, 0
    %p152 = por %p150, %p151
    %p153 = scmp.ne.s32.totalorder %s139, %s140
    %p154 = scmp.eq.s32.totalorder %s17, 1
    %p155 = por %p153, %p154
    %p157 = scmp.ne.s32.totalorder %s140, %s156
    %p158 = scmp.eq.s32.totalorder %s17, 0
    %p159 = por %p157, %p158
    %p160 = scmp.le.s32.totalorder 1, %s11
    %p161 = scmp.lt.s32.totalorder %s11, 3
    %p162 = pnand %p160, %p161
    %p163 = pneg %p162
    // Predicated region
    $region9: #{tpu_custom_call.1} parent=5 // pred_check
      _
    $region10: #{tpu_custom_call.1} parent=5 // pred_check_branch
      %165 = sbr.rel (%p162) target = $region12
    $region11: #{tpu_custom_call.1} parent=5 // pred_region
      %s166 = ssub.s32 %s11, 1
      // Predicated region
      $region13: #{tpu_custom_call.1} parent=11 // pred_check
        %p167 = pneg %p84
      $region14: #{tpu_custom_call.1} parent=11 // pred_check_branch
        %169 = sbr.rel (%p167) target = $region16
      $region15: #{tpu_custom_call.1} parent=11 // pred_region
        _
      $region16: #{tpu_custom_call.1} parent=11 // pred_fallthru
        _
      // Predicated region
      $region17: #{tpu_custom_call.1} parent=11 // pred_check
        %p170 = pneg %p105
      $region18: #{tpu_custom_call.1} parent=11 // pred_check_branch
        %172 = sbr.rel (%p170) target = $region20
      $region19: #{tpu_custom_call.1} parent=11 // pred_region
        _
      $region20: #{tpu_custom_call.1} parent=11 // pred_fallthru
        _
      // Predicated region
      $region21: #{tpu_custom_call.1} parent=11 // pred_check
        %p173 = pneg %p126
      $region22: #{tpu_custom_call.1} parent=11 // pred_check_branch
        %175 = sbr.rel (%p173) target = $region24
      $region23: #{tpu_custom_call.1} parent=11 // pred_region
        _
      $region24: #{tpu_custom_call.1} parent=11 // pred_fallthru
        _
    $region12: #{tpu_custom_call.1} parent=5 // pred_fallthru
      _
    %p176 = scmp.lt.s32.totalorder %s11, 2
    // Predicated region
    $region25: #{tpu_custom_call.1} parent=5 // pred_check
      %p177 = pneg %p176
    $region26: #{tpu_custom_call.1} parent=5 // pred_check_branch
      %179 = sbr.rel (%p177) target = $region28
    $region27: #{tpu_custom_call.1} parent=5 // pred_region
      // Predicated region
      $region29: #{tpu_custom_call.1} parent=27 // pred_check
        %p180 = pneg %p31
      $region30: #{tpu_custom_call.1} parent=27 // pred_check_branch
        %182 = sbr.rel (%p180) target = $region32
      $region31: #{tpu_custom_call.1} parent=27 // pred_region
        %s183 = smul.u32 32, %s11
        %p184 = scmp.lt.s32.totalorder %s183, 63
        %s185 = scalar_select %p184, %s183, 63
        %s186 = smul.addr %s185, 2
        %s187 = smul.addr %s186, 8
        %s188 = scalar_lea.vmem %s0, %s187
        %s189 = smul.u32 32, %s11
      $region32: #{tpu_custom_call.1} parent=27 // pred_fallthru
        _
      // Predicated region
      $region33: #{tpu_custom_call.1} parent=27 // pred_check
        %p190 = pneg %p57
      $region34: #{tpu_custom_call.1} parent=27 // pred_check_branch
        %192 = sbr.rel (%p190) target = $region36
      $region35: #{tpu_custom_call.1} parent=27 // pred_region
        %s193 = smul.u32 32, %s11
        %p194 = scmp.lt.s32.totalorder %s193, 63
        %s195 = scalar_select %p194, %s193, 63
        %s196 = smul.addr %s195, 8
        %s197 = scalar_lea.vmem %s1, %s196
        %s198 = smul.u32 32, %s11
      $region36: #{tpu_custom_call.1} parent=27 // pred_fallthru
        _
    $region28: #{tpu_custom_call.1} parent=5 // pred_fallthru
      _
    %p199 = scmp.le.s32.totalorder 1, %s11
    %p200 = scmp.lt.s32.totalorder %s11, 3
    %p201 = pnand %p199, %p200
    %p202 = pneg %p201
    // Predicated region
    $region37: #{tpu_custom_call.1} parent=5 // pred_check
      _
    $region38: #{tpu_custom_call.1} parent=5 // pred_check_branch
      %204 = sbr.rel (%p201) target = $region40
    $region39: #{tpu_custom_call.1} parent=5 // pred_region
      %s205 = ssub.s32 %s11, 1
      %s206 = smul.u32 32, %s16
      %p207 = scmp.lt.s32.totalorder %s206, 63
      %s208 = scalar_select %p207, %s206, 63
      %s209 = smul.addr %s208, 2
      %s210 = smul.addr %s209, 8
      %s211 = scalar_lea.vmem %s0, %s210
      %p212 = pneg %p37
      %p213 = pneg %p34
      %s214 = smul.u32 32, %s16
      %p215 = scmp.lt.s32.totalorder %s214, 63
      %s216 = scalar_select %p215, %s214, 63
      %s217 = smul.addr %s216, 8
      %s218 = scalar_lea.vmem %s1, %s217
      %p219 = pneg %p63
      %p220 = pneg %p60
      %p221 = pneg %p84
      %p222 = pneg %p81
      %p223 = pneg %p105
      %p224 = pneg %p102
      %p225 = pneg %p126
      %p226 = pneg %p123
      %p227 = pneg %p152
      %p228 = pneg %p149
      %s229 = smul.u32 32, %s16
      %p230 = scmp.lt.s32.totalorder %s229, 63
      %s231 = scalar_select %p230, %s229, 63
      %s232 = smul.addr %s231, 2
      %s233 = smul.addr %s232, 8
      %s234 = scalar_lea.vmem %s5, %s233
      %s235 = smul.u32 32, %s16
      %p236 = scmp.lt.s32.totalorder %s235, 63
      %s237 = scalar_select %p236, %s235, 63
      %s238 = smul.addr %s237, 2
      %s239 = smul.addr %s238, 8
      %s240 = scalar_lea.vmem %s0, %s239
      %s241 = smul.u32 32, %s16
      %s242 = smul.u32 32, %s16
      %p243 = scmp.lt.s32.totalorder %s242, 63
      %s244 = scalar_select %p243, %s242, 63
      %s245 = smul.addr %s244, 8
      %s246 = scalar_lea.vmem %s1, %s245
      %s247 = smul.u32 32, %s16
      %s248 = smul.u32 32, %s16
      %p249 = scmp.lt.s32.totalorder %s248, 63
      %s250 = scalar_select %p249, %s248, 63
      %s251 = smul.addr %s250, 2
      %s252 = smul.addr %s251, 8
      %s253 = scalar_lea.vmem %s5, %s252
      %s254 = smul.u32 32, %s16
      %v255 = vld [vmem:[%s240] sm:$0xff]
      %v256 = vld [vmem:[%s240 + $0x8] sm:$0xff]
      %v257 = vld [vmem:[%s240 + $0x10] sm:$0xff]
      %v258 = vld [vmem:[%s240 + $0x18] sm:$0xff]
      %v259 = vld [vmem:[%s240 + $0x20] sm:$0xff]
      %v260 = vld [vmem:[%s240 + $0x28] sm:$0xff]
      %v261 = vld [vmem:[%s240 + $0x30] sm:$0xff]
      %v262 = vld [vmem:[%s240 + $0x38] sm:$0xff]
      %v263 = vld [vmem:[%s240 + $0x40] sm:$0xff]
      %v264 = vld [vmem:[%s240 + $0x48] sm:$0xff]
      %v265 = vld [vmem:[%s240 + $0x50] sm:$0xff]
      %v266 = vld [vmem:[%s240 + $0x58] sm:$0xff]
      %v267 = vld [vmem:[%s240 + $0x60] sm:$0xff]
      %v268 = vld [vmem:[%s240 + $0x68] sm:$0xff]
      %v269 = vld [vmem:[%s240 + $0x70] sm:$0xff]
      %v270 = vld [vmem:[%s240 + $0x78] sm:$0xff]
      %v271 = vld [vmem:[%s240 + $0x80] sm:$0xff]
      %v272 = vld [vmem:[%s240 + $0x88] sm:$0xff]
      %v273 = vld [vmem:[%s240 + $0x90] sm:$0xff]
      %v274 = vld [vmem:[%s240 + $0x98] sm:$0xff]
      %v275 = vld [vmem:[%s240 + $0xa0] sm:$0xff]
      %v276 = vld [vmem:[%s240 + $0xa8] sm:$0xff]
      %v277 = vld [vmem:[%s240 + $0xb0] sm:$0xff]
      %v278 = vld [vmem:[%s240 + $0xb8] sm:$0xff]
      %v279 = vld [vmem:[%s240 + $0xc0] sm:$0xff]
      %v280 = vld [vmem:[%s240 + $0xc8] sm:$0xff]
      %v281 = vld [vmem:[%s240 + $0xd0] sm:$0xff]
      %v282 = vld [vmem:[%s240 + $0xd8] sm:$0xff]
      %v283 = vld [vmem:[%s240 + $0xe0] sm:$0xff]
      %v284 = vld [vmem:[%s240 + $0xe8] sm:$0xff]
      %v285 = vld [vmem:[%s240 + $0xf0] sm:$0xff]
      %v286 = vld [vmem:[%s240 + $0xf8] sm:$0xff]
      %v287 = vld [vmem:[%s240 + $0x100] sm:$0xff]
      %v288 = vld [vmem:[%s240 + $0x108] sm:$0xff]
      %v289 = vld [vmem:[%s240 + $0x110] sm:$0xff]
      %v290 = vld [vmem:[%s240 + $0x118] sm:$0xff]
      %v291 = vld [vmem:[%s240 + $0x120] sm:$0xff]
      %v292 = vld [vmem:[%s240 + $0x128] sm:$0xff]
      %v293 = vld [vmem:[%s240 + $0x130] sm:$0xff]
      %v294 = vld [vmem:[%s240 + $0x138] sm:$0xff]
      %v295 = vld [vmem:[%s240 + $0x140] sm:$0xff]
      %v296 = vld [vmem:[%s240 + $0x148] sm:$0xff]
      %v297 = vld [vmem:[%s240 + $0x150] sm:$0xff]
      %v298 = vld [vmem:[%s240 + $0x158] sm:$0xff]
      %v299 = vld [vmem:[%s240 + $0x160] sm:$0xff]
      %v300 = vld [vmem:[%s240 + $0x168] sm:$0xff]
      %v301 = vld [vmem:[%s240 + $0x170] sm:$0xff]
      %v302 = vld [vmem:[%s240 + $0x178] sm:$0xff]
      %v303 = vld [vmem:[%s240 + $0x180] sm:$0xff]
      %v304 = vld [vmem:[%s240 + $0x188] sm:$0xff]
      %v305 = vld [vmem:[%s240 + $0x190] sm:$0xff]
      %v306 = vld [vmem:[%s240 + $0x198] sm:$0xff]
      %v307 = vld [vmem:[%s240 + $0x1a0] sm:$0xff]
      %v308 = vld [vmem:[%s240 + $0x1a8] sm:$0xff]
      %v309 = vld [vmem:[%s240 + $0x1b0] sm:$0xff]
      %v310 = vld [vmem:[%s240 + $0x1b8] sm:$0xff]
      %v311 = vld [vmem:[%s240 + $0x1c0] sm:$0xff]
      %v312 = vld [vmem:[%s240 + $0x1c8] sm:$0xff]
      %v313 = vld [vmem:[%s240 + $0x1d0] sm:$0xff]
      %v314 = vld [vmem:[%s240 + $0x1d8] sm:$0xff]
      %v315 = vld [vmem:[%s240 + $0x1e0] sm:$0xff]
      %v316 = vld [vmem:[%s240 + $0x1e8] sm:$0xff]
      %v317 = vld [vmem:[%s240 + $0x1f0] sm:$0xff]
      %v318 = vld [vmem:[%s240 + $0x1f8] sm:$0xff]
      %v319 = vld [vmem:[%s246] sm:$0xff]
      %v320 = vld [vmem:[%s246 + $0x8] sm:$0xff]
      %v321 = vld [vmem:[%s246 + $0x10] sm:$0xff]
      %v322 = vld [vmem:[%s246 + $0x18] sm:$0xff]
      %v323 = vld [vmem:[%s246 + $0x20] sm:$0xff]
      %v324 = vld [vmem:[%s246 + $0x28] sm:$0xff]
      %v325 = vld [vmem:[%s246 + $0x30] sm:$0xff]
      %v326 = vld [vmem:[%s246 + $0x38] sm:$0xff]
      %v327 = vld [vmem:[%s246 + $0x40] sm:$0xff]
      %v328 = vld [vmem:[%s246 + $0x48] sm:$0xff]
      %v329 = vld [vmem:[%s246 + $0x50] sm:$0xff]
      %v330 = vld [vmem:[%s246 + $0x58] sm:$0xff]
      %v331 = vld [vmem:[%s246 + $0x60] sm:$0xff]
      %v332 = vld [vmem:[%s246 + $0x68] sm:$0xff]
      %v333 = vld [vmem:[%s246 + $0x70] sm:$0xff]
      %v334 = vld [vmem:[%s246 + $0x78] sm:$0xff]
      %v335 = vld [vmem:[%s246 + $0x80] sm:$0xff]
      %v336 = vld [vmem:[%s246 + $0x88] sm:$0xff]
      %v337 = vld [vmem:[%s246 + $0x90] sm:$0xff]
      %v338 = vld [vmem:[%s246 + $0x98] sm:$0xff]
      %v339 = vld [vmem:[%s246 + $0xa0] sm:$0xff]
      %v340 = vld [vmem:[%s246 + $0xa8] sm:$0xff]
      %v341 = vld [vmem:[%s246 + $0xb0] sm:$0xff]
      %v342 = vld [vmem:[%s246 + $0xb8] sm:$0xff]
      %v343 = vld [vmem:[%s246 + $0xc0] sm:$0xff]
      %v344 = vld [vmem:[%s246 + $0xc8] sm:$0xff]
      %v345 = vld [vmem:[%s246 + $0xd0] sm:$0xff]
      %v346 = vld [vmem:[%s246 + $0xd8] sm:$0xff]
      %v347 = vld [vmem:[%s246 + $0xe0] sm:$0xff]
      %v348 = vld [vmem:[%s246 + $0xe8] sm:$0xff]
      %v349 = vld [vmem:[%s246 + $0xf0] sm:$0xff]
      %v350 = vld [vmem:[%s246 + $0xf8] sm:$0xff]
      %v351 = vld [vmem:[%s2] sm:$0xff]
      %vm352 = vcmask 64512
      %v354 = vsel %vm352, %v255, 0
      %v357 = vsel %vm352, %v256, 0
      %v360 = vsel %vm352, %v257, 0
      %v363 = vsel %vm352, %v258, 0
      %v366 = vsel %vm352, %v259, 0
      %v369 = vsel %vm352, %v260, 0
      %v372 = vsel %vm352, %v261, 0
      %v375 = vsel %vm352, %v262, 0
      %v378 = vsel %vm352, %v263, 0
      %v381 = vsel %vm352, %v264, 0
      %v384 = vsel %vm352, %v265, 0
      %v387 = vsel %vm352, %v266, 0
      %v390 = vsel %vm352, %v267, 0
      %v393 = vsel %vm352, %v268, 0
      %v396 = vsel %vm352, %v269, 0
      %v399 = vsel %vm352, %v270, 0
      %v402 = vsel %vm352, %v271, 0
      %v405 = vsel %vm352, %v272, 0
      %v408 = vsel %vm352, %v273, 0
      %v411 = vsel %vm352, %v274, 0
      %v414 = vsel %vm352, %v275, 0
      %v417 = vsel %vm352, %v276, 0
      %v420 = vsel %vm352, %v277, 0
      %v423 = vsel %vm352, %v278, 0
      %v426 = vsel %vm352, %v279, 0
      %v429 = vsel %vm352, %v280, 0
      %v432 = vsel %vm352, %v281, 0
      %v435 = vsel %vm352, %v282, 0
      %v438 = vsel %vm352, %v283, 0
      %v441 = vsel %vm352, %v284, 0
      %v444 = vsel %vm352, %v285, 0
      %v447 = vsel %vm352, %v286, 0
      %v450 = vsel %vm352, %v287, 0
      %v453 = vsel %vm352, %v288, 0
      %v456 = vsel %vm352, %v289, 0
      %v459 = vsel %vm352, %v290, 0
      %v462 = vsel %vm352, %v291, 0
      %v465 = vsel %vm352, %v292, 0
      %v468 = vsel %vm352, %v293, 0
      %v471 = vsel %vm352, %v294, 0
      %v474 = vsel %vm352, %v295, 0
      %v477 = vsel %vm352, %v296, 0
      %v480 = vsel %vm352, %v297, 0
      %v483 = vsel %vm352, %v298, 0
      %v486 = vsel %vm352, %v299, 0
      %v489 = vsel %vm352, %v300, 0
      %v492 = vsel %vm352, %v301, 0
      %v495 = vsel %vm352, %v302, 0
      %v498 = vsel %vm352, %v303, 0
      %v501 = vsel %vm352, %v304, 0
      %v504 = vsel %vm352, %v305, 0
      %v507 = vsel %vm352, %v306, 0
      %v510 = vsel %vm352, %v307, 0
      %v513 = vsel %vm352, %v308, 0
      %v516 = vsel %vm352, %v309, 0
      %v519 = vsel %vm352, %v310, 0
      %v522 = vsel %vm352, %v311, 0
      %v525 = vsel %vm352, %v312, 0
      %v528 = vsel %vm352, %v313, 0
      %v531 = vsel %vm352, %v314, 0
      %v534 = vsel %vm352, %v315, 0
      %v537 = vsel %vm352, %v316, 0
      %v540 = vsel %vm352, %v317, 0
      %v543 = vsel %vm352, %v318, 0
      %545 = vmatprep.subr.mxu0 0.0
      %546 = vmatpush1.msra.mxu0 0.0
      %547 = vmatprep.subr.mxu0 0.0
      %548 = vmatpush1.msra.mxu0 0.0
      %549 = vmatprep.subr.mxu0 0.0
      %550 = vmatpush1.msra.mxu0 0.0
      %551 = vmatprep.subr.mxu0 0.0
      %552 = vmatpush1.msra.mxu0 0.0
      %553 = vmatprep.subr.mxu0 0.0
      %554 = vmatpush1.msra.mxu0 0.0
      %555 = vmatprep.subr.mxu0 0.0
      %556 = vmatpush1.msra.mxu0 0.0
      %557 = vmatprep.subr.mxu0 0.0
      %558 = vmatpush1.msra.mxu0 0.0
      %559 = vmatprep.subr.mxu0 0.0
      %560 = vmatpush1.msra.mxu0 0.0
      %561 = vmatprep.subr.mxu0 0.0
      %562 = vmatpush1.msra.mxu0 0.0
      %563 = vmatprep.subr.mxu0 0.0
      %564 = vmatpush1.msra.mxu0 0.0
      %565 = vmatprep.subr.mxu0 0.0
      %566 = vmatpush1.msra.mxu0 0.0
      %567 = vmatprep.subr.mxu0 0.0
      %568 = vmatpush1.msra.mxu0 0.0
      %569 = vmatprep.subr.mxu0 0.0
      %570 = vmatpush1.msra.mxu0 0.0
      %571 = vmatprep.subr.mxu0 0.0
      %572 = vmatpush1.msra.mxu0 0.0
      %573 = vmatprep.subr.mxu0 0.0
      %574 = vmatpush1.msra.mxu0 0.0
      %575 = vmatprep.subr.mxu0 0.0
      %576 = vmatpush1.msra.mxu0 %v351
      %577 = vmatprep.subr.mxu0 0.0
      %578 = vmatpush2.msra.mxu0 0.0
      %579 = vmatprep.subr.mxu0 0.0
      %580 = vmatpush2.msra.mxu0 0.0
      %581 = vmatprep.subr.mxu0 0.0
      %582 = vmatpush2.msra.mxu0 0.0
      %583 = vmatprep.subr.mxu0 0.0
      %584 = vmatpush2.msra.mxu0 0.0
      %585 = vmatprep.subr.mxu0 0.0
      %586 = vmatpush2.msra.mxu0 0.0
      %587 = vmatprep.subr.mxu0 0.0
      %588 = vmatpush2.msra.mxu0 0.0
      %589 = vmatprep.subr.mxu0 0.0
      %590 = vmatpush2.msra.mxu0 0.0
      %591 = vmatprep.subr.mxu0 0.0
      %592 = vmatpush2.msra.mxu0 0.0
      %593 = vmatprep.subr.mxu0 0.0
      %594 = vmatpush2.msra.mxu0 0.0
      %595 = vmatprep.subr.mxu0 0.0
      %596 = vmatpush2.msra.mxu0 0.0
      %597 = vmatprep.subr.mxu0 0.0
      %598 = vmatpush2.msra.mxu0 0.0
      %599 = vmatprep.subr.mxu0 0.0
      %600 = vmatpush2.msra.mxu0 0.0
      %601 = vmatprep.subr.mxu0 0.0
      %602 = vmatpush2.msra.mxu0 0.0
      %603 = vmatprep.subr.mxu0 0.0
      %604 = vmatpush2.msra.mxu0 0.0
      %605 = vmatprep.subr.mxu0 0.0
      %606 = vmatpush2.msra.mxu0 0.0
      %607 = vmatprep.subr.mxu0 0.0
      %608 = vmatpush2.msra.mxu0 0.0
      %609 = vmatprep.mubr.f32.mxu0 0.0
      %610 = vmatmul.mubr.f32.gmra.mxu0 %v354
      %v611 = vpop.f32.mrf.mxu0
      %v612 = vadd.f32 0.0, %v611
      %v613 = vpop.f32.mrf.mxu0
      %614 = vmatprep.mubr.f32.mxu0 0.0
      %615 = vmatmul.mubr.f32.gmra.mxu0 %v357
      %v616 = vpop.f32.mrf.mxu0
      %v617 = vadd.f32 0.0, %v616
      %v618 = vpop.f32.mrf.mxu0
      %619 = vmatprep.mubr.f32.mxu0 0.0
      %620 = vmatmul.mubr.f32.gmra.mxu0 %v360
      %v621 = vpop.f32.mrf.mxu0
      %v622 = vadd.f32 0.0, %v621
      %v623 = vpop.f32.mrf.mxu0
      %624 = vmatprep.mubr.f32.mxu0 0.0
      %625 = vmatmul.mubr.f32.gmra.mxu0 %v363
      %v626 = vpop.f32.mrf.mxu0
      %v627 = vadd.f32 0.0, %v626
      %v628 = vpop.f32.mrf.mxu0
      %629 = vmatprep.mubr.f32.mxu0 0.0
      %630 = vmatmul.mubr.f32.gmra.mxu0 %v366
      %v631 = vpop.f32.mrf.mxu0
      %v632 = vadd.f32 0.0, %v631
      %v633 = vpop.f32.mrf.mxu0
      %634 = vmatprep.mubr.f32.mxu0 0.0
      %635 = vmatmul.mubr.f32.gmra.mxu0 %v369
      %v636 = vpop.f32.mrf.mxu0
      %v637 = vadd.f32 0.0, %v636
      %v638 = vpop.f32.mrf.mxu0
      %639 = vmatprep.mubr.f32.mxu0 0.0
      %640 = vmatmul.mubr.f32.gmra.mxu0 %v372
      %v641 = vpop.f32.mrf.mxu0
      %v642 = vadd.f32 0.0, %v641
      %v643 = vpop.f32.mrf.mxu0
      %644 = vmatprep.mubr.f32.mxu0 0.0
      %645 = vmatmul.mubr.f32.gmra.mxu0 %v375
      %v646 = vpop.f32.mrf.mxu0
      %v647 = vadd.f32 0.0, %v646
      %v648 = vpop.f32.mrf.mxu0
      %649 = vmatprep.mubr.f32.mxu0 0.0
      %650 = vmatmul.mubr.f32.gmra.mxu0 %v378
      %v651 = vpop.f32.mrf.mxu0
      %v652 = vadd.f32 0.0, %v651
      %v653 = vpop.f32.mrf.mxu0
      %654 = vmatprep.mubr.f32.mxu0 0.0
      %655 = vmatmul.mubr.f32.gmra.mxu0 %v381
      %v656 = vpop.f32.mrf.mxu0
      %v657 = vadd.f32 0.0, %v656
      %v658 = vpop.f32.mrf.mxu0
      %659 = vmatprep.mubr.f32.mxu0 0.0
      %660 = vmatmul.mubr.f32.gmra.mxu0 %v384
      %v661 = vpop.f32.mrf.mxu0
      %v662 = vadd.f32 0.0, %v661
      %v663 = vpop.f32.mrf.mxu0
      %664 = vmatprep.mubr.f32.mxu0 0.0
      %665 = vmatmul.mubr.f32.gmra.mxu0 %v387
      %v666 = vpop.f32.mrf.mxu0
      %v667 = vadd.f32 0.0, %v666
      %v668 = vpop.f32.mrf.mxu0
      %669 = vmatprep.mubr.f32.mxu0 0.0
      %670 = vmatmul.mubr.f32.gmra.mxu0 %v390
      %v671 = vpop.f32.mrf.mxu0
      %v672 = vadd.f32 0.0, %v671
      %v673 = vpop.f32.mrf.mxu0
      %674 = vmatprep.mubr.f32.mxu0 0.0
      %675 = vmatmul.mubr.f32.gmra.mxu0 %v393
      %v676 = vpop.f32.mrf.mxu0
      %v677 = vadd.f32 0.0, %v676
      %v678 = vpop.f32.mrf.mxu0
      %679 = vmatprep.mubr.f32.mxu0 0.0
      %680 = vmatmul.mubr.f32.gmra.mxu0 %v396
      %v681 = vpop.f32.mrf.mxu0
      %v682 = vadd.f32 0.0, %v681
      %v683 = vpop.f32.mrf.mxu0
      %684 = vmatprep.mubr.f32.mxu0 0.0
      %685 = vmatmul.mubr.f32.gmra.mxu0 %v399
      %v686 = vpop.f32.mrf.mxu0
      %v687 = vadd.f32 0.0, %v686
      %v688 = vpop.f32.mrf.mxu0
      %689 = vmatprep.mubr.f32.mxu0 0.0
      %690 = vmatmul.mubr.f32.gmra.mxu0 %v402
      %v691 = vpop.f32.mrf.mxu0
      %v692 = vadd.f32 0.0, %v691
      %v693 = vpop.f32.mrf.mxu0
      %694 = vmatprep.mubr.f32.mxu0 0.0
      %695 = vmatmul.mubr.f32.gmra.mxu0 %v405
      %v696 = vpop.f32.mrf.mxu0
      %v697 = vadd.f32 0.0, %v696
      %v698 = vpop.f32.mrf.mxu0
      %699 = vmatprep.mubr.f32.mxu0 0.0
      %700 = vmatmul.mubr.f32.gmra.mxu0 %v408
      %v701 = vpop.f32.mrf.mxu0
      %v702 = vadd.f32 0.0, %v701
      %v703 = vpop.f32.mrf.mxu0
      %704 = vmatprep.mubr.f32.mxu0 0.0
      %705 = vmatmul.mubr.f32.gmra.mxu0 %v411
      %v706 = vpop.f32.mrf.mxu0
      %v707 = vadd.f32 0.0, %v706
      %v708 = vpop.f32.mrf.mxu0
      %709 = vmatprep.mubr.f32.mxu0 0.0
      %710 = vmatmul.mubr.f32.gmra.mxu0 %v414
      %v711 = vpop.f32.mrf.mxu0
      %v712 = vadd.f32 0.0, %v711
      %v713 = vpop.f32.mrf.mxu0
      %714 = vmatprep.mubr.f32.mxu0 0.0
      %715 = vmatmul.mubr.f32.gmra.mxu0 %v417
      %v716 = vpop.f32.mrf.mxu0
      %v717 = vadd.f32 0.0, %v716
      %v718 = vpop.f32.mrf.mxu0
      %719 = vmatprep.mubr.f32.mxu0 0.0
      %720 = vmatmul.mubr.f32.gmra.mxu0 %v420
      %v721 = vpop.f32.mrf.mxu0
      %v722 = vadd.f32 0.0, %v721
      %v723 = vpop.f32.mrf.mxu0
      %724 = vmatprep.mubr.f32.mxu0 0.0
      %725 = vmatmul.mubr.f32.gmra.mxu0 %v423
      %v726 = vpop.f32.mrf.mxu0
      %v727 = vadd.f32 0.0, %v726
      %v728 = vpop.f32.mrf.mxu0
      %729 = vmatprep.mubr.f32.mxu0 0.0
      %730 = vmatmul.mubr.f32.gmra.mxu0 %v426
      %v731 = vpop.f32.mrf.mxu0
      %v732 = vadd.f32 0.0, %v731
      %v733 = vpop.f32.mrf.mxu0
      %734 = vmatprep.mubr.f32.mxu0 0.0
      %735 = vmatmul.mubr.f32.gmra.mxu0 %v429
      %v736 = vpop.f32.mrf.mxu0
      %v737 = vadd.f32 0.0, %v736
      %v738 = vpop.f32.mrf.mxu0
      %739 = vmatprep.mubr.f32.mxu0 0.0
      %740 = vmatmul.mubr.f32.gmra.mxu0 %v432
      %v741 = vpop.f32.mrf.mxu0
      %v742 = vadd.f32 0.0, %v741
      %v743 = vpop.f32.mrf.mxu0
      %744 = vmatprep.mubr.f32.mxu0 0.0
      %745 = vmatmul.mubr.f32.gmra.mxu0 %v435
      %v746 = vpop.f32.mrf.mxu0
      %v747 = vadd.f32 0.0, %v746
      %v748 = vpop.f32.mrf.mxu0
      %749 = vmatprep.mubr.f32.mxu0 0.0
      %750 = vmatmul.mubr.f32.gmra.mxu0 %v438
      %v751 = vpop.f32.mrf.mxu0
      %v752 = vadd.f32 0.0, %v751
      %v753 = vpop.f32.mrf.mxu0
      %754 = vmatprep.mubr.f32.mxu0 0.0
      %755 = vmatmul.mubr.f32.gmra.mxu0 %v441
      %v756 = vpop.f32.mrf.mxu0
      %v757 = vadd.f32 0.0, %v756
      %v758 = vpop.f32.mrf.mxu0
      %759 = vmatprep.mubr.f32.mxu0 0.0
      %760 = vmatmul.mubr.f32.gmra.mxu0 %v444
      %v761 = vpop.f32.mrf.mxu0
      %v762 = vadd.f32 0.0, %v761
      %v763 = vpop.f32.mrf.mxu0
      %764 = vmatprep.mubr.f32.mxu0 0.0
      %765 = vmatmul.mubr.f32.gmra.mxu0 %v447
      %v766 = vpop.f32.mrf.mxu0
      %v767 = vadd.f32 0.0, %v766
      %v768 = vpop.f32.mrf.mxu0
      %769 = vmatprep.mubr.f32.mxu0 0.0
      %770 = vmatmul.mubr.f32.gmra.mxu0 %v450
      %v771 = vpop.f32.mrf.mxu0
      %v772 = vadd.f32 0.0, %v771
      %v773 = vpop.f32.mrf.mxu0
      %774 = vmatprep.mubr.f32.mxu0 0.0
      %775 = vmatmul.mubr.f32.gmra.mxu0 %v453
      %v776 = vpop.f32.mrf.mxu0
      %v777 = vadd.f32 0.0, %v776
      %v778 = vpop.f32.mrf.mxu0
      %779 = vmatprep.mubr.f32.mxu0 0.0
      %780 = vmatmul.mubr.f32.gmra.mxu0 %v456
      %v781 = vpop.f32.mrf.mxu0
      %v782 = vadd.f32 0.0, %v781
      %v783 = vpop.f32.mrf.mxu0
      %784 = vmatprep.mubr.f32.mxu0 0.0
      %785 = vmatmul.mubr.f32.gmra.mxu0 %v459
      %v786 = vpop.f32.mrf.mxu0
      %v787 = vadd.f32 0.0, %v786
      %v788 = vpop.f32.mrf.mxu0
      %789 = vmatprep.mubr.f32.mxu0 0.0
      %790 = vmatmul.mubr.f32.gmra.mxu0 %v462
      %v791 = vpop.f32.mrf.mxu0
      %v792 = vadd.f32 0.0, %v791
      %v793 = vpop.f32.mrf.mxu0
      %794 = vmatprep.mubr.f32.mxu0 0.0
      %795 = vmatmul.mubr.f32.gmra.mxu0 %v465
      %v796 = vpop.f32.mrf.mxu0
      %v797 = vadd.f32 0.0, %v796
      %v798 = vpop.f32.mrf.mxu0
      %799 = vmatprep.mubr.f32.mxu0 0.0
      %800 = vmatmul.mubr.f32.gmra.mxu0 %v468
      %v801 = vpop.f32.mrf.mxu0
      %v802 = vadd.f32 0.0, %v801
      %v803 = vpop.f32.mrf.mxu0
      %804 = vmatprep.mubr.f32.mxu0 0.0
      %805 = vmatmul.mubr.f32.gmra.mxu0 %v471
      %v806 = vpop.f32.mrf.mxu0
      %v807 = vadd.f32 0.0, %v806
      %v808 = vpop.f32.mrf.mxu0
      %809 = vmatprep.mubr.f32.mxu0 0.0
      %810 = vmatmul.mubr.f32.gmra.mxu0 %v474
      %v811 = vpop.f32.mrf.mxu0
      %v812 = vadd.f32 0.0, %v811
      %v813 = vpop.f32.mrf.mxu0
      %814 = vmatprep.mubr.f32.mxu0 0.0
      %815 = vmatmul.mubr.f32.gmra.mxu0 %v477
      %v816 = vpop.f32.mrf.mxu0
      %v817 = vadd.f32 0.0, %v816
      %v818 = vpop.f32.mrf.mxu0
      %819 = vmatprep.mubr.f32.mxu0 0.0
      %820 = vmatmul.mubr.f32.gmra.mxu0 %v480
      %v821 = vpop.f32.mrf.mxu0
      %v822 = vadd.f32 0.0, %v821
      %v823 = vpop.f32.mrf.mxu0
      %824 = vmatprep.mubr.f32.mxu0 0.0
      %825 = vmatmul.mubr.f32.gmra.mxu0 %v483
      %v826 = vpop.f32.mrf.mxu0
      %v827 = vadd.f32 0.0, %v826
      %v828 = vpop.f32.mrf.mxu0
      %829 = vmatprep.mubr.f32.mxu0 0.0
      %830 = vmatmul.mubr.f32.gmra.mxu0 %v486
      %v831 = vpop.f32.mrf.mxu0
      %v832 = vadd.f32 0.0, %v831
      %v833 = vpop.f32.mrf.mxu0
      %834 = vmatprep.mubr.f32.mxu0 0.0
      %835 = vmatmul.mubr.f32.gmra.mxu0 %v489
      %v836 = vpop.f32.mrf.mxu0
      %v837 = vadd.f32 0.0, %v836
      %v838 = vpop.f32.mrf.mxu0
      %839 = vmatprep.mubr.f32.mxu0 0.0
      %840 = vmatmul.mubr.f32.gmra.mxu0 %v492
      %v841 = vpop.f32.mrf.mxu0
      %v842 = vadd.f32 0.0, %v841
      %v843 = vpop.f32.mrf.mxu0
      %844 = vmatprep.mubr.f32.mxu0 0.0
      %845 = vmatmul.mubr.f32.gmra.mxu0 %v495
      %v846 = vpop.f32.mrf.mxu0
      %v847 = vadd.f32 0.0, %v846
      %v848 = vpop.f32.mrf.mxu0
      %849 = vmatprep.mubr.f32.mxu0 0.0
      %850 = vmatmul.mubr.f32.gmra.mxu0 %v498
      %v851 = vpop.f32.mrf.mxu0
      %v852 = vadd.f32 0.0, %v851
      %v853 = vpop.f32.mrf.mxu0
      %854 = vmatprep.mubr.f32.mxu0 0.0
      %855 = vmatmul.mubr.f32.gmra.mxu0 %v501
      %v856 = vpop.f32.mrf.mxu0
      %v857 = vadd.f32 0.0, %v856
      %v858 = vpop.f32.mrf.mxu0
      %859 = vmatprep.mubr.f32.mxu0 0.0
      %860 = vmatmul.mubr.f32.gmra.mxu0 %v504
      %v861 = vpop.f32.mrf.mxu0
      %v862 = vadd.f32 0.0, %v861
      %v863 = vpop.f32.mrf.mxu0
      %864 = vmatprep.mubr.f32.mxu0 0.0
      %865 = vmatmul.mubr.f32.gmra.mxu0 %v507
      %v866 = vpop.f32.mrf.mxu0
      %v867 = vadd.f32 0.0, %v866
      %v868 = vpop.f32.mrf.mxu0
      %869 = vmatprep.mubr.f32.mxu0 0.0
      %870 = vmatmul.mubr.f32.gmra.mxu0 %v510
      %v871 = vpop.f32.mrf.mxu0
      %v872 = vadd.f32 0.0, %v871
      %v873 = vpop.f32.mrf.mxu0
      %874 = vmatprep.mubr.f32.mxu0 0.0
      %875 = vmatmul.mubr.f32.gmra.mxu0 %v513
      %v876 = vpop.f32.mrf.mxu0
      %v877 = vadd.f32 0.0, %v876
      %v878 = vpop.f32.mrf.mxu0
      %879 = vmatprep.mubr.f32.mxu0 0.0
      %880 = vmatmul.mubr.f32.gmra.mxu0 %v516
      %v881 = vpop.f32.mrf.mxu0
      %v882 = vadd.f32 0.0, %v881
      %v883 = vpop.f32.mrf.mxu0
      %884 = vmatprep.mubr.f32.mxu0 0.0
      %885 = vmatmul.mubr.f32.gmra.mxu0 %v519
      %v886 = vpop.f32.mrf.mxu0
      %v887 = vadd.f32 0.0, %v886
      %v888 = vpop.f32.mrf.mxu0
      %889 = vmatprep.mubr.f32.mxu0 0.0
      %890 = vmatmul.mubr.f32.gmra.mxu0 %v522
      %v891 = vpop.f32.mrf.mxu0
      %v892 = vadd.f32 0.0, %v891
      %v893 = vpop.f32.mrf.mxu0
      %894 = vmatprep.mubr.f32.mxu0 0.0
      %895 = vmatmul.mubr.f32.gmra.mxu0 %v525
      %v896 = vpop.f32.mrf.mxu0
      %v897 = vadd.f32 0.0, %v896
      %v898 = vpop.f32.mrf.mxu0
      %899 = vmatprep.mubr.f32.mxu0 0.0
      %900 = vmatmul.mubr.f32.gmra.mxu0 %v528
      %v901 = vpop.f32.mrf.mxu0
      %v902 = vadd.f32 0.0, %v901
      %v903 = vpop.f32.mrf.mxu0
      %904 = vmatprep.mubr.f32.mxu0 0.0
      %905 = vmatmul.mubr.f32.gmra.mxu0 %v531
      %v906 = vpop.f32.mrf.mxu0
      %v907 = vadd.f32 0.0, %v906
      %v908 = vpop.f32.mrf.mxu0
      %909 = vmatprep.mubr.f32.mxu0 0.0
      %910 = vmatmul.mubr.f32.gmra.mxu0 %v534
      %v911 = vpop.f32.mrf.mxu0
      %v912 = vadd.f32 0.0, %v911
      %v913 = vpop.f32.mrf.mxu0
      %914 = vmatprep.mubr.f32.mxu0 0.0
      %915 = vmatmul.mubr.f32.gmra.mxu0 %v537
      %v916 = vpop.f32.mrf.mxu0
      %v917 = vadd.f32 0.0, %v916
      %v918 = vpop.f32.mrf.mxu0
      %919 = vmatprep.mubr.f32.mxu0 0.0
      %920 = vmatmul.mubr.f32.gmra.mxu0 %v540
      %v921 = vpop.f32.mrf.mxu0
      %v922 = vadd.f32 0.0, %v921
      %v923 = vpop.f32.mrf.mxu0
      %924 = vmatprep.mubr.f32.mxu0 0.0
      %925 = vmatmul.mubr.f32.gmra.mxu0 %v543
      %v926 = vpop.f32.mrf.mxu0
      %v927 = vadd.f32 0.0, %v926
      %v928 = vpop.f32.mrf.mxu0
      %929 = vdwg.mxu0
      %v930 = vld [vmem:[%s4] sm:$0xff]
      %931 = vmatprep.subr.mxu0 0.0
      %932 = vmatpush1.msra.mxu0 0.0
      %933 = vmatprep.subr.mxu0 0.0
      %934 = vmatpush1.msra.mxu0 0.0
      %935 = vmatprep.subr.mxu0 0.0
      %936 = vmatpush1.msra.mxu0 0.0
      %937 = vmatprep.subr.mxu0 0.0
      %938 = vmatpush1.msra.mxu0 0.0
      %939 = vmatprep.subr.mxu0 0.0
      %940 = vmatpush1.msra.mxu0 0.0
      %941 = vmatprep.subr.mxu0 0.0
      %942 = vmatpush1.msra.mxu0 0.0
      %943 = vmatprep.subr.mxu0 0.0
      %944 = vmatpush1.msra.mxu0 0.0
      %945 = vmatprep.subr.mxu0 0.0
      %946 = vmatpush1.msra.mxu0 0.0
      %947 = vmatprep.subr.mxu0 0.0
      %948 = vmatpush1.msra.mxu0 0.0
      %949 = vmatprep.subr.mxu0 0.0
      %950 = vmatpush1.msra.mxu0 0.0
      %951 = vmatprep.subr.mxu0 0.0
      %952 = vmatpush1.msra.mxu0 0.0
      %953 = vmatprep.subr.mxu0 0.0
      %954 = vmatpush1.msra.mxu0 0.0
      %955 = vmatprep.subr.mxu0 0.0
      %956 = vmatpush1.msra.mxu0 0.0
      %957 = vmatprep.subr.mxu0 0.0
      %958 = vmatpush1.msra.mxu0 0.0
      %959 = vmatprep.subr.mxu0 0.0
      %960 = vmatpush1.msra.mxu0 0.0
      %961 = vmatprep.subr.mxu0 0.0
      %962 = vmatpush1.msra.mxu0 %v930
      %963 = vmatprep.subr.mxu0 0.0
      %964 = vmatpush2.msra.mxu0 0.0
      %965 = vmatprep.subr.mxu0 0.0
      %966 = vmatpush2.msra.mxu0 0.0
      %967 = vmatprep.subr.mxu0 0.0
      %968 = vmatpush2.msra.mxu0 0.0
      %969 = vmatprep.subr.mxu0 0.0
      %970 = vmatpush2.msra.mxu0 0.0
      %971 = vmatprep.subr.mxu0 0.0
      %972 = vmatpush2.msra.mxu0 0.0
      %973 = vmatprep.subr.mxu0 0.0
      %974 = vmatpush2.msra.mxu0 0.0
      %975 = vmatprep.subr.mxu0 0.0
      %976 = vmatpush2.msra.mxu0 0.0
      %977 = vmatprep.subr.mxu0 0.0
      %978 = vmatpush2.msra.mxu0 0.0
      %979 = vmatprep.subr.mxu0 0.0
      %980 = vmatpush2.msra.mxu0 0.0
      %981 = vmatprep.subr.mxu0 0.0
      %982 = vmatpush2.msra.mxu0 0.0
      %983 = vmatprep.subr.mxu0 0.0
      %984 = vmatpush2.msra.mxu0 0.0
      %985 = vmatprep.subr.mxu0 0.0
      %986 = vmatpush2.msra.mxu0 0.0
      %987 = vmatprep.subr.mxu0 0.0
      %988 = vmatpush2.msra.mxu0 0.0
      %989 = vmatprep.subr.mxu0 0.0
      %990 = vmatpush2.msra.mxu0 0.0
      %991 = vmatprep.subr.mxu0 0.0
      %992 = vmatpush2.msra.mxu0 0.0
      %993 = vmatprep.subr.mxu0 0.0
      %994 = vmatpush2.msra.mxu0 0.0
      %995 = vmatprep.mubr.f32.mxu0 0.0
      %996 = vmatmul.mubr.f32.gmra.mxu0 %v354
      %v997 = vpop.f32.mrf.mxu0
      %v998 = vadd.f32 0.0, %v997
      %v999 = vpop.f32.mrf.mxu0
      %1000 = vmatprep.mubr.f32.mxu0 0.0
      %1001 = vmatmul.mubr.f32.gmra.mxu0 %v357
      %v1002 = vpop.f32.mrf.mxu0
      %v1003 = vadd.f32 0.0, %v1002
      %v1004 = vpop.f32.mrf.mxu0
      %1005 = vmatprep.mubr.f32.mxu0 0.0
      %1006 = vmatmul.mubr.f32.gmra.mxu0 %v360
      %v1007 = vpop.f32.mrf.mxu0
      %v1008 = vadd.f32 0.0, %v1007
      %v1009 = vpop.f32.mrf.mxu0
      %1010 = vmatprep.mubr.f32.mxu0 0.0
      %1011 = vmatmul.mubr.f32.gmra.mxu0 %v363
      %v1012 = vpop.f32.mrf.mxu0
      %v1013 = vadd.f32 0.0, %v1012
      %v1014 = vpop.f32.mrf.mxu0
      %1015 = vmatprep.mubr.f32.mxu0 0.0
      %1016 = vmatmul.mubr.f32.gmra.mxu0 %v366
      %v1017 = vpop.f32.mrf.mxu0
      %v1018 = vadd.f32 0.0, %v1017
      %v1019 = vpop.f32.mrf.mxu0
      %1020 = vmatprep.mubr.f32.mxu0 0.0
      %1021 = vmatmul.mubr.f32.gmra.mxu0 %v369
      %v1022 = vpop.f32.mrf.mxu0
      %v1023 = vadd.f32 0.0, %v1022
      %v1024 = vpop.f32.mrf.mxu0
      %1025 = vmatprep.mubr.f32.mxu0 0.0
      %1026 = vmatmul.mubr.f32.gmra.mxu0 %v372
      %v1027 = vpop.f32.mrf.mxu0
      %v1028 = vadd.f32 0.0, %v1027
      %v1029 = vpop.f32.mrf.mxu0
      %1030 = vmatprep.mubr.f32.mxu0 0.0
      %1031 = vmatmul.mubr.f32.gmra.mxu0 %v375
      %v1032 = vpop.f32.mrf.mxu0
      %v1033 = vadd.f32 0.0, %v1032
      %v1034 = vpop.f32.mrf.mxu0
      %1035 = vmatprep.mubr.f32.mxu0 0.0
      %1036 = vmatmul.mubr.f32.gmra.mxu0 %v378
      %v1037 = vpop.f32.mrf.mxu0
      %v1038 = vadd.f32 0.0, %v1037
      %v1039 = vpop.f32.mrf.mxu0
      %1040 = vmatprep.mubr.f32.mxu0 0.0
      %1041 = vmatmul.mubr.f32.gmra.mxu0 %v381
      %v1042 = vpop.f32.mrf.mxu0
      %v1043 = vadd.f32 0.0, %v1042
      %v1044 = vpop.f32.mrf.mxu0
      %1045 = vmatprep.mubr.f32.mxu0 0.0
      %1046 = vmatmul.mubr.f32.gmra.mxu0 %v384
      %v1047 = vpop.f32.mrf.mxu0
      %v1048 = vadd.f32 0.0, %v1047
      %v1049 = vpop.f32.mrf.mxu0
      %1050 = vmatprep.mubr.f32.mxu0 0.0
      %1051 = vmatmul.mubr.f32.gmra.mxu0 %v387
      %v1052 = vpop.f32.mrf.mxu0
      %v1053 = vadd.f32 0.0, %v1052
      %v1054 = vpop.f32.mrf.mxu0
      %1055 = vmatprep.mubr.f32.mxu0 0.0
      %1056 = vmatmul.mubr.f32.gmra.mxu0 %v390
      %v1057 = vpop.f32.mrf.mxu0
      %v1058 = vadd.f32 0.0, %v1057
      %v1059 = vpop.f32.mrf.mxu0
      %1060 = vmatprep.mubr.f32.mxu0 0.0
      %1061 = vmatmul.mubr.f32.gmra.mxu0 %v393
      %v1062 = vpop.f32.mrf.mxu0
      %v1063 = vadd.f32 0.0, %v1062
      %v1064 = vpop.f32.mrf.mxu0
      %1065 = vmatprep.mubr.f32.mxu0 0.0
      %1066 = vmatmul.mubr.f32.gmra.mxu0 %v396
      %v1067 = vpop.f32.mrf.mxu0
      %v1068 = vadd.f32 0.0, %v1067
      %v1069 = vpop.f32.mrf.mxu0
      %1070 = vmatprep.mubr.f32.mxu0 0.0
      %1071 = vmatmul.mubr.f32.gmra.mxu0 %v399
      %v1072 = vpop.f32.mrf.mxu0
      %v1073 = vadd.f32 0.0, %v1072
      %v1074 = vpop.f32.mrf.mxu0
      %1075 = vmatprep.mubr.f32.mxu0 0.0
      %1076 = vmatmul.mubr.f32.gmra.mxu0 %v402
      %v1077 = vpop.f32.mrf.mxu0
      %v1078 = vadd.f32 0.0, %v1077
      %v1079 = vpop.f32.mrf.mxu0
      %1080 = vmatprep.mubr.f32.mxu0 0.0
      %1081 = vmatmul.mubr.f32.gmra.mxu0 %v405
      %v1082 = vpop.f32.mrf.mxu0
      %v1083 = vadd.f32 0.0, %v1082
      %v1084 = vpop.f32.mrf.mxu0
      %1085 = vmatprep.mubr.f32.mxu0 0.0
      %1086 = vmatmul.mubr.f32.gmra.mxu0 %v408
      %v1087 = vpop.f32.mrf.mxu0
      %v1088 = vadd.f32 0.0, %v1087
      %v1089 = vpop.f32.mrf.mxu0
      %1090 = vmatprep.mubr.f32.mxu0 0.0
      %1091 = vmatmul.mubr.f32.gmra.mxu0 %v411
      %v1092 = vpop.f32.mrf.mxu0
      %v1093 = vadd.f32 0.0, %v1092
      %v1094 = vpop.f32.mrf.mxu0
      %1095 = vmatprep.mubr.f32.mxu0 0.0
      %1096 = vmatmul.mubr.f32.gmra.mxu0 %v414
      %v1097 = vpop.f32.mrf.mxu0
      %v1098 = vadd.f32 0.0, %v1097
      %v1099 = vpop.f32.mrf.mxu0
      %1100 = vmatprep.mubr.f32.mxu0 0.0
      %1101 = vmatmul.mubr.f32.gmra.mxu0 %v417
      %v1102 = vpop.f32.mrf.mxu0
      %v1103 = vadd.f32 0.0, %v1102
      %v1104 = vpop.f32.mrf.mxu0
      %1105 = vmatprep.mubr.f32.mxu0 0.0
      %1106 = vmatmul.mubr.f32.gmra.mxu0 %v420
      %v1107 = vpop.f32.mrf.mxu0
      %v1108 = vadd.f32 0.0, %v1107
      %v1109 = vpop.f32.mrf.mxu0
      %1110 = vmatprep.mubr.f32.mxu0 0.0
      %1111 = vmatmul.mubr.f32.gmra.mxu0 %v423
      %v1112 = vpop.f32.mrf.mxu0
      %v1113 = vadd.f32 0.0, %v1112
      %v1114 = vpop.f32.mrf.mxu0
      %1115 = vmatprep.mubr.f32.mxu0 0.0
      %1116 = vmatmul.mubr.f32.gmra.mxu0 %v426
      %v1117 = vpop.f32.mrf.mxu0
      %v1118 = vadd.f32 0.0, %v1117
      %v1119 = vpop.f32.mrf.mxu0
      %1120 = vmatprep.mubr.f32.mxu0 0.0
      %1121 = vmatmul.mubr.f32.gmra.mxu0 %v429
      %v1122 = vpop.f32.mrf.mxu0
      %v1123 = vadd.f32 0.0, %v1122
      %v1124 = vpop.f32.mrf.mxu0
      %1125 = vmatprep.mubr.f32.mxu0 0.0
      %1126 = vmatmul.mubr.f32.gmra.mxu0 %v432
      %v1127 = vpop.f32.mrf.mxu0
      %v1128 = vadd.f32 0.0, %v1127
      %v1129 = vpop.f32.mrf.mxu0
      %1130 = vmatprep.mubr.f32.mxu0 0.0
      %1131 = vmatmul.mubr.f32.gmra.mxu0 %v435
      %v1132 = vpop.f32.mrf.mxu0
      %v1133 = vadd.f32 0.0, %v1132
      %v1134 = vpop.f32.mrf.mxu0
      %1135 = vmatprep.mubr.f32.mxu0 0.0
      %1136 = vmatmul.mubr.f32.gmra.mxu0 %v438
      %v1137 = vpop.f32.mrf.mxu0
      %v1138 = vadd.f32 0.0, %v1137
      %v1139 = vpop.f32.mrf.mxu0
      %1140 = vmatprep.mubr.f32.mxu0 0.0
      %1141 = vmatmul.mubr.f32.gmra.mxu0 %v441
      %v1142 = vpop.f32.mrf.mxu0
      %v1143 = vadd.f32 0.0, %v1142
      %v1144 = vpop.f32.mrf.mxu0
      %1145 = vmatprep.mubr.f32.mxu0 0.0
      %1146 = vmatmul.mubr.f32.gmra.mxu0 %v444
      %v1147 = vpop.f32.mrf.mxu0
      %v1148 = vadd.f32 0.0, %v1147
      %v1149 = vpop.f32.mrf.mxu0
      %1150 = vmatprep.mubr.f32.mxu0 0.0
      %1151 = vmatmul.mubr.f32.gmra.mxu0 %v447
      %v1152 = vpop.f32.mrf.mxu0
      %v1153 = vadd.f32 0.0, %v1152
      %v1154 = vpop.f32.mrf.mxu0
      %1155 = vmatprep.mubr.f32.mxu0 0.0
      %1156 = vmatmul.mubr.f32.gmra.mxu0 %v450
      %v1157 = vpop.f32.mrf.mxu0
      %v1158 = vadd.f32 0.0, %v1157
      %v1159 = vpop.f32.mrf.mxu0
      %1160 = vmatprep.mubr.f32.mxu0 0.0
      %1161 = vmatmul.mubr.f32.gmra.mxu0 %v453
      %v1162 = vpop.f32.mrf.mxu0
      %v1163 = vadd.f32 0.0, %v1162
      %v1164 = vpop.f32.mrf.mxu0
      %1165 = vmatprep.mubr.f32.mxu0 0.0
      %1166 = vmatmul.mubr.f32.gmra.mxu0 %v456
      %v1167 = vpop.f32.mrf.mxu0
      %v1168 = vadd.f32 0.0, %v1167
      %v1169 = vpop.f32.mrf.mxu0
      %1170 = vmatprep.mubr.f32.mxu0 0.0
      %1171 = vmatmul.mubr.f32.gmra.mxu0 %v459
      %v1172 = vpop.f32.mrf.mxu0
      %v1173 = vadd.f32 0.0, %v1172
      %v1174 = vpop.f32.mrf.mxu0
      %1175 = vmatprep.mubr.f32.mxu0 0.0
      %1176 = vmatmul.mubr.f32.gmra.mxu0 %v462
      %v1177 = vpop.f32.mrf.mxu0
      %v1178 = vadd.f32 0.0, %v1177
      %v1179 = vpop.f32.mrf.mxu0
      %1180 = vmatprep.mubr.f32.mxu0 0.0
      %1181 = vmatmul.mubr.f32.gmra.mxu0 %v465
      %v1182 = vpop.f32.mrf.mxu0
      %v1183 = vadd.f32 0.0, %v1182
      %v1184 = vpop.f32.mrf.mxu0
      %1185 = vmatprep.mubr.f32.mxu0 0.0
      %1186 = vmatmul.mubr.f32.gmra.mxu0 %v468
      %v1187 = vpop.f32.mrf.mxu0
      %v1188 = vadd.f32 0.0, %v1187
      %v1189 = vpop.f32.mrf.mxu0
      %1190 = vmatprep.mubr.f32.mxu0 0.0
      %1191 = vmatmul.mubr.f32.gmra.mxu0 %v471
      %v1192 = vpop.f32.mrf.mxu0
      %v1193 = vadd.f32 0.0, %v1192
      %v1194 = vpop.f32.mrf.mxu0
      %1195 = vmatprep.mubr.f32.mxu0 0.0
      %1196 = vmatmul.mubr.f32.gmra.mxu0 %v474
      %v1197 = vpop.f32.mrf.mxu0
      %v1198 = vadd.f32 0.0, %v1197
      %v1199 = vpop.f32.mrf.mxu0
      %1200 = vmatprep.mubr.f32.mxu0 0.0
      %1201 = vmatmul.mubr.f32.gmra.mxu0 %v477
      %v1202 = vpop.f32.mrf.mxu0
      %v1203 = vadd.f32 0.0, %v1202
      %v1204 = vpop.f32.mrf.mxu0
      %1205 = vmatprep.mubr.f32.mxu0 0.0
      %1206 = vmatmul.mubr.f32.gmra.mxu0 %v480
      %v1207 = vpop.f32.mrf.mxu0
      %v1208 = vadd.f32 0.0, %v1207
      %v1209 = vpop.f32.mrf.mxu0
      %1210 = vmatprep.mubr.f32.mxu0 0.0
      %1211 = vmatmul.mubr.f32.gmra.mxu0 %v483
      %v1212 = vpop.f32.mrf.mxu0
      %v1213 = vadd.f32 0.0, %v1212
      %v1214 = vpop.f32.mrf.mxu0
      %1215 = vmatprep.mubr.f32.mxu0 0.0
      %1216 = vmatmul.mubr.f32.gmra.mxu0 %v486
      %v1217 = vpop.f32.mrf.mxu0
      %v1218 = vadd.f32 0.0, %v1217
      %v1219 = vpop.f32.mrf.mxu0
      %1220 = vmatprep.mubr.f32.mxu0 0.0
      %1221 = vmatmul.mubr.f32.gmra.mxu0 %v489
      %v1222 = vpop.f32.mrf.mxu0
      %v1223 = vadd.f32 0.0, %v1222
      %v1224 = vpop.f32.mrf.mxu0
      %1225 = vmatprep.mubr.f32.mxu0 0.0
      %1226 = vmatmul.mubr.f32.gmra.mxu0 %v492
      %v1227 = vpop.f32.mrf.mxu0
      %v1228 = vadd.f32 0.0, %v1227
      %v1229 = vpop.f32.mrf.mxu0
      %1230 = vmatprep.mubr.f32.mxu0 0.0
      %1231 = vmatmul.mubr.f32.gmra.mxu0 %v495
      %v1232 = vpop.f32.mrf.mxu0
      %v1233 = vadd.f32 0.0, %v1232
      %v1234 = vpop.f32.mrf.mxu0
      %1235 = vmatprep.mubr.f32.mxu0 0.0
      %1236 = vmatmul.mubr.f32.gmra.mxu0 %v498
      %v1237 = vpop.f32.mrf.mxu0
      %v1238 = vadd.f32 0.0, %v1237
      %v1239 = vpop.f32.mrf.mxu0
      %1240 = vmatprep.mubr.f32.mxu0 0.0
      %1241 = vmatmul.mubr.f32.gmra.mxu0 %v501
      %v1242 = vpop.f32.mrf.mxu0
      %v1243 = vadd.f32 0.0, %v1242
      %v1244 = vpop.f32.mrf.mxu0
      %1245 = vmatprep.mubr.f32.mxu0 0.0
      %1246 = vmatmul.mubr.f32.gmra.mxu0 %v504
      %v1247 = vpop.f32.mrf.mxu0
      %v1248 = vadd.f32 0.0, %v1247
      %v1249 = vpop.f32.mrf.mxu0
      %1250 = vmatprep.mubr.f32.mxu0 0.0
      %1251 = vmatmul.mubr.f32.gmra.mxu0 %v507
      %v1252 = vpop.f32.mrf.mxu0
      %v1253 = vadd.f32 0.0, %v1252
      %v1254 = vpop.f32.mrf.mxu0
      %1255 = vmatprep.mubr.f32.mxu0 0.0
      %1256 = vmatmul.mubr.f32.gmra.mxu0 %v510
      %v1257 = vpop.f32.mrf.mxu0
      %v1258 = vadd.f32 0.0, %v1257
      %v1259 = vpop.f32.mrf.mxu0
      %1260 = vmatprep.mubr.f32.mxu0 0.0
      %1261 = vmatmul.mubr.f32.gmra.mxu0 %v513
      %v1262 = vpop.f32.mrf.mxu0
      %v1263 = vadd.f32 0.0, %v1262
      %v1264 = vpop.f32.mrf.mxu0
      %1265 = vmatprep.mubr.f32.mxu0 0.0
      %1266 = vmatmul.mubr.f32.gmra.mxu0 %v516
      %v1267 = vpop.f32.mrf.mxu0
      %v1268 = vadd.f32 0.0, %v1267
      %v1269 = vpop.f32.mrf.mxu0
      %1270 = vmatprep.mubr.f32.mxu0 0.0
      %1271 = vmatmul.mubr.f32.gmra.mxu0 %v519
      %v1272 = vpop.f32.mrf.mxu0
      %v1273 = vadd.f32 0.0, %v1272
      %v1274 = vpop.f32.mrf.mxu0
      %1275 = vmatprep.mubr.f32.mxu0 0.0
      %1276 = vmatmul.mubr.f32.gmra.mxu0 %v522
      %v1277 = vpop.f32.mrf.mxu0
      %v1278 = vadd.f32 0.0, %v1277
      %v1279 = vpop.f32.mrf.mxu0
      %1280 = vmatprep.mubr.f32.mxu0 0.0
      %1281 = vmatmul.mubr.f32.gmra.mxu0 %v525
      %v1282 = vpop.f32.mrf.mxu0
      %v1283 = vadd.f32 0.0, %v1282
      %v1284 = vpop.f32.mrf.mxu0
      %1285 = vmatprep.mubr.f32.mxu0 0.0
      %1286 = vmatmul.mubr.f32.gmra.mxu0 %v528
      %v1287 = vpop.f32.mrf.mxu0
      %v1288 = vadd.f32 0.0, %v1287
      %v1289 = vpop.f32.mrf.mxu0
      %1290 = vmatprep.mubr.f32.mxu0 0.0
      %1291 = vmatmul.mubr.f32.gmra.mxu0 %v531
      %v1292 = vpop.f32.mrf.mxu0
      %v1293 = vadd.f32 0.0, %v1292
      %v1294 = vpop.f32.mrf.mxu0
      %1295 = vmatprep.mubr.f32.mxu0 0.0
      %1296 = vmatmul.mubr.f32.gmra.mxu0 %v534
      %v1297 = vpop.f32.mrf.mxu0
      %v1298 = vadd.f32 0.0, %v1297
      %v1299 = vpop.f32.mrf.mxu0
      %1300 = vmatprep.mubr.f32.mxu0 0.0
      %1301 = vmatmul.mubr.f32.gmra.mxu0 %v537
      %v1302 = vpop.f32.mrf.mxu0
      %v1303 = vadd.f32 0.0, %v1302
      %v1304 = vpop.f32.mrf.mxu0
      %1305 = vmatprep.mubr.f32.mxu0 0.0
      %1306 = vmatmul.mubr.f32.gmra.mxu0 %v540
      %v1307 = vpop.f32.mrf.mxu0
      %v1308 = vadd.f32 0.0, %v1307
      %v1309 = vpop.f32.mrf.mxu0
      %1310 = vmatprep.mubr.f32.mxu0 0.0
      %1311 = vmatmul.mubr.f32.gmra.mxu0 %v543
      %v1312 = vpop.f32.mrf.mxu0
      %v1313 = vadd.f32 0.0, %v1312
      %v1314 = vpop.f32.mrf.mxu0
      %1315 = vdwg.mxu0
      %v1316 = vld [vmem:[%s3] sm:$0xff]
      %v1318 = vsel %vm352, %v319, 0
      %v1321 = vsel %vm352, %v320, 0
      %v1324 = vsel %vm352, %v321, 0
      %v1327 = vsel %vm352, %v322, 0
      %v1330 = vsel %vm352, %v323, 0
      %v1333 = vsel %vm352, %v324, 0
      %v1336 = vsel %vm352, %v325, 0
      %v1339 = vsel %vm352, %v326, 0
      %v1342 = vsel %vm352, %v327, 0
      %v1345 = vsel %vm352, %v328, 0
      %v1348 = vsel %vm352, %v329, 0
      %v1351 = vsel %vm352, %v330, 0
      %v1354 = vsel %vm352, %v331, 0
      %v1357 = vsel %vm352, %v332, 0
      %v1360 = vsel %vm352, %v333, 0
      %v1363 = vsel %vm352, %v334, 0
      %v1366 = vsel %vm352, %v335, 0
      %v1369 = vsel %vm352, %v336, 0
      %v1372 = vsel %vm352, %v337, 0
      %v1375 = vsel %vm352, %v338, 0
      %v1378 = vsel %vm352, %v339, 0
      %v1381 = vsel %vm352, %v340, 0
      %v1384 = vsel %vm352, %v341, 0
      %v1387 = vsel %vm352, %v342, 0
      %v1390 = vsel %vm352, %v343, 0
      %v1393 = vsel %vm352, %v344, 0
      %v1396 = vsel %vm352, %v345, 0
      %v1399 = vsel %vm352, %v346, 0
      %v1402 = vsel %vm352, %v347, 0
      %v1405 = vsel %vm352, %v348, 0
      %v1408 = vsel %vm352, %v349, 0
      %v1411 = vsel %vm352, %v350, 0
      %1413 = vmatprep.subr.mxu0 0.0
      %1414 = vmatpush1.msra.mxu0 0.0
      %1415 = vmatprep.subr.mxu0 0.0
      %1416 = vmatpush1.msra.mxu0 0.0
      %1417 = vmatprep.subr.mxu0 0.0
      %1418 = vmatpush1.msra.mxu0 0.0
      %1419 = vmatprep.subr.mxu0 0.0
      %1420 = vmatpush1.msra.mxu0 0.0
      %1421 = vmatprep.subr.mxu0 0.0
      %1422 = vmatpush1.msra.mxu0 0.0
      %1423 = vmatprep.subr.mxu0 0.0
      %1424 = vmatpush1.msra.mxu0 0.0
      %1425 = vmatprep.subr.mxu0 0.0
      %1426 = vmatpush1.msra.mxu0 0.0
      %1427 = vmatprep.subr.mxu0 0.0
      %1428 = vmatpush1.msra.mxu0 0.0
      %1429 = vmatprep.subr.mxu0 0.0
      %1430 = vmatpush1.msra.mxu0 0.0
      %1431 = vmatprep.subr.mxu0 0.0
      %1432 = vmatpush1.msra.mxu0 0.0
      %1433 = vmatprep.subr.mxu0 0.0
      %1434 = vmatpush1.msra.mxu0 0.0
      %1435 = vmatprep.subr.mxu0 0.0
      %1436 = vmatpush1.msra.mxu0 0.0
      %1437 = vmatprep.subr.mxu0 0.0
      %1438 = vmatpush1.msra.mxu0 0.0
      %1439 = vmatprep.subr.mxu0 0.0
      %1440 = vmatpush1.msra.mxu0 0.0
      %1441 = vmatprep.subr.mxu0 0.0
      %1442 = vmatpush1.msra.mxu0 0.0
      %1443 = vmatprep.subr.mxu0 0.0
      %1444 = vmatpush1.msra.mxu0 %v1316
      %1445 = vmatprep.subr.mxu0 0.0
      %1446 = vmatpush2.msra.mxu0 0.0
      %1447 = vmatprep.subr.mxu0 0.0
      %1448 = vmatpush2.msra.mxu0 0.0
      %1449 = vmatprep.subr.mxu0 0.0
      %1450 = vmatpush2.msra.mxu0 0.0
      %1451 = vmatprep.subr.mxu0 0.0
      %1452 = vmatpush2.msra.mxu0 0.0
      %1453 = vmatprep.subr.mxu0 0.0
      %1454 = vmatpush2.msra.mxu0 0.0
      %1455 = vmatprep.subr.mxu0 0.0
      %1456 = vmatpush2.msra.mxu0 0.0
      %1457 = vmatprep.subr.mxu0 0.0
      %1458 = vmatpush2.msra.mxu0 0.0
      %1459 = vmatprep.subr.mxu0 0.0
      %1460 = vmatpush2.msra.mxu0 0.0
      %1461 = vmatprep.subr.mxu0 0.0
      %1462 = vmatpush2.msra.mxu0 0.0
      %1463 = vmatprep.subr.mxu0 0.0
      %1464 = vmatpush2.msra.mxu0 0.0
      %1465 = vmatprep.subr.mxu0 0.0
      %1466 = vmatpush2.msra.mxu0 0.0
      %1467 = vmatprep.subr.mxu0 0.0
      %1468 = vmatpush2.msra.mxu0 0.0
      %1469 = vmatprep.subr.mxu0 0.0
      %1470 = vmatpush2.msra.mxu0 0.0
      %1471 = vmatprep.subr.mxu0 0.0
      %1472 = vmatpush2.msra.mxu0 0.0
      %1473 = vmatprep.subr.mxu0 0.0
      %1474 = vmatpush2.msra.mxu0 0.0
      %1475 = vmatprep.subr.mxu0 0.0
      %1476 = vmatpush2.msra.mxu0 0.0
      %1477 = vmatprep.mubr.f32.mxu0 0.0
      %1478 = vmatmul.mubr.f32.gmra.mxu0 %v1318
      %v1479 = vpop.f32.mrf.mxu0
      %v1480 = vadd.f32 0.0, %v1479
      %v1481 = vpop.f32.mrf.mxu0
      %1482 = vmatprep.mubr.f32.mxu0 0.0
      %1483 = vmatmul.mubr.f32.gmra.mxu0 %v1321
      %v1484 = vpop.f32.mrf.mxu0
      %v1485 = vadd.f32 0.0, %v1484
      %v1486 = vpop.f32.mrf.mxu0
      %1487 = vmatprep.mubr.f32.mxu0 0.0
      %1488 = vmatmul.mubr.f32.gmra.mxu0 %v1324
      %v1489 = vpop.f32.mrf.mxu0
      %v1490 = vadd.f32 0.0, %v1489
      %v1491 = vpop.f32.mrf.mxu0
      %1492 = vmatprep.mubr.f32.mxu0 0.0
      %1493 = vmatmul.mubr.f32.gmra.mxu0 %v1327
      %v1494 = vpop.f32.mrf.mxu0
      %v1495 = vadd.f32 0.0, %v1494
      %v1496 = vpop.f32.mrf.mxu0
      %1497 = vmatprep.mubr.f32.mxu0 0.0
      %1498 = vmatmul.mubr.f32.gmra.mxu0 %v1330
      %v1499 = vpop.f32.mrf.mxu0
      %v1500 = vadd.f32 0.0, %v1499
      %v1501 = vpop.f32.mrf.mxu0
      %1502 = vmatprep.mubr.f32.mxu0 0.0
      %1503 = vmatmul.mubr.f32.gmra.mxu0 %v1333
      %v1504 = vpop.f32.mrf.mxu0
      %v1505 = vadd.f32 0.0, %v1504
      %v1506 = vpop.f32.mrf.mxu0
      %1507 = vmatprep.mubr.f32.mxu0 0.0
      %1508 = vmatmul.mubr.f32.gmra.mxu0 %v1336
      %v1509 = vpop.f32.mrf.mxu0
      %v1510 = vadd.f32 0.0, %v1509
      %v1511 = vpop.f32.mrf.mxu0
      %1512 = vmatprep.mubr.f32.mxu0 0.0
      %1513 = vmatmul.mubr.f32.gmra.mxu0 %v1339
      %v1514 = vpop.f32.mrf.mxu0
      %v1515 = vadd.f32 0.0, %v1514
      %v1516 = vpop.f32.mrf.mxu0
      %1517 = vmatprep.mubr.f32.mxu0 0.0
      %1518 = vmatmul.mubr.f32.gmra.mxu0 %v1342
      %v1519 = vpop.f32.mrf.mxu0
      %v1520 = vadd.f32 0.0, %v1519
      %v1521 = vpop.f32.mrf.mxu0
      %1522 = vmatprep.mubr.f32.mxu0 0.0
      %1523 = vmatmul.mubr.f32.gmra.mxu0 %v1345
      %v1524 = vpop.f32.mrf.mxu0
      %v1525 = vadd.f32 0.0, %v1524
      %v1526 = vpop.f32.mrf.mxu0
      %1527 = vmatprep.mubr.f32.mxu0 0.0
      %1528 = vmatmul.mubr.f32.gmra.mxu0 %v1348
      %v1529 = vpop.f32.mrf.mxu0
      %v1530 = vadd.f32 0.0, %v1529
      %v1531 = vpop.f32.mrf.mxu0
      %1532 = vmatprep.mubr.f32.mxu0 0.0
      %1533 = vmatmul.mubr.f32.gmra.mxu0 %v1351
      %v1534 = vpop.f32.mrf.mxu0
      %v1535 = vadd.f32 0.0, %v1534
      %v1536 = vpop.f32.mrf.mxu0
      %1537 = vmatprep.mubr.f32.mxu0 0.0
      %1538 = vmatmul.mubr.f32.gmra.mxu0 %v1354
      %v1539 = vpop.f32.mrf.mxu0
      %v1540 = vadd.f32 0.0, %v1539
      %v1541 = vpop.f32.mrf.mxu0
      %1542 = vmatprep.mubr.f32.mxu0 0.0
      %1543 = vmatmul.mubr.f32.gmra.mxu0 %v1357
      %v1544 = vpop.f32.mrf.mxu0
      %v1545 = vadd.f32 0.0, %v1544
      %v1546 = vpop.f32.mrf.mxu0
      %1547 = vmatprep.mubr.f32.mxu0 0.0
      %1548 = vmatmul.mubr.f32.gmra.mxu0 %v1360
      %v1549 = vpop.f32.mrf.mxu0
      %v1550 = vadd.f32 0.0, %v1549
      %v1551 = vpop.f32.mrf.mxu0
      %1552 = vmatprep.mubr.f32.mxu0 0.0
      %1553 = vmatmul.mubr.f32.gmra.mxu0 %v1363
      %v1554 = vpop.f32.mrf.mxu0
      %v1555 = vadd.f32 0.0, %v1554
      %v1556 = vpop.f32.mrf.mxu0
      %1557 = vmatprep.mubr.f32.mxu0 0.0
      %1558 = vmatmul.mubr.f32.gmra.mxu0 %v1366
      %v1559 = vpop.f32.mrf.mxu0
      %v1560 = vadd.f32 0.0, %v1559
      %v1561 = vpop.f32.mrf.mxu0
      %1562 = vmatprep.mubr.f32.mxu0 0.0
      %1563 = vmatmul.mubr.f32.gmra.mxu0 %v1369
      %v1564 = vpop.f32.mrf.mxu0
      %v1565 = vadd.f32 0.0, %v1564
      %v1566 = vpop.f32.mrf.mxu0
      %1567 = vmatprep.mubr.f32.mxu0 0.0
      %1568 = vmatmul.mubr.f32.gmra.mxu0 %v1372
      %v1569 = vpop.f32.mrf.mxu0
      %v1570 = vadd.f32 0.0, %v1569
      %v1571 = vpop.f32.mrf.mxu0
      %1572 = vmatprep.mubr.f32.mxu0 0.0
      %1573 = vmatmul.mubr.f32.gmra.mxu0 %v1375
      %v1574 = vpop.f32.mrf.mxu0
      %v1575 = vadd.f32 0.0, %v1574
      %v1576 = vpop.f32.mrf.mxu0
      %1577 = vmatprep.mubr.f32.mxu0 0.0
      %1578 = vmatmul.mubr.f32.gmra.mxu0 %v1378
      %v1579 = vpop.f32.mrf.mxu0
      %v1580 = vadd.f32 0.0, %v1579
      %v1581 = vpop.f32.mrf.mxu0
      %1582 = vmatprep.mubr.f32.mxu0 0.0
      %1583 = vmatmul.mubr.f32.gmra.mxu0 %v1381
      %v1584 = vpop.f32.mrf.mxu0
      %v1585 = vadd.f32 0.0, %v1584
      %v1586 = vpop.f32.mrf.mxu0
      %1587 = vmatprep.mubr.f32.mxu0 0.0
      %1588 = vmatmul.mubr.f32.gmra.mxu0 %v1384
      %v1589 = vpop.f32.mrf.mxu0
      %v1590 = vadd.f32 0.0, %v1589
      %v1591 = vpop.f32.mrf.mxu0
      %1592 = vmatprep.mubr.f32.mxu0 0.0
      %1593 = vmatmul.mubr.f32.gmra.mxu0 %v1387
      %v1594 = vpop.f32.mrf.mxu0
      %v1595 = vadd.f32 0.0, %v1594
      %v1596 = vpop.f32.mrf.mxu0
      %1597 = vmatprep.mubr.f32.mxu0 0.0
      %1598 = vmatmul.mubr.f32.gmra.mxu0 %v1390
      %v1599 = vpop.f32.mrf.mxu0
      %v1600 = vadd.f32 0.0, %v1599
      %v1601 = vpop.f32.mrf.mxu0
      %1602 = vmatprep.mubr.f32.mxu0 0.0
      %1603 = vmatmul.mubr.f32.gmra.mxu0 %v1393
      %v1604 = vpop.f32.mrf.mxu0
      %v1605 = vadd.f32 0.0, %v1604
      %v1606 = vpop.f32.mrf.mxu0
      %1607 = vmatprep.mubr.f32.mxu0 0.0
      %1608 = vmatmul.mubr.f32.gmra.mxu0 %v1396
      %v1609 = vpop.f32.mrf.mxu0
      %v1610 = vadd.f32 0.0, %v1609
      %v1611 = vpop.f32.mrf.mxu0
      %1612 = vmatprep.mubr.f32.mxu0 0.0
      %1613 = vmatmul.mubr.f32.gmra.mxu0 %v1399
      %v1614 = vpop.f32.mrf.mxu0
      %v1615 = vadd.f32 0.0, %v1614
      %v1616 = vpop.f32.mrf.mxu0
      %1617 = vmatprep.mubr.f32.mxu0 0.0
      %1618 = vmatmul.mubr.f32.gmra.mxu0 %v1402
      %v1619 = vpop.f32.mrf.mxu0
      %v1620 = vadd.f32 0.0, %v1619
      %v1621 = vpop.f32.mrf.mxu0
      %1622 = vmatprep.mubr.f32.mxu0 0.0
      %1623 = vmatmul.mubr.f32.gmra.mxu0 %v1405
      %v1624 = vpop.f32.mrf.mxu0
      %v1625 = vadd.f32 0.0, %v1624
      %v1626 = vpop.f32.mrf.mxu0
      %1627 = vmatprep.mubr.f32.mxu0 0.0
      %1628 = vmatmul.mubr.f32.gmra.mxu0 %v1408
      %v1629 = vpop.f32.mrf.mxu0
      %v1630 = vadd.f32 0.0, %v1629
      %v1631 = vpop.f32.mrf.mxu0
      %1632 = vmatprep.mubr.f32.mxu0 0.0
      %1633 = vmatmul.mubr.f32.gmra.mxu0 %v1411
      %v1634 = vpop.f32.mrf.mxu0
      %v1635 = vadd.f32 0.0, %v1634
      %v1636 = vpop.f32.mrf.mxu0
      %1637 = vdwg.mxu0
      %v1639 = vsel %vm352, %v612, 0
      %v1642 = vsel %vm352, %v617, 0
      %v1645 = vsel %vm352, %v1480, 0
      %1647 = vmatprep.subr.mxu0 0.0
      %1648 = vmatpush1.xpose.msra.mxu0 0.0
      %1649 = vmatprep.subr.mxu0 0.0
      %1650 = vmatpush1.xpose.msra.mxu0 0.0
      %1651 = vmatprep.subr.mxu0 0.0
      %1652 = vmatpush1.xpose.msra.mxu0 0.0
      %1653 = vmatprep.subr.mxu0 0.0
      %1654 = vmatpush1.xpose.msra.mxu0 0.0
      %1655 = vmatprep.subr.mxu0 0.0
      %1656 = vmatpush1.xpose.msra.mxu0 0.0
      %1657 = vmatprep.subr.mxu0 0.0
      %1658 = vmatpush1.xpose.msra.mxu0 0.0
      %1659 = vmatprep.subr.mxu0 0.0
      %1660 = vmatpush1.xpose.msra.mxu0 0.0
      %1661 = vmatprep.subr.mxu0 0.0
      %1662 = vmatpush1.xpose.msra.mxu0 0.0
      %1663 = vmatprep.subr.mxu0 0.0
      %1664 = vmatpush1.xpose.msra.mxu0 0.0
      %1665 = vmatprep.subr.mxu0 0.0
      %1666 = vmatpush1.xpose.msra.mxu0 0.0
      %1667 = vmatprep.subr.mxu0 0.0
      %1668 = vmatpush1.xpose.msra.mxu0 0.0
      %1669 = vmatprep.subr.mxu0 0.0
      %1670 = vmatpush1.xpose.msra.mxu0 0.0
      %1671 = vmatprep.subr.mxu0 0.0
      %1672 = vmatpush1.xpose.msra.mxu0 0.0
      %1673 = vmatprep.subr.mxu0 0.0
      %1674 = vmatpush1.xpose.msra.mxu0 0.0
      %1675 = vmatprep.subr.mxu0 0.0
      %1676 = vmatpush1.xpose.msra.mxu0 0.0
      %1677 = vmatprep.subr.mxu0 0.0
      %1678 = vmatpush1.xpose.msra.mxu0 %v1645
      %1679 = vmatprep.subr.mxu0 0.0
      %1680 = vmatpush2.xpose.msra.mxu0 0.0
      %1681 = vmatprep.subr.mxu0 0.0
      %1682 = vmatpush2.xpose.msra.mxu0 0.0
      %1683 = vmatprep.subr.mxu0 0.0
      %1684 = vmatpush2.xpose.msra.mxu0 0.0
      %1685 = vmatprep.subr.mxu0 0.0
      %1686 = vmatpush2.xpose.msra.mxu0 0.0
      %1687 = vmatprep.subr.mxu0 0.0
      %1688 = vmatpush2.xpose.msra.mxu0 0.0
      %1689 = vmatprep.subr.mxu0 0.0
      %1690 = vmatpush2.xpose.msra.mxu0 0.0
      %1691 = vmatprep.subr.mxu0 0.0
      %1692 = vmatpush2.xpose.msra.mxu0 0.0
      %1693 = vmatprep.subr.mxu0 0.0
      %1694 = vmatpush2.xpose.msra.mxu0 0.0
      %1695 = vmatprep.subr.mxu0 0.0
      %1696 = vmatpush2.xpose.msra.mxu0 0.0
      %1697 = vmatprep.subr.mxu0 0.0
      %1698 = vmatpush2.xpose.msra.mxu0 0.0
      %1699 = vmatprep.subr.mxu0 0.0
      %1700 = vmatpush2.xpose.msra.mxu0 0.0
      %1701 = vmatprep.subr.mxu0 0.0
      %1702 = vmatpush2.xpose.msra.mxu0 0.0
      %1703 = vmatprep.subr.mxu0 0.0
      %1704 = vmatpush2.xpose.msra.mxu0 0.0
      %1705 = vmatprep.subr.mxu0 0.0
      %1706 = vmatpush2.xpose.msra.mxu0 0.0
      %1707 = vmatprep.subr.mxu0 0.0
      %1708 = vmatpush2.xpose.msra.mxu0 0.0
      %1709 = vmatprep.subr.mxu0 0.0
      %1710 = vmatpush2.xpose.msra.mxu0 0.0
      %1711 = vmatprep.mubr.f32.mxu0 0.0
      %1712 = vmatmul.mubr.f32.gmra.mxu0 %v1639
      %v1713 = vpop.f32.mrf.mxu0
      %v1714 = vadd.f32 0.0, %v1713
      %v1715 = vpop.f32.mrf.mxu0
      %1716 = vmatprep.mubr.f32.mxu0 0.0
      %1717 = vmatmul.mubr.f32.gmra.mxu0 %v1642
      %v1718 = vpop.f32.mrf.mxu0
      %v1719 = vadd.f32 0.0, %v1718
      %v1720 = vpop.f32.mrf.mxu0
      %1721 = vdwg.mxu0
      %v1723 = vsel %vm352, %v622, 0
      %v1726 = vsel %vm352, %v627, 0
      %v1729 = vsel %vm352, %v1485, 0
      %1731 = vmatprep.subr.mxu0 0.0
      %1732 = vmatpush1.xpose.msra.mxu0 0.0
      %1733 = vmatprep.subr.mxu0 0.0
      %1734 = vmatpush1.xpose.msra.mxu0 0.0
      %1735 = vmatprep.subr.mxu0 0.0
      %1736 = vmatpush1.xpose.msra.mxu0 0.0
      %1737 = vmatprep.subr.mxu0 0.0
      %1738 = vmatpush1.xpose.msra.mxu0 0.0
      %1739 = vmatprep.subr.mxu0 0.0
      %1740 = vmatpush1.xpose.msra.mxu0 0.0
      %1741 = vmatprep.subr.mxu0 0.0
      %1742 = vmatpush1.xpose.msra.mxu0 0.0
      %1743 = vmatprep.subr.mxu0 0.0
      %1744 = vmatpush1.xpose.msra.mxu0 0.0
      %1745 = vmatprep.subr.mxu0 0.0
      %1746 = vmatpush1.xpose.msra.mxu0 0.0
      %1747 = vmatprep.subr.mxu0 0.0
      %1748 = vmatpush1.xpose.msra.mxu0 0.0
      %1749 = vmatprep.subr.mxu0 0.0
      %1750 = vmatpush1.xpose.msra.mxu0 0.0
      %1751 = vmatprep.subr.mxu0 0.0
      %1752 = vmatpush1.xpose.msra.mxu0 0.0
      %1753 = vmatprep.subr.mxu0 0.0
      %1754 = vmatpush1.xpose.msra.mxu0 0.0
      %1755 = vmatprep.subr.mxu0 0.0
      %1756 = vmatpush1.xpose.msra.mxu0 0.0
      %1757 = vmatprep.subr.mxu0 0.0
      %1758 = vmatpush1.xpose.msra.mxu0 0.0
      %1759 = vmatprep.subr.mxu0 0.0
      %1760 = vmatpush1.xpose.msra.mxu0 0.0
      %1761 = vmatprep.subr.mxu0 0.0
      %1762 = vmatpush1.xpose.msra.mxu0 %v1729
      %1763 = vmatprep.subr.mxu0 0.0
      %1764 = vmatpush2.xpose.msra.mxu0 0.0
      %1765 = vmatprep.subr.mxu0 0.0
      %1766 = vmatpush2.xpose.msra.mxu0 0.0
      %1767 = vmatprep.subr.mxu0 0.0
      %1768 = vmatpush2.xpose.msra.mxu0 0.0
      %1769 = vmatprep.subr.mxu0 0.0
      %1770 = vmatpush2.xpose.msra.mxu0 0.0
      %1771 = vmatprep.subr.mxu0 0.0
      %1772 = vmatpush2.xpose.msra.mxu0 0.0
      %1773 = vmatprep.subr.mxu0 0.0
      %1774 = vmatpush2.xpose.msra.mxu0 0.0
      %1775 = vmatprep.subr.mxu0 0.0
      %1776 = vmatpush2.xpose.msra.mxu0 0.0
      %1777 = vmatprep.subr.mxu0 0.0
      %1778 = vmatpush2.xpose.msra.mxu0 0.0
      %1779 = vmatprep.subr.mxu0 0.0
      %1780 = vmatpush2.xpose.msra.mxu0 0.0
      %1781 = vmatprep.subr.mxu0 0.0
      %1782 = vmatpush2.xpose.msra.mxu0 0.0
      %1783 = vmatprep.subr.mxu0 0.0
      %1784 = vmatpush2.xpose.msra.mxu0 0.0
      %1785 = vmatprep.subr.mxu0 0.0
      %1786 = vmatpush2.xpose.msra.mxu0 0.0
      %1787 = vmatprep.subr.mxu0 0.0
      %1788 = vmatpush2.xpose.msra.mxu0 0.0
      %1789 = vmatprep.subr.mxu0 0.0
      %1790 = vmatpush2.xpose.msra.mxu0 0.0
      %1791 = vmatprep.subr.mxu0 0.0
      %1792 = vmatpush2.xpose.msra.mxu0 0.0
      %1793 = vmatprep.subr.mxu0 0.0
      %1794 = vmatpush2.xpose.msra.mxu0 0.0
      %1795 = vmatprep.mubr.f32.mxu0 0.0
      %1796 = vmatmul.mubr.f32.gmra.mxu0 %v1723
      %v1797 = vpop.f32.mrf.mxu0
      %v1798 = vadd.f32 0.0, %v1797
      %v1799 = vpop.f32.mrf.mxu0
      %1800 = vmatprep.mubr.f32.mxu0 0.0
      %1801 = vmatmul.mubr.f32.gmra.mxu0 %v1726
      %v1802 = vpop.f32.mrf.mxu0
      %v1803 = vadd.f32 0.0, %v1802
      %v1804 = vpop.f32.mrf.mxu0
      %1805 = vdwg.mxu0
      %v1807 = vsel %vm352, %v632, 0
      %v1810 = vsel %vm352, %v637, 0
      %v1813 = vsel %vm352, %v1490, 0
      %1815 = vmatprep.subr.mxu0 0.0
      %1816 = vmatpush1.xpose.msra.mxu0 0.0
      %1817 = vmatprep.subr.mxu0 0.0
      %1818 = vmatpush1.xpose.msra.mxu0 0.0
      %1819 = vmatprep.subr.mxu0 0.0
      %1820 = vmatpush1.xpose.msra.mxu0 0.0
      %1821 = vmatprep.subr.mxu0 0.0
      %1822 = vmatpush1.xpose.msra.mxu0 0.0
      %1823 = vmatprep.subr.mxu0 0.0
      %1824 = vmatpush1.xpose.msra.mxu0 0.0
      %1825 = vmatprep.subr.mxu0 0.0
      %1826 = vmatpush1.xpose.msra.mxu0 0.0
      %1827 = vmatprep.subr.mxu0 0.0
      %1828 = vmatpush1.xpose.msra.mxu0 0.0
      %1829 = vmatprep.subr.mxu0 0.0
      %1830 = vmatpush1.xpose.msra.mxu0 0.0
      %1831 = vmatprep.subr.mxu0 0.0
      %1832 = vmatpush1.xpose.msra.mxu0 0.0
      %1833 = vmatprep.subr.mxu0 0.0
      %1834 = vmatpush1.xpose.msra.mxu0 0.0
      %1835 = vmatprep.subr.mxu0 0.0
      %1836 = vmatpush1.xpose.msra.mxu0 0.0
      %1837 = vmatprep.subr.mxu0 0.0
      %1838 = vmatpush1.xpose.msra.mxu0 0.0
      %1839 = vmatprep.subr.mxu0 0.0
      %1840 = vmatpush1.xpose.msra.mxu0 0.0
      %1841 = vmatprep.subr.mxu0 0.0
      %1842 = vmatpush1.xpose.msra.mxu0 0.0
      %1843 = vmatprep.subr.mxu0 0.0
      %1844 = vmatpush1.xpose.msra.mxu0 0.0
      %1845 = vmatprep.subr.mxu0 0.0
      %1846 = vmatpush1.xpose.msra.mxu0 %v1813
      %1847 = vmatprep.subr.mxu0 0.0
      %1848 = vmatpush2.xpose.msra.mxu0 0.0
      %1849 = vmatprep.subr.mxu0 0.0
      %1850 = vmatpush2.xpose.msra.mxu0 0.0
      %1851 = vmatprep.subr.mxu0 0.0
      %1852 = vmatpush2.xpose.msra.mxu0 0.0
      %1853 = vmatprep.subr.mxu0 0.0
      %1854 = vmatpush2.xpose.msra.mxu0 0.0
      %1855 = vmatprep.subr.mxu0 0.0
      %1856 = vmatpush2.xpose.msra.mxu0 0.0
      %1857 = vmatprep.subr.mxu0 0.0
      %1858 = vmatpush2.xpose.msra.mxu0 0.0
      %1859 = vmatprep.subr.mxu0 0.0
      %1860 = vmatpush2.xpose.msra.mxu0 0.0
      %1861 = vmatprep.subr.mxu0 0.0
      %1862 = vmatpush2.xpose.msra.mxu0 0.0
      %1863 = vmatprep.subr.mxu0 0.0
      %1864 = vmatpush2.xpose.msra.mxu0 0.0
      %1865 = vmatprep.subr.mxu0 0.0
      %1866 = vmatpush2.xpose.msra.mxu0 0.0
      %1867 = vmatprep.subr.mxu0 0.0
      %1868 = vmatpush2.xpose.msra.mxu0 0.0
      %1869 = vmatprep.subr.mxu0 0.0
      %1870 = vmatpush2.xpose.msra.mxu0 0.0
      %1871 = vmatprep.subr.mxu0 0.0
      %1872 = vmatpush2.xpose.msra.mxu0 0.0
      %1873 = vmatprep.subr.mxu0 0.0
      %1874 = vmatpush2.xpose.msra.mxu0 0.0
      %1875 = vmatprep.subr.mxu0 0.0
      %1876 = vmatpush2.xpose.msra.mxu0 0.0
      %1877 = vmatprep.subr.mxu0 0.0
      %1878 = vmatpush2.xpose.msra.mxu0 0.0
      %1879 = vmatprep.mubr.f32.mxu0 0.0
      %1880 = vmatmul.mubr.f32.gmra.mxu0 %v1807
      %v1881 = vpop.f32.mrf.mxu0
      %v1882 = vadd.f32 0.0, %v1881
      %v1883 = vpop.f32.mrf.mxu0
      %1884 = vmatprep.mubr.f32.mxu0 0.0
      %1885 = vmatmul.mubr.f32.gmra.mxu0 %v1810
      %v1886 = vpop.f32.mrf.mxu0
      %v1887 = vadd.f32 0.0, %v1886
      %v1888 = vpop.f32.mrf.mxu0
      %1889 = vdwg.mxu0
      %v1891 = vsel %vm352, %v642, 0
      %v1894 = vsel %vm352, %v647, 0
      %v1897 = vsel %vm352, %v1495, 0
      %1899 = vmatprep.subr.mxu0 0.0
      %1900 = vmatpush1.xpose.msra.mxu0 0.0
      %1901 = vmatprep.subr.mxu0 0.0
      %1902 = vmatpush1.xpose.msra.mxu0 0.0
      %1903 = vmatprep.subr.mxu0 0.0
      %1904 = vmatpush1.xpose.msra.mxu0 0.0
      %1905 = vmatprep.subr.mxu0 0.0
      %1906 = vmatpush1.xpose.msra.mxu0 0.0
      %1907 = vmatprep.subr.mxu0 0.0
      %1908 = vmatpush1.xpose.msra.mxu0 0.0
      %1909 = vmatprep.subr.mxu0 0.0
      %1910 = vmatpush1.xpose.msra.mxu0 0.0
      %1911 = vmatprep.subr.mxu0 0.0
      %1912 = vmatpush1.xpose.msra.mxu0 0.0
      %1913 = vmatprep.subr.mxu0 0.0
      %1914 = vmatpush1.xpose.msra.mxu0 0.0
      %1915 = vmatprep.subr.mxu0 0.0
      %1916 = vmatpush1.xpose.msra.mxu0 0.0
      %1917 = vmatprep.subr.mxu0 0.0
      %1918 = vmatpush1.xpose.msra.mxu0 0.0
      %1919 = vmatprep.subr.mxu0 0.0
      %1920 = vmatpush1.xpose.msra.mxu0 0.0
      %1921 = vmatprep.subr.mxu0 0.0
      %1922 = vmatpush1.xpose.msra.mxu0 0.0
      %1923 = vmatprep.subr.mxu0 0.0
      %1924 = vmatpush1.xpose.msra.mxu0 0.0
      %1925 = vmatprep.subr.mxu0 0.0
      %1926 = vmatpush1.xpose.msra.mxu0 0.0
      %1927 = vmatprep.subr.mxu0 0.0
      %1928 = vmatpush1.xpose.msra.mxu0 0.0
      %1929 = vmatprep.subr.mxu0 0.0
      %1930 = vmatpush1.xpose.msra.mxu0 %v1897
      %1931 = vmatprep.subr.mxu0 0.0
      %1932 = vmatpush2.xpose.msra.mxu0 0.0
      %1933 = vmatprep.subr.mxu0 0.0
      %1934 = vmatpush2.xpose.msra.mxu0 0.0
      %1935 = vmatprep.subr.mxu0 0.0
      %1936 = vmatpush2.xpose.msra.mxu0 0.0
      %1937 = vmatprep.subr.mxu0 0.0
      %1938 = vmatpush2.xpose.msra.mxu0 0.0
      %1939 = vmatprep.subr.mxu0 0.0
      %1940 = vmatpush2.xpose.msra.mxu0 0.0
      %1941 = vmatprep.subr.mxu0 0.0
      %1942 = vmatpush2.xpose.msra.mxu0 0.0
      %1943 = vmatprep.subr.mxu0 0.0
      %1944 = vmatpush2.xpose.msra.mxu0 0.0
      %1945 = vmatprep.subr.mxu0 0.0
      %1946 = vmatpush2.xpose.msra.mxu0 0.0
      %1947 = vmatprep.subr.mxu0 0.0
      %1948 = vmatpush2.xpose.msra.mxu0 0.0
      %1949 = vmatprep.subr.mxu0 0.0
      %1950 = vmatpush2.xpose.msra.mxu0 0.0
      %1951 = vmatprep.subr.mxu0 0.0
      %1952 = vmatpush2.xpose.msra.mxu0 0.0
      %1953 = vmatprep.subr.mxu0 0.0
      %1954 = vmatpush2.xpose.msra.mxu0 0.0
      %1955 = vmatprep.subr.mxu0 0.0
      %1956 = vmatpush2.xpose.msra.mxu0 0.0
      %1957 = vmatprep.subr.mxu0 0.0
      %1958 = vmatpush2.xpose.msra.mxu0 0.0
      %1959 = vmatprep.subr.mxu0 0.0
      %1960 = vmatpush2.xpose.msra.mxu0 0.0
      %1961 = vmatprep.subr.mxu0 0.0
      %1962 = vmatpush2.xpose.msra.mxu0 0.0
      %1963 = vmatprep.mubr.f32.mxu0 0.0
      %1964 = vmatmul.mubr.f32.gmra.mxu0 %v1891
      %v1965 = vpop.f32.mrf.mxu0
      %v1966 = vadd.f32 0.0, %v1965
      %v1967 = vpop.f32.mrf.mxu0
      %1968 = vmatprep.mubr.f32.mxu0 0.0
      %1969 = vmatmul.mubr.f32.gmra.mxu0 %v1894
      %v1970 = vpop.f32.mrf.mxu0
      %v1971 = vadd.f32 0.0, %v1970
      %v1972 = vpop.f32.mrf.mxu0
      %1973 = vdwg.mxu0
      %v1975 = vsel %vm352, %v652, 0
      %v1978 = vsel %vm352, %v657, 0
      %v1981 = vsel %vm352, %v1500, 0
      %1983 = vmatprep.subr.mxu0 0.0
      %1984 = vmatpush1.xpose.msra.mxu0 0.0
      %1985 = vmatprep.subr.mxu0 0.0
      %1986 = vmatpush1.xpose.msra.mxu0 0.0
      %1987 = vmatprep.subr.mxu0 0.0
      %1988 = vmatpush1.xpose.msra.mxu0 0.0
      %1989 = vmatprep.subr.mxu0 0.0
      %1990 = vmatpush1.xpose.msra.mxu0 0.0
      %1991 = vmatprep.subr.mxu0 0.0
      %1992 = vmatpush1.xpose.msra.mxu0 0.0
      %1993 = vmatprep.subr.mxu0 0.0
      %1994 = vmatpush1.xpose.msra.mxu0 0.0
      %1995 = vmatprep.subr.mxu0 0.0
      %1996 = vmatpush1.xpose.msra.mxu0 0.0
      %1997 = vmatprep.subr.mxu0 0.0
      %1998 = vmatpush1.xpose.msra.mxu0 0.0
      %1999 = vmatprep.subr.mxu0 0.0
      %2000 = vmatpush1.xpose.msra.mxu0 0.0
      %2001 = vmatprep.subr.mxu0 0.0
      %2002 = vmatpush1.xpose.msra.mxu0 0.0
      %2003 = vmatprep.subr.mxu0 0.0
      %2004 = vmatpush1.xpose.msra.mxu0 0.0
      %2005 = vmatprep.subr.mxu0 0.0
      %2006 = vmatpush1.xpose.msra.mxu0 0.0
      %2007 = vmatprep.subr.mxu0 0.0
      %2008 = vmatpush1.xpose.msra.mxu0 0.0
      %2009 = vmatprep.subr.mxu0 0.0
      %2010 = vmatpush1.xpose.msra.mxu0 0.0
      %2011 = vmatprep.subr.mxu0 0.0
      %2012 = vmatpush1.xpose.msra.mxu0 0.0
      %2013 = vmatprep.subr.mxu0 0.0
      %2014 = vmatpush1.xpose.msra.mxu0 %v1981
      %2015 = vmatprep.subr.mxu0 0.0
      %2016 = vmatpush2.xpose.msra.mxu0 0.0
      %2017 = vmatprep.subr.mxu0 0.0
      %2018 = vmatpush2.xpose.msra.mxu0 0.0
      %2019 = vmatprep.subr.mxu0 0.0
      %2020 = vmatpush2.xpose.msra.mxu0 0.0
      %2021 = vmatprep.subr.mxu0 0.0
      %2022 = vmatpush2.xpose.msra.mxu0 0.0
      %2023 = vmatprep.subr.mxu0 0.0
      %2024 = vmatpush2.xpose.msra.mxu0 0.0
      %2025 = vmatprep.subr.mxu0 0.0
      %2026 = vmatpush2.xpose.msra.mxu0 0.0
      %2027 = vmatprep.subr.mxu0 0.0
      %2028 = vmatpush2.xpose.msra.mxu0 0.0
      %2029 = vmatprep.subr.mxu0 0.0
      %2030 = vmatpush2.xpose.msra.mxu0 0.0
      %2031 = vmatprep.subr.mxu0 0.0
      %2032 = vmatpush2.xpose.msra.mxu0 0.0
      %2033 = vmatprep.subr.mxu0 0.0
      %2034 = vmatpush2.xpose.msra.mxu0 0.0
      %2035 = vmatprep.subr.mxu0 0.0
      %2036 = vmatpush2.xpose.msra.mxu0 0.0
      %2037 = vmatprep.subr.mxu0 0.0
      %2038 = vmatpush2.xpose.msra.mxu0 0.0
      %2039 = vmatprep.subr.mxu0 0.0
      %2040 = vmatpush2.xpose.msra.mxu0 0.0
      %2041 = vmatprep.subr.mxu0 0.0
      %2042 = vmatpush2.xpose.msra.mxu0 0.0
      %2043 = vmatprep.subr.mxu0 0.0
      %2044 = vmatpush2.xpose.msra.mxu0 0.0
      %2045 = vmatprep.subr.mxu0 0.0
      %2046 = vmatpush2.xpose.msra.mxu0 0.0
      %2047 = vmatprep.mubr.f32.mxu0 0.0
      %2048 = vmatmul.mubr.f32.gmra.mxu0 %v1975
      %v2049 = vpop.f32.mrf.mxu0
      %v2050 = vadd.f32 0.0, %v2049
      %v2051 = vpop.f32.mrf.mxu0
      %2052 = vmatprep.mubr.f32.mxu0 0.0
      %2053 = vmatmul.mubr.f32.gmra.mxu0 %v1978
      %v2054 = vpop.f32.mrf.mxu0
      %v2055 = vadd.f32 0.0, %v2054
      %v2056 = vpop.f32.mrf.mxu0
      %2057 = vdwg.mxu0
      %v2059 = vsel %vm352, %v662, 0
      %v2062 = vsel %vm352, %v667, 0
      %v2065 = vsel %vm352, %v1505, 0
      %2067 = vmatprep.subr.mxu0 0.0
      %2068 = vmatpush1.xpose.msra.mxu0 0.0
      %2069 = vmatprep.subr.mxu0 0.0
      %2070 = vmatpush1.xpose.msra.mxu0 0.0
      %2071 = vmatprep.subr.mxu0 0.0
      %2072 = vmatpush1.xpose.msra.mxu0 0.0
      %2073 = vmatprep.subr.mxu0 0.0
      %2074 = vmatpush1.xpose.msra.mxu0 0.0
      %2075 = vmatprep.subr.mxu0 0.0
      %2076 = vmatpush1.xpose.msra.mxu0 0.0
      %2077 = vmatprep.subr.mxu0 0.0
      %2078 = vmatpush1.xpose.msra.mxu0 0.0
      %2079 = vmatprep.subr.mxu0 0.0
      %2080 = vmatpush1.xpose.msra.mxu0 0.0
      %2081 = vmatprep.subr.mxu0 0.0
      %2082 = vmatpush1.xpose.msra.mxu0 0.0
      %2083 = vmatprep.subr.mxu0 0.0
      %2084 = vmatpush1.xpose.msra.mxu0 0.0
      %2085 = vmatprep.subr.mxu0 0.0
      %2086 = vmatpush1.xpose.msra.mxu0 0.0
      %2087 = vmatprep.subr.mxu0 0.0
      %2088 = vmatpush1.xpose.msra.mxu0 0.0
      %2089 = vmatprep.subr.mxu0 0.0
      %2090 = vmatpush1.xpose.msra.mxu0 0.0
      %2091 = vmatprep.subr.mxu0 0.0
      %2092 = vmatpush1.xpose.msra.mxu0 0.0
      %2093 = vmatprep.subr.mxu0 0.0
      %2094 = vmatpush1.xpose.msra.mxu0 0.0
      %2095 = vmatprep.subr.mxu0 0.0
      %2096 = vmatpush1.xpose.msra.mxu0 0.0
      %2097 = vmatprep.subr.mxu0 0.0
      %2098 = vmatpush1.xpose.msra.mxu0 %v2065
      %2099 = vmatprep.subr.mxu0 0.0
      %2100 = vmatpush2.xpose.msra.mxu0 0.0
      %2101 = vmatprep.subr.mxu0 0.0
      %2102 = vmatpush2.xpose.msra.mxu0 0.0
      %2103 = vmatprep.subr.mxu0 0.0
      %2104 = vmatpush2.xpose.msra.mxu0 0.0
      %2105 = vmatprep.subr.mxu0 0.0
      %2106 = vmatpush2.xpose.msra.mxu0 0.0
      %2107 = vmatprep.subr.mxu0 0.0
      %2108 = vmatpush2.xpose.msra.mxu0 0.0
      %2109 = vmatprep.subr.mxu0 0.0
      %2110 = vmatpush2.xpose.msra.mxu0 0.0
      %2111 = vmatprep.subr.mxu0 0.0
      %2112 = vmatpush2.xpose.msra.mxu0 0.0
      %2113 = vmatprep.subr.mxu0 0.0
      %2114 = vmatpush2.xpose.msra.mxu0 0.0
      %2115 = vmatprep.subr.mxu0 0.0
      %2116 = vmatpush2.xpose.msra.mxu0 0.0
      %2117 = vmatprep.subr.mxu0 0.0
      %2118 = vmatpush2.xpose.msra.mxu0 0.0
      %2119 = vmatprep.subr.mxu0 0.0
      %2120 = vmatpush2.xpose.msra.mxu0 0.0
      %2121 = vmatprep.subr.mxu0 0.0
      %2122 = vmatpush2.xpose.msra.mxu0 0.0
      %2123 = vmatprep.subr.mxu0 0.0
      %2124 = vmatpush2.xpose.msra.mxu0 0.0
      %2125 = vmatprep.subr.mxu0 0.0
      %2126 = vmatpush2.xpose.msra.mxu0 0.0
      %2127 = vmatprep.subr.mxu0 0.0
      %2128 = vmatpush2.xpose.msra.mxu0 0.0
      %2129 = vmatprep.subr.mxu0 0.0
      %2130 = vmatpush2.xpose.msra.mxu0 0.0
      %2131 = vmatprep.mubr.f32.mxu0 0.0
      %2132 = vmatmul.mubr.f32.gmra.mxu0 %v2059
      %v2133 = vpop.f32.mrf.mxu0
      %v2134 = vadd.f32 0.0, %v2133
      %v2135 = vpop.f32.mrf.mxu0
      %2136 = vmatprep.mubr.f32.mxu0 0.0
      %2137 = vmatmul.mubr.f32.gmra.mxu0 %v2062
      %v2138 = vpop.f32.mrf.mxu0
      %v2139 = vadd.f32 0.0, %v2138
      %v2140 = vpop.f32.mrf.mxu0
      %2141 = vdwg.mxu0
      %v2143 = vsel %vm352, %v672, 0
      %v2146 = vsel %vm352, %v677, 0
      %v2149 = vsel %vm352, %v1510, 0
      %2151 = vmatprep.subr.mxu0 0.0
      %2152 = vmatpush1.xpose.msra.mxu0 0.0
      %2153 = vmatprep.subr.mxu0 0.0
      %2154 = vmatpush1.xpose.msra.mxu0 0.0
      %2155 = vmatprep.subr.mxu0 0.0
      %2156 = vmatpush1.xpose.msra.mxu0 0.0
      %2157 = vmatprep.subr.mxu0 0.0
      %2158 = vmatpush1.xpose.msra.mxu0 0.0
      %2159 = vmatprep.subr.mxu0 0.0
      %2160 = vmatpush1.xpose.msra.mxu0 0.0
      %2161 = vmatprep.subr.mxu0 0.0
      %2162 = vmatpush1.xpose.msra.mxu0 0.0
      %2163 = vmatprep.subr.mxu0 0.0
      %2164 = vmatpush1.xpose.msra.mxu0 0.0
      %2165 = vmatprep.subr.mxu0 0.0
      %2166 = vmatpush1.xpose.msra.mxu0 0.0
      %2167 = vmatprep.subr.mxu0 0.0
      %2168 = vmatpush1.xpose.msra.mxu0 0.0
      %2169 = vmatprep.subr.mxu0 0.0
      %2170 = vmatpush1.xpose.msra.mxu0 0.0
      %2171 = vmatprep.subr.mxu0 0.0
      %2172 = vmatpush1.xpose.msra.mxu0 0.0
      %2173 = vmatprep.subr.mxu0 0.0
      %2174 = vmatpush1.xpose.msra.mxu0 0.0
      %2175 = vmatprep.subr.mxu0 0.0
      %2176 = vmatpush1.xpose.msra.mxu0 0.0
      %2177 = vmatprep.subr.mxu0 0.0
      %2178 = vmatpush1.xpose.msra.mxu0 0.0
      %2179 = vmatprep.subr.mxu0 0.0
      %2180 = vmatpush1.xpose.msra.mxu0 0.0
      %2181 = vmatprep.subr.mxu0 0.0
      %2182 = vmatpush1.xpose.msra.mxu0 %v2149
      %2183 = vmatprep.subr.mxu0 0.0
      %2184 = vmatpush2.xpose.msra.mxu0 0.0
      %2185 = vmatprep.subr.mxu0 0.0
      %2186 = vmatpush2.xpose.msra.mxu0 0.0
      %2187 = vmatprep.subr.mxu0 0.0
      %2188 = vmatpush2.xpose.msra.mxu0 0.0
      %2189 = vmatprep.subr.mxu0 0.0
      %2190 = vmatpush2.xpose.msra.mxu0 0.0
      %2191 = vmatprep.subr.mxu0 0.0
      %2192 = vmatpush2.xpose.msra.mxu0 0.0
      %2193 = vmatprep.subr.mxu0 0.0
      %2194 = vmatpush2.xpose.msra.mxu0 0.0
      %2195 = vmatprep.subr.mxu0 0.0
      %2196 = vmatpush2.xpose.msra.mxu0 0.0
      %2197 = vmatprep.subr.mxu0 0.0
      %2198 = vmatpush2.xpose.msra.mxu0 0.0
      %2199 = vmatprep.subr.mxu0 0.0
      %2200 = vmatpush2.xpose.msra.mxu0 0.0
      %2201 = vmatprep.subr.mxu0 0.0
      %2202 = vmatpush2.xpose.msra.mxu0 0.0
      %2203 = vmatprep.subr.mxu0 0.0
      %2204 = vmatpush2.xpose.msra.mxu0 0.0
      %2205 = vmatprep.subr.mxu0 0.0
      %2206 = vmatpush2.xpose.msra.mxu0 0.0
      %2207 = vmatprep.subr.mxu0 0.0
      %2208 = vmatpush2.xpose.msra.mxu0 0.0
      %2209 = vmatprep.subr.mxu0 0.0
      %2210 = vmatpush2.xpose.msra.mxu0 0.0
      %2211 = vmatprep.subr.mxu0 0.0
      %2212 = vmatpush2.xpose.msra.mxu0 0.0
      %2213 = vmatprep.subr.mxu0 0.0
      %2214 = vmatpush2.xpose.msra.mxu0 0.0
      %2215 = vmatprep.mubr.f32.mxu0 0.0
      %2216 = vmatmul.mubr.f32.gmra.mxu0 %v2143
      %v2217 = vpop.f32.mrf.mxu0
      %v2218 = vadd.f32 0.0, %v2217
      %v2219 = vpop.f32.mrf.mxu0
      %2220 = vmatprep.mubr.f32.mxu0 0.0
      %2221 = vmatmul.mubr.f32.gmra.mxu0 %v2146
      %v2222 = vpop.f32.mrf.mxu0
      %v2223 = vadd.f32 0.0, %v2222
      %v2224 = vpop.f32.mrf.mxu0
      %2225 = vdwg.mxu0
      %v2227 = vsel %vm352, %v682, 0
      %v2230 = vsel %vm352, %v687, 0
      %v2233 = vsel %vm352, %v1515, 0
      %2235 = vmatprep.subr.mxu0 0.0
      %2236 = vmatpush1.xpose.msra.mxu0 0.0
      %2237 = vmatprep.subr.mxu0 0.0
      %2238 = vmatpush1.xpose.msra.mxu0 0.0
      %2239 = vmatprep.subr.mxu0 0.0
      %2240 = vmatpush1.xpose.msra.mxu0 0.0
      %2241 = vmatprep.subr.mxu0 0.0
      %2242 = vmatpush1.xpose.msra.mxu0 0.0
      %2243 = vmatprep.subr.mxu0 0.0
      %2244 = vmatpush1.xpose.msra.mxu0 0.0
      %2245 = vmatprep.subr.mxu0 0.0
      %2246 = vmatpush1.xpose.msra.mxu0 0.0
      %2247 = vmatprep.subr.mxu0 0.0
      %2248 = vmatpush1.xpose.msra.mxu0 0.0
      %2249 = vmatprep.subr.mxu0 0.0
      %2250 = vmatpush1.xpose.msra.mxu0 0.0
      %2251 = vmatprep.subr.mxu0 0.0
      %2252 = vmatpush1.xpose.msra.mxu0 0.0
      %2253 = vmatprep.subr.mxu0 0.0
      %2254 = vmatpush1.xpose.msra.mxu0 0.0
      %2255 = vmatprep.subr.mxu0 0.0
      %2256 = vmatpush1.xpose.msra.mxu0 0.0
      %2257 = vmatprep.subr.mxu0 0.0
      %2258 = vmatpush1.xpose.msra.mxu0 0.0
      %2259 = vmatprep.subr.mxu0 0.0
      %2260 = vmatpush1.xpose.msra.mxu0 0.0
      %2261 = vmatprep.subr.mxu0 0.0
      %2262 = vmatpush1.xpose.msra.mxu0 0.0
      %2263 = vmatprep.subr.mxu0 0.0
      %2264 = vmatpush1.xpose.msra.mxu0 0.0
      %2265 = vmatprep.subr.mxu0 0.0
      %2266 = vmatpush1.xpose.msra.mxu0 %v2233
      %2267 = vmatprep.subr.mxu0 0.0
      %2268 = vmatpush2.xpose.msra.mxu0 0.0
      %2269 = vmatprep.subr.mxu0 0.0
      %2270 = vmatpush2.xpose.msra.mxu0 0.0
      %2271 = vmatprep.subr.mxu0 0.0
      %2272 = vmatpush2.xpose.msra.mxu0 0.0
      %2273 = vmatprep.subr.mxu0 0.0
      %2274 = vmatpush2.xpose.msra.mxu0 0.0
      %2275 = vmatprep.subr.mxu0 0.0
      %2276 = vmatpush2.xpose.msra.mxu0 0.0
      %2277 = vmatprep.subr.mxu0 0.0
      %2278 = vmatpush2.xpose.msra.mxu0 0.0
      %2279 = vmatprep.subr.mxu0 0.0
      %2280 = vmatpush2.xpose.msra.mxu0 0.0
      %2281 = vmatprep.subr.mxu0 0.0
      %2282 = vmatpush2.xpose.msra.mxu0 0.0
      %2283 = vmatprep.subr.mxu0 0.0
      %2284 = vmatpush2.xpose.msra.mxu0 0.0
      %2285 = vmatprep.subr.mxu0 0.0
      %2286 = vmatpush2.xpose.msra.mxu0 0.0
      %2287 = vmatprep.subr.mxu0 0.0
      %2288 = vmatpush2.xpose.msra.mxu0 0.0
      %2289 = vmatprep.subr.mxu0 0.0
      %2290 = vmatpush2.xpose.msra.mxu0 0.0
      %2291 = vmatprep.subr.mxu0 0.0
      %2292 = vmatpush2.xpose.msra.mxu0 0.0
      %2293 = vmatprep.subr.mxu0 0.0
      %2294 = vmatpush2.xpose.msra.mxu0 0.0
      %2295 = vmatprep.subr.mxu0 0.0
      %2296 = vmatpush2.xpose.msra.mxu0 0.0
      %2297 = vmatprep.subr.mxu0 0.0
      %2298 = vmatpush2.xpose.msra.mxu0 0.0
      %2299 = vmatprep.mubr.f32.mxu0 0.0
      %2300 = vmatmul.mubr.f32.gmra.mxu0 %v2227
      %v2301 = vpop.f32.mrf.mxu0
      %v2302 = vadd.f32 0.0, %v2301
      %v2303 = vpop.f32.mrf.mxu0
      %2304 = vmatprep.mubr.f32.mxu0 0.0
      %2305 = vmatmul.mubr.f32.gmra.mxu0 %v2230
      %v2306 = vpop.f32.mrf.mxu0
      %v2307 = vadd.f32 0.0, %v2306
      %v2308 = vpop.f32.mrf.mxu0
      %2309 = vdwg.mxu0
      %v2311 = vsel %vm352, %v692, 0
      %v2314 = vsel %vm352, %v697, 0
      %v2317 = vsel %vm352, %v1520, 0
      %2319 = vmatprep.subr.mxu0 0.0
      %2320 = vmatpush1.xpose.msra.mxu0 0.0
      %2321 = vmatprep.subr.mxu0 0.0
      %2322 = vmatpush1.xpose.msra.mxu0 0.0
      %2323 = vmatprep.subr.mxu0 0.0
      %2324 = vmatpush1.xpose.msra.mxu0 0.0
      %2325 = vmatprep.subr.mxu0 0.0
      %2326 = vmatpush1.xpose.msra.mxu0 0.0
      %2327 = vmatprep.subr.mxu0 0.0
      %2328 = vmatpush1.xpose.msra.mxu0 0.0
      %2329 = vmatprep.subr.mxu0 0.0
      %2330 = vmatpush1.xpose.msra.mxu0 0.0
      %2331 = vmatprep.subr.mxu0 0.0
      %2332 = vmatpush1.xpose.msra.mxu0 0.0
      %2333 = vmatprep.subr.mxu0 0.0
      %2334 = vmatpush1.xpose.msra.mxu0 0.0
      %2335 = vmatprep.subr.mxu0 0.0
      %2336 = vmatpush1.xpose.msra.mxu0 0.0
      %2337 = vmatprep.subr.mxu0 0.0
      %2338 = vmatpush1.xpose.msra.mxu0 0.0
      %2339 = vmatprep.subr.mxu0 0.0
      %2340 = vmatpush1.xpose.msra.mxu0 0.0
      %2341 = vmatprep.subr.mxu0 0.0
      %2342 = vmatpush1.xpose.msra.mxu0 0.0
      %2343 = vmatprep.subr.mxu0 0.0
      %2344 = vmatpush1.xpose.msra.mxu0 0.0
      %2345 = vmatprep.subr.mxu0 0.0
      %2346 = vmatpush1.xpose.msra.mxu0 0.0
      %2347 = vmatprep.subr.mxu0 0.0
      %2348 = vmatpush1.xpose.msra.mxu0 0.0
      %2349 = vmatprep.subr.mxu0 0.0
      %2350 = vmatpush1.xpose.msra.mxu0 %v2317
      %2351 = vmatprep.subr.mxu0 0.0
      %2352 = vmatpush2.xpose.msra.mxu0 0.0
      %2353 = vmatprep.subr.mxu0 0.0
      %2354 = vmatpush2.xpose.msra.mxu0 0.0
      %2355 = vmatprep.subr.mxu0 0.0
      %2356 = vmatpush2.xpose.msra.mxu0 0.0
      %2357 = vmatprep.subr.mxu0 0.0
      %2358 = vmatpush2.xpose.msra.mxu0 0.0
      %2359 = vmatprep.subr.mxu0 0.0
      %2360 = vmatpush2.xpose.msra.mxu0 0.0
      %2361 = vmatprep.subr.mxu0 0.0
      %2362 = vmatpush2.xpose.msra.mxu0 0.0
      %2363 = vmatprep.subr.mxu0 0.0
      %2364 = vmatpush2.xpose.msra.mxu0 0.0
      %2365 = vmatprep.subr.mxu0 0.0
      %2366 = vmatpush2.xpose.msra.mxu0 0.0
      %2367 = vmatprep.subr.mxu0 0.0
      %2368 = vmatpush2.xpose.msra.mxu0 0.0
      %2369 = vmatprep.subr.mxu0 0.0
      %2370 = vmatpush2.xpose.msra.mxu0 0.0
      %2371 = vmatprep.subr.mxu0 0.0
      %2372 = vmatpush2.xpose.msra.mxu0 0.0
      %2373 = vmatprep.subr.mxu0 0.0
      %2374 = vmatpush2.xpose.msra.mxu0 0.0
      %2375 = vmatprep.subr.mxu0 0.0
      %2376 = vmatpush2.xpose.msra.mxu0 0.0
      %2377 = vmatprep.subr.mxu0 0.0
      %2378 = vmatpush2.xpose.msra.mxu0 0.0
      %2379 = vmatprep.subr.mxu0 0.0
      %2380 = vmatpush2.xpose.msra.mxu0 0.0
      %2381 = vmatprep.subr.mxu0 0.0
      %2382 = vmatpush2.xpose.msra.mxu0 0.0
      %2383 = vmatprep.mubr.f32.mxu0 0.0
      %2384 = vmatmul.mubr.f32.gmra.mxu0 %v2311
      %v2385 = vpop.f32.mrf.mxu0
      %v2386 = vadd.f32 0.0, %v2385
      %v2387 = vpop.f32.mrf.mxu0
      %2388 = vmatprep.mubr.f32.mxu0 0.0
      %2389 = vmatmul.mubr.f32.gmra.mxu0 %v2314
      %v2390 = vpop.f32.mrf.mxu0
      %v2391 = vadd.f32 0.0, %v2390
      %v2392 = vpop.f32.mrf.mxu0
      %2393 = vdwg.mxu0
      %v2395 = vsel %vm352, %v702, 0
      %v2398 = vsel %vm352, %v707, 0
      %v2401 = vsel %vm352, %v1525, 0
      %2403 = vmatprep.subr.mxu0 0.0
      %2404 = vmatpush1.xpose.msra.mxu0 0.0
      %2405 = vmatprep.subr.mxu0 0.0
      %2406 = vmatpush1.xpose.msra.mxu0 0.0
      %2407 = vmatprep.subr.mxu0 0.0
      %2408 = vmatpush1.xpose.msra.mxu0 0.0
      %2409 = vmatprep.subr.mxu0 0.0
      %2410 = vmatpush1.xpose.msra.mxu0 0.0
      %2411 = vmatprep.subr.mxu0 0.0
      %2412 = vmatpush1.xpose.msra.mxu0 0.0
      %2413 = vmatprep.subr.mxu0 0.0
      %2414 = vmatpush1.xpose.msra.mxu0 0.0
      %2415 = vmatprep.subr.mxu0 0.0
      %2416 = vmatpush1.xpose.msra.mxu0 0.0
      %2417 = vmatprep.subr.mxu0 0.0
      %2418 = vmatpush1.xpose.msra.mxu0 0.0
      %2419 = vmatprep.subr.mxu0 0.0
      %2420 = vmatpush1.xpose.msra.mxu0 0.0
      %2421 = vmatprep.subr.mxu0 0.0
      %2422 = vmatpush1.xpose.msra.mxu0 0.0
      %2423 = vmatprep.subr.mxu0 0.0
      %2424 = vmatpush1.xpose.msra.mxu0 0.0
      %2425 = vmatprep.subr.mxu0 0.0
      %2426 = vmatpush1.xpose.msra.mxu0 0.0
      %2427 = vmatprep.subr.mxu0 0.0
      %2428 = vmatpush1.xpose.msra.mxu0 0.0
      %2429 = vmatprep.subr.mxu0 0.0
      %2430 = vmatpush1.xpose.msra.mxu0 0.0
      %2431 = vmatprep.subr.mxu0 0.0
      %2432 = vmatpush1.xpose.msra.mxu0 0.0
      %2433 = vmatprep.subr.mxu0 0.0
      %2434 = vmatpush1.xpose.msra.mxu0 %v2401
      %2435 = vmatprep.subr.mxu0 0.0
      %2436 = vmatpush2.xpose.msra.mxu0 0.0
      %2437 = vmatprep.subr.mxu0 0.0
      %2438 = vmatpush2.xpose.msra.mxu0 0.0
      %2439 = vmatprep.subr.mxu0 0.0
      %2440 = vmatpush2.xpose.msra.mxu0 0.0
      %2441 = vmatprep.subr.mxu0 0.0
      %2442 = vmatpush2.xpose.msra.mxu0 0.0
      %2443 = vmatprep.subr.mxu0 0.0
      %2444 = vmatpush2.xpose.msra.mxu0 0.0
      %2445 = vmatprep.subr.mxu0 0.0
      %2446 = vmatpush2.xpose.msra.mxu0 0.0
      %2447 = vmatprep.subr.mxu0 0.0
      %2448 = vmatpush2.xpose.msra.mxu0 0.0
      %2449 = vmatprep.subr.mxu0 0.0
      %2450 = vmatpush2.xpose.msra.mxu0 0.0
      %2451 = vmatprep.subr.mxu0 0.0
      %2452 = vmatpush2.xpose.msra.mxu0 0.0
      %2453 = vmatprep.subr.mxu0 0.0
      %2454 = vmatpush2.xpose.msra.mxu0 0.0
      %2455 = vmatprep.subr.mxu0 0.0
      %2456 = vmatpush2.xpose.msra.mxu0 0.0
      %2457 = vmatprep.subr.mxu0 0.0
      %2458 = vmatpush2.xpose.msra.mxu0 0.0
      %2459 = vmatprep.subr.mxu0 0.0
      %2460 = vmatpush2.xpose.msra.mxu0 0.0
      %2461 = vmatprep.subr.mxu0 0.0
      %2462 = vmatpush2.xpose.msra.mxu0 0.0
      %2463 = vmatprep.subr.mxu0 0.0
      %2464 = vmatpush2.xpose.msra.mxu0 0.0
      %2465 = vmatprep.subr.mxu0 0.0
      %2466 = vmatpush2.xpose.msra.mxu0 0.0
      %2467 = vmatprep.mubr.f32.mxu0 0.0
      %2468 = vmatmul.mubr.f32.gmra.mxu0 %v2395
      %v2469 = vpop.f32.mrf.mxu0
      %v2470 = vadd.f32 0.0, %v2469
      %v2471 = vpop.f32.mrf.mxu0
      %2472 = vmatprep.mubr.f32.mxu0 0.0
      %2473 = vmatmul.mubr.f32.gmra.mxu0 %v2398
      %v2474 = vpop.f32.mrf.mxu0
      %v2475 = vadd.f32 0.0, %v2474
      %v2476 = vpop.f32.mrf.mxu0
      %2477 = vdwg.mxu0
      %v2479 = vsel %vm352, %v712, 0
      %v2482 = vsel %vm352, %v717, 0
      %v2485 = vsel %vm352, %v1530, 0
      %2487 = vmatprep.subr.mxu0 0.0
      %2488 = vmatpush1.xpose.msra.mxu0 0.0
      %2489 = vmatprep.subr.mxu0 0.0
      %2490 = vmatpush1.xpose.msra.mxu0 0.0
      %2491 = vmatprep.subr.mxu0 0.0
      %2492 = vmatpush1.xpose.msra.mxu0 0.0
      %2493 = vmatprep.subr.mxu0 0.0
      %2494 = vmatpush1.xpose.msra.mxu0 0.0
      %2495 = vmatprep.subr.mxu0 0.0
      %2496 = vmatpush1.xpose.msra.mxu0 0.0
      %2497 = vmatprep.subr.mxu0 0.0
      %2498 = vmatpush1.xpose.msra.mxu0 0.0
      %2499 = vmatprep.subr.mxu0 0.0
      %2500 = vmatpush1.xpose.msra.mxu0 0.0
      %2501 = vmatprep.subr.mxu0 0.0
      %2502 = vmatpush1.xpose.msra.mxu0 0.0
      %2503 = vmatprep.subr.mxu0 0.0
      %2504 = vmatpush1.xpose.msra.mxu0 0.0
      %2505 = vmatprep.subr.mxu0 0.0
      %2506 = vmatpush1.xpose.msra.mxu0 0.0
      %2507 = vmatprep.subr.mxu0 0.0
      %2508 = vmatpush1.xpose.msra.mxu0 0.0
      %2509 = vmatprep.subr.mxu0 0.0
      %2510 = vmatpush1.xpose.msra.mxu0 0.0
      %2511 = vmatprep.subr.mxu0 0.0
      %2512 = vmatpush1.xpose.msra.mxu0 0.0
      %2513 = vmatprep.subr.mxu0 0.0
      %2514 = vmatpush1.xpose.msra.mxu0 0.0
      %2515 = vmatprep.subr.mxu0 0.0
      %2516 = vmatpush1.xpose.msra.mxu0 0.0
      %2517 = vmatprep.subr.mxu0 0.0
      %2518 = vmatpush1.xpose.msra.mxu0 %v2485
      %2519 = vmatprep.subr.mxu0 0.0
      %2520 = vmatpush2.xpose.msra.mxu0 0.0
      %2521 = vmatprep.subr.mxu0 0.0
      %2522 = vmatpush2.xpose.msra.mxu0 0.0
      %2523 = vmatprep.subr.mxu0 0.0
      %2524 = vmatpush2.xpose.msra.mxu0 0.0
      %2525 = vmatprep.subr.mxu0 0.0
      %2526 = vmatpush2.xpose.msra.mxu0 0.0
      %2527 = vmatprep.subr.mxu0 0.0
      %2528 = vmatpush2.xpose.msra.mxu0 0.0
      %2529 = vmatprep.subr.mxu0 0.0
      %2530 = vmatpush2.xpose.msra.mxu0 0.0
      %2531 = vmatprep.subr.mxu0 0.0
      %2532 = vmatpush2.xpose.msra.mxu0 0.0
      %2533 = vmatprep.subr.mxu0 0.0
      %2534 = vmatpush2.xpose.msra.mxu0 0.0
      %2535 = vmatprep.subr.mxu0 0.0
      %2536 = vmatpush2.xpose.msra.mxu0 0.0
      %2537 = vmatprep.subr.mxu0 0.0
      %2538 = vmatpush2.xpose.msra.mxu0 0.0
      %2539 = vmatprep.subr.mxu0 0.0
      %2540 = vmatpush2.xpose.msra.mxu0 0.0
      %2541 = vmatprep.subr.mxu0 0.0
      %2542 = vmatpush2.xpose.msra.mxu0 0.0
      %2543 = vmatprep.subr.mxu0 0.0
      %2544 = vmatpush2.xpose.msra.mxu0 0.0
      %2545 = vmatprep.subr.mxu0 0.0
      %2546 = vmatpush2.xpose.msra.mxu0 0.0
      %2547 = vmatprep.subr.mxu0 0.0
      %2548 = vmatpush2.xpose.msra.mxu0 0.0
      %2549 = vmatprep.subr.mxu0 0.0
      %2550 = vmatpush2.xpose.msra.mxu0 0.0
      %2551 = vmatprep.mubr.f32.mxu0 0.0
      %2552 = vmatmul.mubr.f32.gmra.mxu0 %v2479
      %v2553 = vpop.f32.mrf.mxu0
      %v2554 = vadd.f32 0.0, %v2553
      %v2555 = vpop.f32.mrf.mxu0
      %2556 = vmatprep.mubr.f32.mxu0 0.0
      %2557 = vmatmul.mubr.f32.gmra.mxu0 %v2482
      %v2558 = vpop.f32.mrf.mxu0
      %v2559 = vadd.f32 0.0, %v2558
      %v2560 = vpop.f32.mrf.mxu0
      %2561 = vdwg.mxu0
      %v2563 = vsel %vm352, %v722, 0
      %v2566 = vsel %vm352, %v727, 0
      %v2569 = vsel %vm352, %v1535, 0
      %2571 = vmatprep.subr.mxu0 0.0
      %2572 = vmatpush1.xpose.msra.mxu0 0.0
      %2573 = vmatprep.subr.mxu0 0.0
      %2574 = vmatpush1.xpose.msra.mxu0 0.0
      %2575 = vmatprep.subr.mxu0 0.0
      %2576 = vmatpush1.xpose.msra.mxu0 0.0
      %2577 = vmatprep.subr.mxu0 0.0
      %2578 = vmatpush1.xpose.msra.mxu0 0.0
      %2579 = vmatprep.subr.mxu0 0.0
      %2580 = vmatpush1.xpose.msra.mxu0 0.0
      %2581 = vmatprep.subr.mxu0 0.0
      %2582 = vmatpush1.xpose.msra.mxu0 0.0
      %2583 = vmatprep.subr.mxu0 0.0
      %2584 = vmatpush1.xpose.msra.mxu0 0.0
      %2585 = vmatprep.subr.mxu0 0.0
      %2586 = vmatpush1.xpose.msra.mxu0 0.0
      %2587 = vmatprep.subr.mxu0 0.0
      %2588 = vmatpush1.xpose.msra.mxu0 0.0
      %2589 = vmatprep.subr.mxu0 0.0
      %2590 = vmatpush1.xpose.msra.mxu0 0.0
      %2591 = vmatprep.subr.mxu0 0.0
      %2592 = vmatpush1.xpose.msra.mxu0 0.0
      %2593 = vmatprep.subr.mxu0 0.0
      %2594 = vmatpush1.xpose.msra.mxu0 0.0
      %2595 = vmatprep.subr.mxu0 0.0
      %2596 = vmatpush1.xpose.msra.mxu0 0.0
      %2597 = vmatprep.subr.mxu0 0.0
      %2598 = vmatpush1.xpose.msra.mxu0 0.0
      %2599 = vmatprep.subr.mxu0 0.0
      %2600 = vmatpush1.xpose.msra.mxu0 0.0
      %2601 = vmatprep.subr.mxu0 0.0
      %2602 = vmatpush1.xpose.msra.mxu0 %v2569
      %2603 = vmatprep.subr.mxu0 0.0
      %2604 = vmatpush2.xpose.msra.mxu0 0.0
      %2605 = vmatprep.subr.mxu0 0.0
      %2606 = vmatpush2.xpose.msra.mxu0 0.0
      %2607 = vmatprep.subr.mxu0 0.0
      %2608 = vmatpush2.xpose.msra.mxu0 0.0
      %2609 = vmatprep.subr.mxu0 0.0
      %2610 = vmatpush2.xpose.msra.mxu0 0.0
      %2611 = vmatprep.subr.mxu0 0.0
      %2612 = vmatpush2.xpose.msra.mxu0 0.0
      %2613 = vmatprep.subr.mxu0 0.0
      %2614 = vmatpush2.xpose.msra.mxu0 0.0
      %2615 = vmatprep.subr.mxu0 0.0
      %2616 = vmatpush2.xpose.msra.mxu0 0.0
      %2617 = vmatprep.subr.mxu0 0.0
      %2618 = vmatpush2.xpose.msra.mxu0 0.0
      %2619 = vmatprep.subr.mxu0 0.0
      %2620 = vmatpush2.xpose.msra.mxu0 0.0
      %2621 = vmatprep.subr.mxu0 0.0
      %2622 = vmatpush2.xpose.msra.mxu0 0.0
      %2623 = vmatprep.subr.mxu0 0.0
      %2624 = vmatpush2.xpose.msra.mxu0 0.0
      %2625 = vmatprep.subr.mxu0 0.0
      %2626 = vmatpush2.xpose.msra.mxu0 0.0
      %2627 = vmatprep.subr.mxu0 0.0
      %2628 = vmatpush2.xpose.msra.mxu0 0.0
      %2629 = vmatprep.subr.mxu0 0.0
      %2630 = vmatpush2.xpose.msra.mxu0 0.0
      %2631 = vmatprep.subr.mxu0 0.0
      %2632 = vmatpush2.xpose.msra.mxu0 0.0
      %2633 = vmatprep.subr.mxu0 0.0
      %2634 = vmatpush2.xpose.msra.mxu0 0.0
      %2635 = vmatprep.mubr.f32.mxu0 0.0
      %2636 = vmatmul.mubr.f32.gmra.mxu0 %v2563
      %v2637 = vpop.f32.mrf.mxu0
      %v2638 = vadd.f32 0.0, %v2637
      %v2639 = vpop.f32.mrf.mxu0
      %2640 = vmatprep.mubr.f32.mxu0 0.0
      %2641 = vmatmul.mubr.f32.gmra.mxu0 %v2566
      %v2642 = vpop.f32.mrf.mxu0
      %v2643 = vadd.f32 0.0, %v2642
      %v2644 = vpop.f32.mrf.mxu0
      %2645 = vdwg.mxu0
      %v2647 = vsel %vm352, %v732, 0
      %v2650 = vsel %vm352, %v737, 0
      %v2653 = vsel %vm352, %v1540, 0
      %2655 = vmatprep.subr.mxu0 0.0
      %2656 = vmatpush1.xpose.msra.mxu0 0.0
      %2657 = vmatprep.subr.mxu0 0.0
      %2658 = vmatpush1.xpose.msra.mxu0 0.0
      %2659 = vmatprep.subr.mxu0 0.0
      %2660 = vmatpush1.xpose.msra.mxu0 0.0
      %2661 = vmatprep.subr.mxu0 0.0
      %2662 = vmatpush1.xpose.msra.mxu0 0.0
      %2663 = vmatprep.subr.mxu0 0.0
      %2664 = vmatpush1.xpose.msra.mxu0 0.0
      %2665 = vmatprep.subr.mxu0 0.0
      %2666 = vmatpush1.xpose.msra.mxu0 0.0
      %2667 = vmatprep.subr.mxu0 0.0
      %2668 = vmatpush1.xpose.msra.mxu0 0.0
      %2669 = vmatprep.subr.mxu0 0.0
      %2670 = vmatpush1.xpose.msra.mxu0 0.0
      %2671 = vmatprep.subr.mxu0 0.0
      %2672 = vmatpush1.xpose.msra.mxu0 0.0
      %2673 = vmatprep.subr.mxu0 0.0
      %2674 = vmatpush1.xpose.msra.mxu0 0.0
      %2675 = vmatprep.subr.mxu0 0.0
      %2676 = vmatpush1.xpose.msra.mxu0 0.0
      %2677 = vmatprep.subr.mxu0 0.0
      %2678 = vmatpush1.xpose.msra.mxu0 0.0
      %2679 = vmatprep.subr.mxu0 0.0
      %2680 = vmatpush1.xpose.msra.mxu0 0.0
      %2681 = vmatprep.subr.mxu0 0.0
      %2682 = vmatpush1.xpose.msra.mxu0 0.0
      %2683 = vmatprep.subr.mxu0 0.0
      %2684 = vmatpush1.xpose.msra.mxu0 0.0
      %2685 = vmatprep.subr.mxu0 0.0
      %2686 = vmatpush1.xpose.msra.mxu0 %v2653
      %2687 = vmatprep.subr.mxu0 0.0
      %2688 = vmatpush2.xpose.msra.mxu0 0.0
      %2689 = vmatprep.subr.mxu0 0.0
      %2690 = vmatpush2.xpose.msra.mxu0 0.0
      %2691 = vmatprep.subr.mxu0 0.0
      %2692 = vmatpush2.xpose.msra.mxu0 0.0
      %2693 = vmatprep.subr.mxu0 0.0
      %2694 = vmatpush2.xpose.msra.mxu0 0.0
      %2695 = vmatprep.subr.mxu0 0.0
      %2696 = vmatpush2.xpose.msra.mxu0 0.0
      %2697 = vmatprep.subr.mxu0 0.0
      %2698 = vmatpush2.xpose.msra.mxu0 0.0
      %2699 = vmatprep.subr.mxu0 0.0
      %2700 = vmatpush2.xpose.msra.mxu0 0.0
      %2701 = vmatprep.subr.mxu0 0.0
      %2702 = vmatpush2.xpose.msra.mxu0 0.0
      %2703 = vmatprep.subr.mxu0 0.0
      %2704 = vmatpush2.xpose.msra.mxu0 0.0
      %2705 = vmatprep.subr.mxu0 0.0
      %2706 = vmatpush2.xpose.msra.mxu0 0.0
      %2707 = vmatprep.subr.mxu0 0.0
      %2708 = vmatpush2.xpose.msra.mxu0 0.0
      %2709 = vmatprep.subr.mxu0 0.0
      %2710 = vmatpush2.xpose.msra.mxu0 0.0
      %2711 = vmatprep.subr.mxu0 0.0
      %2712 = vmatpush2.xpose.msra.mxu0 0.0
      %2713 = vmatprep.subr.mxu0 0.0
      %2714 = vmatpush2.xpose.msra.mxu0 0.0
      %2715 = vmatprep.subr.mxu0 0.0
      %2716 = vmatpush2.xpose.msra.mxu0 0.0
      %2717 = vmatprep.subr.mxu0 0.0
      %2718 = vmatpush2.xpose.msra.mxu0 0.0
      %2719 = vmatprep.mubr.f32.mxu0 0.0
      %2720 = vmatmul.mubr.f32.gmra.mxu0 %v2647
      %v2721 = vpop.f32.mrf.mxu0
      %v2722 = vadd.f32 0.0, %v2721
      %v2723 = vpop.f32.mrf.mxu0
      %2724 = vmatprep.mubr.f32.mxu0 0.0
      %2725 = vmatmul.mubr.f32.gmra.mxu0 %v2650
      %v2726 = vpop.f32.mrf.mxu0
      %v2727 = vadd.f32 0.0, %v2726
      %v2728 = vpop.f32.mrf.mxu0
      %2729 = vdwg.mxu0
      %v2731 = vsel %vm352, %v742, 0
      %v2734 = vsel %vm352, %v747, 0
      %v2737 = vsel %vm352, %v1545, 0
      %2739 = vmatprep.subr.mxu0 0.0
      %2740 = vmatpush1.xpose.msra.mxu0 0.0
      %2741 = vmatprep.subr.mxu0 0.0
      %2742 = vmatpush1.xpose.msra.mxu0 0.0
      %2743 = vmatprep.subr.mxu0 0.0
      %2744 = vmatpush1.xpose.msra.mxu0 0.0
      %2745 = vmatprep.subr.mxu0 0.0
      %2746 = vmatpush1.xpose.msra.mxu0 0.0
      %2747 = vmatprep.subr.mxu0 0.0
      %2748 = vmatpush1.xpose.msra.mxu0 0.0
      %2749 = vmatprep.subr.mxu0 0.0
      %2750 = vmatpush1.xpose.msra.mxu0 0.0
      %2751 = vmatprep.subr.mxu0 0.0
      %2752 = vmatpush1.xpose.msra.mxu0 0.0
      %2753 = vmatprep.subr.mxu0 0.0
      %2754 = vmatpush1.xpose.msra.mxu0 0.0
      %2755 = vmatprep.subr.mxu0 0.0
      %2756 = vmatpush1.xpose.msra.mxu0 0.0
      %2757 = vmatprep.subr.mxu0 0.0
      %2758 = vmatpush1.xpose.msra.mxu0 0.0
      %2759 = vmatprep.subr.mxu0 0.0
      %2760 = vmatpush1.xpose.msra.mxu0 0.0
      %2761 = vmatprep.subr.mxu0 0.0
      %2762 = vmatpush1.xpose.msra.mxu0 0.0
      %2763 = vmatprep.subr.mxu0 0.0
      %2764 = vmatpush1.xpose.msra.mxu0 0.0
      %2765 = vmatprep.subr.mxu0 0.0
      %2766 = vmatpush1.xpose.msra.mxu0 0.0
      %2767 = vmatprep.subr.mxu0 0.0
      %2768 = vmatpush1.xpose.msra.mxu0 0.0
      %2769 = vmatprep.subr.mxu0 0.0
      %2770 = vmatpush1.xpose.msra.mxu0 %v2737
      %2771 = vmatprep.subr.mxu0 0.0
      %2772 = vmatpush2.xpose.msra.mxu0 0.0
      %2773 = vmatprep.subr.mxu0 0.0
      %2774 = vmatpush2.xpose.msra.mxu0 0.0
      %2775 = vmatprep.subr.mxu0 0.0
      %2776 = vmatpush2.xpose.msra.mxu0 0.0
      %2777 = vmatprep.subr.mxu0 0.0
      %2778 = vmatpush2.xpose.msra.mxu0 0.0
      %2779 = vmatprep.subr.mxu0 0.0
      %2780 = vmatpush2.xpose.msra.mxu0 0.0
      %2781 = vmatprep.subr.mxu0 0.0
      %2782 = vmatpush2.xpose.msra.mxu0 0.0
      %2783 = vmatprep.subr.mxu0 0.0
      %2784 = vmatpush2.xpose.msra.mxu0 0.0
      %2785 = vmatprep.subr.mxu0 0.0
      %2786 = vmatpush2.xpose.msra.mxu0 0.0
      %2787 = vmatprep.subr.mxu0 0.0
      %2788 = vmatpush2.xpose.msra.mxu0 0.0
      %2789 = vmatprep.subr.mxu0 0.0
      %2790 = vmatpush2.xpose.msra.mxu0 0.0
      %2791 = vmatprep.subr.mxu0 0.0
      %2792 = vmatpush2.xpose.msra.mxu0 0.0
      %2793 = vmatprep.subr.mxu0 0.0
      %2794 = vmatpush2.xpose.msra.mxu0 0.0
      %2795 = vmatprep.subr.mxu0 0.0
      %2796 = vmatpush2.xpose.msra.mxu0 0.0
      %2797 = vmatprep.subr.mxu0 0.0
      %2798 = vmatpush2.xpose.msra.mxu0 0.0
      %2799 = vmatprep.subr.mxu0 0.0
      %2800 = vmatpush2.xpose.msra.mxu0 0.0
      %2801 = vmatprep.subr.mxu0 0.0
      %2802 = vmatpush2.xpose.msra.mxu0 0.0
      %2803 = vmatprep.mubr.f32.mxu0 0.0
      %2804 = vmatmul.mubr.f32.gmra.mxu0 %v2731
      %v2805 = vpop.f32.mrf.mxu0
      %v2806 = vadd.f32 0.0, %v2805
      %v2807 = vpop.f32.mrf.mxu0
      %2808 = vmatprep.mubr.f32.mxu0 0.0
      %2809 = vmatmul.mubr.f32.gmra.mxu0 %v2734
      %v2810 = vpop.f32.mrf.mxu0
      %v2811 = vadd.f32 0.0, %v2810
      %v2812 = vpop.f32.mrf.mxu0
      %2813 = vdwg.mxu0
      %v2815 = vsel %vm352, %v752, 0
      %v2818 = vsel %vm352, %v757, 0
      %v2821 = vsel %vm352, %v1550, 0
      %2823 = vmatprep.subr.mxu0 0.0
      %2824 = vmatpush1.xpose.msra.mxu0 0.0
      %2825 = vmatprep.subr.mxu0 0.0
      %2826 = vmatpush1.xpose.msra.mxu0 0.0
      %2827 = vmatprep.subr.mxu0 0.0
      %2828 = vmatpush1.xpose.msra.mxu0 0.0
      %2829 = vmatprep.subr.mxu0 0.0
      %2830 = vmatpush1.xpose.msra.mxu0 0.0
      %2831 = vmatprep.subr.mxu0 0.0
      %2832 = vmatpush1.xpose.msra.mxu0 0.0
      %2833 = vmatprep.subr.mxu0 0.0
      %2834 = vmatpush1.xpose.msra.mxu0 0.0
      %2835 = vmatprep.subr.mxu0 0.0
      %2836 = vmatpush1.xpose.msra.mxu0 0.0
      %2837 = vmatprep.subr.mxu0 0.0
      %2838 = vmatpush1.xpose.msra.mxu0 0.0
      %2839 = vmatprep.subr.mxu0 0.0
      %2840 = vmatpush1.xpose.msra.mxu0 0.0
      %2841 = vmatprep.subr.mxu0 0.0
      %2842 = vmatpush1.xpose.msra.mxu0 0.0
      %2843 = vmatprep.subr.mxu0 0.0
      %2844 = vmatpush1.xpose.msra.mxu0 0.0
      %2845 = vmatprep.subr.mxu0 0.0
      %2846 = vmatpush1.xpose.msra.mxu0 0.0
      %2847 = vmatprep.subr.mxu0 0.0
      %2848 = vmatpush1.xpose.msra.mxu0 0.0
      %2849 = vmatprep.subr.mxu0 0.0
      %2850 = vmatpush1.xpose.msra.mxu0 0.0
      %2851 = vmatprep.subr.mxu0 0.0
      %2852 = vmatpush1.xpose.msra.mxu0 0.0
      %2853 = vmatprep.subr.mxu0 0.0
      %2854 = vmatpush1.xpose.msra.mxu0 %v2821
      %2855 = vmatprep.subr.mxu0 0.0
      %2856 = vmatpush2.xpose.msra.mxu0 0.0
      %2857 = vmatprep.subr.mxu0 0.0
      %2858 = vmatpush2.xpose.msra.mxu0 0.0
      %2859 = vmatprep.subr.mxu0 0.0
      %2860 = vmatpush2.xpose.msra.mxu0 0.0
      %2861 = vmatprep.subr.mxu0 0.0
      %2862 = vmatpush2.xpose.msra.mxu0 0.0
      %2863 = vmatprep.subr.mxu0 0.0
      %2864 = vmatpush2.xpose.msra.mxu0 0.0
      %2865 = vmatprep.subr.mxu0 0.0
      %2866 = vmatpush2.xpose.msra.mxu0 0.0
      %2867 = vmatprep.subr.mxu0 0.0
      %2868 = vmatpush2.xpose.msra.mxu0 0.0
      %2869 = vmatprep.subr.mxu0 0.0
      %2870 = vmatpush2.xpose.msra.mxu0 0.0
      %2871 = vmatprep.subr.mxu0 0.0
      %2872 = vmatpush2.xpose.msra.mxu0 0.0
      %2873 = vmatprep.subr.mxu0 0.0
      %2874 = vmatpush2.xpose.msra.mxu0 0.0
      %2875 = vmatprep.subr.mxu0 0.0
      %2876 = vmatpush2.xpose.msra.mxu0 0.0
      %2877 = vmatprep.subr.mxu0 0.0
      %2878 = vmatpush2.xpose.msra.mxu0 0.0
      %2879 = vmatprep.subr.mxu0 0.0
      %2880 = vmatpush2.xpose.msra.mxu0 0.0
      %2881 = vmatprep.subr.mxu0 0.0
      %2882 = vmatpush2.xpose.msra.mxu0 0.0
      %2883 = vmatprep.subr.mxu0 0.0
      %2884 = vmatpush2.xpose.msra.mxu0 0.0
      %2885 = vmatprep.subr.mxu0 0.0
      %2886 = vmatpush2.xpose.msra.mxu0 0.0
      %2887 = vmatprep.mubr.f32.mxu0 0.0
      %2888 = vmatmul.mubr.f32.gmra.mxu0 %v2815
      %v2889 = vpop.f32.mrf.mxu0
      %v2890 = vadd.f32 0.0, %v2889
      %v2891 = vpop.f32.mrf.mxu0
      %2892 = vmatprep.mubr.f32.mxu0 0.0
      %2893 = vmatmul.mubr.f32.gmra.mxu0 %v2818
      %v2894 = vpop.f32.mrf.mxu0
      %v2895 = vadd.f32 0.0, %v2894
      %v2896 = vpop.f32.mrf.mxu0
      %2897 = vdwg.mxu0
      %v2899 = vsel %vm352, %v762, 0
      %v2902 = vsel %vm352, %v767, 0
      %v2905 = vsel %vm352, %v1555, 0
      %2907 = vmatprep.subr.mxu0 0.0
      %2908 = vmatpush1.xpose.msra.mxu0 0.0
      %2909 = vmatprep.subr.mxu0 0.0
      %2910 = vmatpush1.xpose.msra.mxu0 0.0
      %2911 = vmatprep.subr.mxu0 0.0
      %2912 = vmatpush1.xpose.msra.mxu0 0.0
      %2913 = vmatprep.subr.mxu0 0.0
      %2914 = vmatpush1.xpose.msra.mxu0 0.0
      %2915 = vmatprep.subr.mxu0 0.0
      %2916 = vmatpush1.xpose.msra.mxu0 0.0
      %2917 = vmatprep.subr.mxu0 0.0
      %2918 = vmatpush1.xpose.msra.mxu0 0.0
      %2919 = vmatprep.subr.mxu0 0.0
      %2920 = vmatpush1.xpose.msra.mxu0 0.0
      %2921 = vmatprep.subr.mxu0 0.0
      %2922 = vmatpush1.xpose.msra.mxu0 0.0
      %2923 = vmatprep.subr.mxu0 0.0
      %2924 = vmatpush1.xpose.msra.mxu0 0.0
      %2925 = vmatprep.subr.mxu0 0.0
      %2926 = vmatpush1.xpose.msra.mxu0 0.0
      %2927 = vmatprep.subr.mxu0 0.0
      %2928 = vmatpush1.xpose.msra.mxu0 0.0
      %2929 = vmatprep.subr.mxu0 0.0
      %2930 = vmatpush1.xpose.msra.mxu0 0.0
      %2931 = vmatprep.subr.mxu0 0.0
      %2932 = vmatpush1.xpose.msra.mxu0 0.0
      %2933 = vmatprep.subr.mxu0 0.0
      %2934 = vmatpush1.xpose.msra.mxu0 0.0
      %2935 = vmatprep.subr.mxu0 0.0
      %2936 = vmatpush1.xpose.msra.mxu0 0.0
      %2937 = vmatprep.subr.mxu0 0.0
      %2938 = vmatpush1.xpose.msra.mxu0 %v2905
      %2939 = vmatprep.subr.mxu0 0.0
      %2940 = vmatpush2.xpose.msra.mxu0 0.0
      %2941 = vmatprep.subr.mxu0 0.0
      %2942 = vmatpush2.xpose.msra.mxu0 0.0
      %2943 = vmatprep.subr.mxu0 0.0
      %2944 = vmatpush2.xpose.msra.mxu0 0.0
      %2945 = vmatprep.subr.mxu0 0.0
      %2946 = vmatpush2.xpose.msra.mxu0 0.0
      %2947 = vmatprep.subr.mxu0 0.0
      %2948 = vmatpush2.xpose.msra.mxu0 0.0
      %2949 = vmatprep.subr.mxu0 0.0
      %2950 = vmatpush2.xpose.msra.mxu0 0.0
      %2951 = vmatprep.subr.mxu0 0.0
      %2952 = vmatpush2.xpose.msra.mxu0 0.0
      %2953 = vmatprep.subr.mxu0 0.0
      %2954 = vmatpush2.xpose.msra.mxu0 0.0
      %2955 = vmatprep.subr.mxu0 0.0
      %2956 = vmatpush2.xpose.msra.mxu0 0.0
      %2957 = vmatprep.subr.mxu0 0.0
      %2958 = vmatpush2.xpose.msra.mxu0 0.0
      %2959 = vmatprep.subr.mxu0 0.0
      %2960 = vmatpush2.xpose.msra.mxu0 0.0
      %2961 = vmatprep.subr.mxu0 0.0
      %2962 = vmatpush2.xpose.msra.mxu0 0.0
      %2963 = vmatprep.subr.mxu0 0.0
      %2964 = vmatpush2.xpose.msra.mxu0 0.0
      %2965 = vmatprep.subr.mxu0 0.0
      %2966 = vmatpush2.xpose.msra.mxu0 0.0
      %2967 = vmatprep.subr.mxu0 0.0
      %2968 = vmatpush2.xpose.msra.mxu0 0.0
      %2969 = vmatprep.subr.mxu0 0.0
      %2970 = vmatpush2.xpose.msra.mxu0 0.0
      %2971 = vmatprep.mubr.f32.mxu0 0.0
      %2972 = vmatmul.mubr.f32.gmra.mxu0 %v2899
      %v2973 = vpop.f32.mrf.mxu0
      %v2974 = vadd.f32 0.0, %v2973
      %v2975 = vpop.f32.mrf.mxu0
      %2976 = vmatprep.mubr.f32.mxu0 0.0
      %2977 = vmatmul.mubr.f32.gmra.mxu0 %v2902
      %v2978 = vpop.f32.mrf.mxu0
      %v2979 = vadd.f32 0.0, %v2978
      %v2980 = vpop.f32.mrf.mxu0
      %2981 = vdwg.mxu0
      %v2983 = vsel %vm352, %v772, 0
      %v2986 = vsel %vm352, %v777, 0
      %v2989 = vsel %vm352, %v1560, 0
      %2991 = vmatprep.subr.mxu0 0.0
      %2992 = vmatpush1.xpose.msra.mxu0 0.0
      %2993 = vmatprep.subr.mxu0 0.0
      %2994 = vmatpush1.xpose.msra.mxu0 0.0
      %2995 = vmatprep.subr.mxu0 0.0
      %2996 = vmatpush1.xpose.msra.mxu0 0.0
      %2997 = vmatprep.subr.mxu0 0.0
      %2998 = vmatpush1.xpose.msra.mxu0 0.0
      %2999 = vmatprep.subr.mxu0 0.0
      %3000 = vmatpush1.xpose.msra.mxu0 0.0
      %3001 = vmatprep.subr.mxu0 0.0
      %3002 = vmatpush1.xpose.msra.mxu0 0.0
      %3003 = vmatprep.subr.mxu0 0.0
      %3004 = vmatpush1.xpose.msra.mxu0 0.0
      %3005 = vmatprep.subr.mxu0 0.0
      %3006 = vmatpush1.xpose.msra.mxu0 0.0
      %3007 = vmatprep.subr.mxu0 0.0
      %3008 = vmatpush1.xpose.msra.mxu0 0.0
      %3009 = vmatprep.subr.mxu0 0.0
      %3010 = vmatpush1.xpose.msra.mxu0 0.0
      %3011 = vmatprep.subr.mxu0 0.0
      %3012 = vmatpush1.xpose.msra.mxu0 0.0
      %3013 = vmatprep.subr.mxu0 0.0
      %3014 = vmatpush1.xpose.msra.mxu0 0.0
      %3015 = vmatprep.subr.mxu0 0.0
      %3016 = vmatpush1.xpose.msra.mxu0 0.0
      %3017 = vmatprep.subr.mxu0 0.0
      %3018 = vmatpush1.xpose.msra.mxu0 0.0
      %3019 = vmatprep.subr.mxu0 0.0
      %3020 = vmatpush1.xpose.msra.mxu0 0.0
      %3021 = vmatprep.subr.mxu0 0.0
      %3022 = vmatpush1.xpose.msra.mxu0 %v2989
      %3023 = vmatprep.subr.mxu0 0.0
      %3024 = vmatpush2.xpose.msra.mxu0 0.0
      %3025 = vmatprep.subr.mxu0 0.0
      %3026 = vmatpush2.xpose.msra.mxu0 0.0
      %3027 = vmatprep.subr.mxu0 0.0
      %3028 = vmatpush2.xpose.msra.mxu0 0.0
      %3029 = vmatprep.subr.mxu0 0.0
      %3030 = vmatpush2.xpose.msra.mxu0 0.0
      %3031 = vmatprep.subr.mxu0 0.0
      %3032 = vmatpush2.xpose.msra.mxu0 0.0
      %3033 = vmatprep.subr.mxu0 0.0
      %3034 = vmatpush2.xpose.msra.mxu0 0.0
      %3035 = vmatprep.subr.mxu0 0.0
      %3036 = vmatpush2.xpose.msra.mxu0 0.0
      %3037 = vmatprep.subr.mxu0 0.0
      %3038 = vmatpush2.xpose.msra.mxu0 0.0
      %3039 = vmatprep.subr.mxu0 0.0
      %3040 = vmatpush2.xpose.msra.mxu0 0.0
      %3041 = vmatprep.subr.mxu0 0.0
      %3042 = vmatpush2.xpose.msra.mxu0 0.0
      %3043 = vmatprep.subr.mxu0 0.0
      %3044 = vmatpush2.xpose.msra.mxu0 0.0
      %3045 = vmatprep.subr.mxu0 0.0
      %3046 = vmatpush2.xpose.msra.mxu0 0.0
      %3047 = vmatprep.subr.mxu0 0.0
      %3048 = vmatpush2.xpose.msra.mxu0 0.0
      %3049 = vmatprep.subr.mxu0 0.0
      %3050 = vmatpush2.xpose.msra.mxu0 0.0
      %3051 = vmatprep.subr.mxu0 0.0
      %3052 = vmatpush2.xpose.msra.mxu0 0.0
      %3053 = vmatprep.subr.mxu0 0.0
      %3054 = vmatpush2.xpose.msra.mxu0 0.0
      %3055 = vmatprep.mubr.f32.mxu0 0.0
      %3056 = vmatmul.mubr.f32.gmra.mxu0 %v2983
      %v3057 = vpop.f32.mrf.mxu0
      %v3058 = vadd.f32 0.0, %v3057
      %v3059 = vpop.f32.mrf.mxu0
      %3060 = vmatprep.mubr.f32.mxu0 0.0
      %3061 = vmatmul.mubr.f32.gmra.mxu0 %v2986
      %v3062 = vpop.f32.mrf.mxu0
      %v3063 = vadd.f32 0.0, %v3062
      %v3064 = vpop.f32.mrf.mxu0
      %3065 = vdwg.mxu0
      %v3067 = vsel %vm352, %v782, 0
      %v3070 = vsel %vm352, %v787, 0
      %v3073 = vsel %vm352, %v1565, 0
      %3075 = vmatprep.subr.mxu0 0.0
      %3076 = vmatpush1.xpose.msra.mxu0 0.0
      %3077 = vmatprep.subr.mxu0 0.0
      %3078 = vmatpush1.xpose.msra.mxu0 0.0
      %3079 = vmatprep.subr.mxu0 0.0
      %3080 = vmatpush1.xpose.msra.mxu0 0.0
      %3081 = vmatprep.subr.mxu0 0.0
      %3082 = vmatpush1.xpose.msra.mxu0 0.0
      %3083 = vmatprep.subr.mxu0 0.0
      %3084 = vmatpush1.xpose.msra.mxu0 0.0
      %3085 = vmatprep.subr.mxu0 0.0
      %3086 = vmatpush1.xpose.msra.mxu0 0.0
      %3087 = vmatprep.subr.mxu0 0.0
      %3088 = vmatpush1.xpose.msra.mxu0 0.0
      %3089 = vmatprep.subr.mxu0 0.0
      %3090 = vmatpush1.xpose.msra.mxu0 0.0
      %3091 = vmatprep.subr.mxu0 0.0
      %3092 = vmatpush1.xpose.msra.mxu0 0.0
      %3093 = vmatprep.subr.mxu0 0.0
      %3094 = vmatpush1.xpose.msra.mxu0 0.0
      %3095 = vmatprep.subr.mxu0 0.0
      %3096 = vmatpush1.xpose.msra.mxu0 0.0
      %3097 = vmatprep.subr.mxu0 0.0
      %3098 = vmatpush1.xpose.msra.mxu0 0.0
      %3099 = vmatprep.subr.mxu0 0.0
      %3100 = vmatpush1.xpose.msra.mxu0 0.0
      %3101 = vmatprep.subr.mxu0 0.0
      %3102 = vmatpush1.xpose.msra.mxu0 0.0
      %3103 = vmatprep.subr.mxu0 0.0
      %3104 = vmatpush1.xpose.msra.mxu0 0.0
      %3105 = vmatprep.subr.mxu0 0.0
      %3106 = vmatpush1.xpose.msra.mxu0 %v3073
      %3107 = vmatprep.subr.mxu0 0.0
      %3108 = vmatpush2.xpose.msra.mxu0 0.0
      %3109 = vmatprep.subr.mxu0 0.0
      %3110 = vmatpush2.xpose.msra.mxu0 0.0
      %3111 = vmatprep.subr.mxu0 0.0
      %3112 = vmatpush2.xpose.msra.mxu0 0.0
      %3113 = vmatprep.subr.mxu0 0.0
      %3114 = vmatpush2.xpose.msra.mxu0 0.0
      %3115 = vmatprep.subr.mxu0 0.0
      %3116 = vmatpush2.xpose.msra.mxu0 0.0
      %3117 = vmatprep.subr.mxu0 0.0
      %3118 = vmatpush2.xpose.msra.mxu0 0.0
      %3119 = vmatprep.subr.mxu0 0.0
      %3120 = vmatpush2.xpose.msra.mxu0 0.0
      %3121 = vmatprep.subr.mxu0 0.0
      %3122 = vmatpush2.xpose.msra.mxu0 0.0
      %3123 = vmatprep.subr.mxu0 0.0
      %3124 = vmatpush2.xpose.msra.mxu0 0.0
      %3125 = vmatprep.subr.mxu0 0.0
      %3126 = vmatpush2.xpose.msra.mxu0 0.0
      %3127 = vmatprep.subr.mxu0 0.0
      %3128 = vmatpush2.xpose.msra.mxu0 0.0
      %3129 = vmatprep.subr.mxu0 0.0
      %3130 = vmatpush2.xpose.msra.mxu0 0.0
      %3131 = vmatprep.subr.mxu0 0.0
      %3132 = vmatpush2.xpose.msra.mxu0 0.0
      %3133 = vmatprep.subr.mxu0 0.0
      %3134 = vmatpush2.xpose.msra.mxu0 0.0
      %3135 = vmatprep.subr.mxu0 0.0
      %3136 = vmatpush2.xpose.msra.mxu0 0.0
      %3137 = vmatprep.subr.mxu0 0.0
      %3138 = vmatpush2.xpose.msra.mxu0 0.0
      %3139 = vmatprep.mubr.f32.mxu0 0.0
      %3140 = vmatmul.mubr.f32.gmra.mxu0 %v3067
      %v3141 = vpop.f32.mrf.mxu0
      %v3142 = vadd.f32 0.0, %v3141
      %v3143 = vpop.f32.mrf.mxu0
      %3144 = vmatprep.mubr.f32.mxu0 0.0
      %3145 = vmatmul.mubr.f32.gmra.mxu0 %v3070
      %v3146 = vpop.f32.mrf.mxu0
      %v3147 = vadd.f32 0.0, %v3146
      %v3148 = vpop.f32.mrf.mxu0
      %3149 = vdwg.mxu0
      %v3151 = vsel %vm352, %v792, 0
      %v3154 = vsel %vm352, %v797, 0
      %v3157 = vsel %vm352, %v1570, 0
      %3159 = vmatprep.subr.mxu0 0.0
      %3160 = vmatpush1.xpose.msra.mxu0 0.0
      %3161 = vmatprep.subr.mxu0 0.0
      %3162 = vmatpush1.xpose.msra.mxu0 0.0
      %3163 = vmatprep.subr.mxu0 0.0
      %3164 = vmatpush1.xpose.msra.mxu0 0.0
      %3165 = vmatprep.subr.mxu0 0.0
      %3166 = vmatpush1.xpose.msra.mxu0 0.0
      %3167 = vmatprep.subr.mxu0 0.0
      %3168 = vmatpush1.xpose.msra.mxu0 0.0
      %3169 = vmatprep.subr.mxu0 0.0
      %3170 = vmatpush1.xpose.msra.mxu0 0.0
      %3171 = vmatprep.subr.mxu0 0.0
      %3172 = vmatpush1.xpose.msra.mxu0 0.0
      %3173 = vmatprep.subr.mxu0 0.0
      %3174 = vmatpush1.xpose.msra.mxu0 0.0
      %3175 = vmatprep.subr.mxu0 0.0
      %3176 = vmatpush1.xpose.msra.mxu0 0.0
      %3177 = vmatprep.subr.mxu0 0.0
      %3178 = vmatpush1.xpose.msra.mxu0 0.0
      %3179 = vmatprep.subr.mxu0 0.0
      %3180 = vmatpush1.xpose.msra.mxu0 0.0
      %3181 = vmatprep.subr.mxu0 0.0
      %3182 = vmatpush1.xpose.msra.mxu0 0.0
      %3183 = vmatprep.subr.mxu0 0.0
      %3184 = vmatpush1.xpose.msra.mxu0 0.0
      %3185 = vmatprep.subr.mxu0 0.0
      %3186 = vmatpush1.xpose.msra.mxu0 0.0
      %3187 = vmatprep.subr.mxu0 0.0
      %3188 = vmatpush1.xpose.msra.mxu0 0.0
      %3189 = vmatprep.subr.mxu0 0.0
      %3190 = vmatpush1.xpose.msra.mxu0 %v3157
      %3191 = vmatprep.subr.mxu0 0.0
      %3192 = vmatpush2.xpose.msra.mxu0 0.0
      %3193 = vmatprep.subr.mxu0 0.0
      %3194 = vmatpush2.xpose.msra.mxu0 0.0
      %3195 = vmatprep.subr.mxu0 0.0
      %3196 = vmatpush2.xpose.msra.mxu0 0.0
      %3197 = vmatprep.subr.mxu0 0.0
      %3198 = vmatpush2.xpose.msra.mxu0 0.0
      %3199 = vmatprep.subr.mxu0 0.0
      %3200 = vmatpush2.xpose.msra.mxu0 0.0
      %3201 = vmatprep.subr.mxu0 0.0
      %3202 = vmatpush2.xpose.msra.mxu0 0.0
      %3203 = vmatprep.subr.mxu0 0.0
      %3204 = vmatpush2.xpose.msra.mxu0 0.0
      %3205 = vmatprep.subr.mxu0 0.0
      %3206 = vmatpush2.xpose.msra.mxu0 0.0
      %3207 = vmatprep.subr.mxu0 0.0
      %3208 = vmatpush2.xpose.msra.mxu0 0.0
      %3209 = vmatprep.subr.mxu0 0.0
      %3210 = vmatpush2.xpose.msra.mxu0 0.0
      %3211 = vmatprep.subr.mxu0 0.0
      %3212 = vmatpush2.xpose.msra.mxu0 0.0
      %3213 = vmatprep.subr.mxu0 0.0
      %3214 = vmatpush2.xpose.msra.mxu0 0.0
      %3215 = vmatprep.subr.mxu0 0.0
      %3216 = vmatpush2.xpose.msra.mxu0 0.0
      %3217 = vmatprep.subr.mxu0 0.0
      %3218 = vmatpush2.xpose.msra.mxu0 0.0
      %3219 = vmatprep.subr.mxu0 0.0
      %3220 = vmatpush2.xpose.msra.mxu0 0.0
      %3221 = vmatprep.subr.mxu0 0.0
      %3222 = vmatpush2.xpose.msra.mxu0 0.0
      %3223 = vmatprep.mubr.f32.mxu0 0.0
      %3224 = vmatmul.mubr.f32.gmra.mxu0 %v3151
      %v3225 = vpop.f32.mrf.mxu0
      %v3226 = vadd.f32 0.0, %v3225
      %v3227 = vpop.f32.mrf.mxu0
      %3228 = vmatprep.mubr.f32.mxu0 0.0
      %3229 = vmatmul.mubr.f32.gmra.mxu0 %v3154
      %v3230 = vpop.f32.mrf.mxu0
      %v3231 = vadd.f32 0.0, %v3230
      %v3232 = vpop.f32.mrf.mxu0
      %3233 = vdwg.mxu0
      %v3235 = vsel %vm352, %v802, 0
      %v3238 = vsel %vm352, %v807, 0
      %v3241 = vsel %vm352, %v1575, 0
      %3243 = vmatprep.subr.mxu0 0.0
      %3244 = vmatpush1.xpose.msra.mxu0 0.0
      %3245 = vmatprep.subr.mxu0 0.0
      %3246 = vmatpush1.xpose.msra.mxu0 0.0
      %3247 = vmatprep.subr.mxu0 0.0
      %3248 = vmatpush1.xpose.msra.mxu0 0.0
      %3249 = vmatprep.subr.mxu0 0.0
      %3250 = vmatpush1.xpose.msra.mxu0 0.0
      %3251 = vmatprep.subr.mxu0 0.0
      %3252 = vmatpush1.xpose.msra.mxu0 0.0
      %3253 = vmatprep.subr.mxu0 0.0
      %3254 = vmatpush1.xpose.msra.mxu0 0.0
      %3255 = vmatprep.subr.mxu0 0.0
      %3256 = vmatpush1.xpose.msra.mxu0 0.0
      %3257 = vmatprep.subr.mxu0 0.0
      %3258 = vmatpush1.xpose.msra.mxu0 0.0
      %3259 = vmatprep.subr.mxu0 0.0
      %3260 = vmatpush1.xpose.msra.mxu0 0.0
      %3261 = vmatprep.subr.mxu0 0.0
      %3262 = vmatpush1.xpose.msra.mxu0 0.0
      %3263 = vmatprep.subr.mxu0 0.0
      %3264 = vmatpush1.xpose.msra.mxu0 0.0
      %3265 = vmatprep.subr.mxu0 0.0
      %3266 = vmatpush1.xpose.msra.mxu0 0.0
      %3267 = vmatprep.subr.mxu0 0.0
      %3268 = vmatpush1.xpose.msra.mxu0 0.0
      %3269 = vmatprep.subr.mxu0 0.0
      %3270 = vmatpush1.xpose.msra.mxu0 0.0
      %3271 = vmatprep.subr.mxu0 0.0
      %3272 = vmatpush1.xpose.msra.mxu0 0.0
      %3273 = vmatprep.subr.mxu0 0.0
      %3274 = vmatpush1.xpose.msra.mxu0 %v3241
      %3275 = vmatprep.subr.mxu0 0.0
      %3276 = vmatpush2.xpose.msra.mxu0 0.0
      %3277 = vmatprep.subr.mxu0 0.0
      %3278 = vmatpush2.xpose.msra.mxu0 0.0
      %3279 = vmatprep.subr.mxu0 0.0
      %3280 = vmatpush2.xpose.msra.mxu0 0.0
      %3281 = vmatprep.subr.mxu0 0.0
      %3282 = vmatpush2.xpose.msra.mxu0 0.0
      %3283 = vmatprep.subr.mxu0 0.0
      %3284 = vmatpush2.xpose.msra.mxu0 0.0
      %3285 = vmatprep.subr.mxu0 0.0
      %3286 = vmatpush2.xpose.msra.mxu0 0.0
      %3287 = vmatprep.subr.mxu0 0.0
      %3288 = vmatpush2.xpose.msra.mxu0 0.0
      %3289 = vmatprep.subr.mxu0 0.0
      %3290 = vmatpush2.xpose.msra.mxu0 0.0
      %3291 = vmatprep.subr.mxu0 0.0
      %3292 = vmatpush2.xpose.msra.mxu0 0.0
      %3293 = vmatprep.subr.mxu0 0.0
      %3294 = vmatpush2.xpose.msra.mxu0 0.0
      %3295 = vmatprep.subr.mxu0 0.0
      %3296 = vmatpush2.xpose.msra.mxu0 0.0
      %3297 = vmatprep.subr.mxu0 0.0
      %3298 = vmatpush2.xpose.msra.mxu0 0.0
      %3299 = vmatprep.subr.mxu0 0.0
      %3300 = vmatpush2.xpose.msra.mxu0 0.0
      %3301 = vmatprep.subr.mxu0 0.0
      %3302 = vmatpush2.xpose.msra.mxu0 0.0
      %3303 = vmatprep.subr.mxu0 0.0
      %3304 = vmatpush2.xpose.msra.mxu0 0.0
      %3305 = vmatprep.subr.mxu0 0.0
      %3306 = vmatpush2.xpose.msra.mxu0 0.0
      %3307 = vmatprep.mubr.f32.mxu0 0.0
      %3308 = vmatmul.mubr.f32.gmra.mxu0 %v3235
      %v3309 = vpop.f32.mrf.mxu0
      %v3310 = vadd.f32 0.0, %v3309
      %v3311 = vpop.f32.mrf.mxu0
      %3312 = vmatprep.mubr.f32.mxu0 0.0
      %3313 = vmatmul.mubr.f32.gmra.mxu0 %v3238
      %v3314 = vpop.f32.mrf.mxu0
      %v3315 = vadd.f32 0.0, %v3314
      %v3316 = vpop.f32.mrf.mxu0
      %3317 = vdwg.mxu0
      %v3319 = vsel %vm352, %v812, 0
      %v3322 = vsel %vm352, %v817, 0
      %v3325 = vsel %vm352, %v1580, 0
      %3327 = vmatprep.subr.mxu0 0.0
      %3328 = vmatpush1.xpose.msra.mxu0 0.0
      %3329 = vmatprep.subr.mxu0 0.0
      %3330 = vmatpush1.xpose.msra.mxu0 0.0
      %3331 = vmatprep.subr.mxu0 0.0
      %3332 = vmatpush1.xpose.msra.mxu0 0.0
      %3333 = vmatprep.subr.mxu0 0.0
      %3334 = vmatpush1.xpose.msra.mxu0 0.0
      %3335 = vmatprep.subr.mxu0 0.0
      %3336 = vmatpush1.xpose.msra.mxu0 0.0
      %3337 = vmatprep.subr.mxu0 0.0
      %3338 = vmatpush1.xpose.msra.mxu0 0.0
      %3339 = vmatprep.subr.mxu0 0.0
      %3340 = vmatpush1.xpose.msra.mxu0 0.0
      %3341 = vmatprep.subr.mxu0 0.0
      %3342 = vmatpush1.xpose.msra.mxu0 0.0
      %3343 = vmatprep.subr.mxu0 0.0
      %3344 = vmatpush1.xpose.msra.mxu0 0.0
      %3345 = vmatprep.subr.mxu0 0.0
      %3346 = vmatpush1.xpose.msra.mxu0 0.0
      %3347 = vmatprep.subr.mxu0 0.0
      %3348 = vmatpush1.xpose.msra.mxu0 0.0
      %3349 = vmatprep.subr.mxu0 0.0
      %3350 = vmatpush1.xpose.msra.mxu0 0.0
      %3351 = vmatprep.subr.mxu0 0.0
      %3352 = vmatpush1.xpose.msra.mxu0 0.0
      %3353 = vmatprep.subr.mxu0 0.0
      %3354 = vmatpush1.xpose.msra.mxu0 0.0
      %3355 = vmatprep.subr.mxu0 0.0
      %3356 = vmatpush1.xpose.msra.mxu0 0.0
      %3357 = vmatprep.subr.mxu0 0.0
      %3358 = vmatpush1.xpose.msra.mxu0 %v3325
      %3359 = vmatprep.subr.mxu0 0.0
      %3360 = vmatpush2.xpose.msra.mxu0 0.0
      %3361 = vmatprep.subr.mxu0 0.0
      %3362 = vmatpush2.xpose.msra.mxu0 0.0
      %3363 = vmatprep.subr.mxu0 0.0
      %3364 = vmatpush2.xpose.msra.mxu0 0.0
      %3365 = vmatprep.subr.mxu0 0.0
      %3366 = vmatpush2.xpose.msra.mxu0 0.0
      %3367 = vmatprep.subr.mxu0 0.0
      %3368 = vmatpush2.xpose.msra.mxu0 0.0
      %3369 = vmatprep.subr.mxu0 0.0
      %3370 = vmatpush2.xpose.msra.mxu0 0.0
      %3371 = vmatprep.subr.mxu0 0.0
      %3372 = vmatpush2.xpose.msra.mxu0 0.0
      %3373 = vmatprep.subr.mxu0 0.0
      %3374 = vmatpush2.xpose.msra.mxu0 0.0
      %3375 = vmatprep.subr.mxu0 0.0
      %3376 = vmatpush2.xpose.msra.mxu0 0.0
      %3377 = vmatprep.subr.mxu0 0.0
      %3378 = vmatpush2.xpose.msra.mxu0 0.0
      %3379 = vmatprep.subr.mxu0 0.0
      %3380 = vmatpush2.xpose.msra.mxu0 0.0
      %3381 = vmatprep.subr.mxu0 0.0
      %3382 = vmatpush2.xpose.msra.mxu0 0.0
      %3383 = vmatprep.subr.mxu0 0.0
      %3384 = vmatpush2.xpose.msra.mxu0 0.0
      %3385 = vmatprep.subr.mxu0 0.0
      %3386 = vmatpush2.xpose.msra.mxu0 0.0
      %3387 = vmatprep.subr.mxu0 0.0
      %3388 = vmatpush2.xpose.msra.mxu0 0.0
      %3389 = vmatprep.subr.mxu0 0.0
      %3390 = vmatpush2.xpose.msra.mxu0 0.0
      %3391 = vmatprep.mubr.f32.mxu0 0.0
      %3392 = vmatmul.mubr.f32.gmra.mxu0 %v3319
      %v3393 = vpop.f32.mrf.mxu0
      %v3394 = vadd.f32 0.0, %v3393
      %v3395 = vpop.f32.mrf.mxu0
      %3396 = vmatprep.mubr.f32.mxu0 0.0
      %3397 = vmatmul.mubr.f32.gmra.mxu0 %v3322
      %v3398 = vpop.f32.mrf.mxu0
      %v3399 = vadd.f32 0.0, %v3398
      %v3400 = vpop.f32.mrf.mxu0
      %3401 = vdwg.mxu0
      %v3403 = vsel %vm352, %v822, 0
      %v3406 = vsel %vm352, %v827, 0
      %v3409 = vsel %vm352, %v1585, 0
      %3411 = vmatprep.subr.mxu0 0.0
      %3412 = vmatpush1.xpose.msra.mxu0 0.0
      %3413 = vmatprep.subr.mxu0 0.0
      %3414 = vmatpush1.xpose.msra.mxu0 0.0
      %3415 = vmatprep.subr.mxu0 0.0
      %3416 = vmatpush1.xpose.msra.mxu0 0.0
      %3417 = vmatprep.subr.mxu0 0.0
      %3418 = vmatpush1.xpose.msra.mxu0 0.0
      %3419 = vmatprep.subr.mxu0 0.0
      %3420 = vmatpush1.xpose.msra.mxu0 0.0
      %3421 = vmatprep.subr.mxu0 0.0
      %3422 = vmatpush1.xpose.msra.mxu0 0.0
      %3423 = vmatprep.subr.mxu0 0.0
      %3424 = vmatpush1.xpose.msra.mxu0 0.0
      %3425 = vmatprep.subr.mxu0 0.0
      %3426 = vmatpush1.xpose.msra.mxu0 0.0
      %3427 = vmatprep.subr.mxu0 0.0
      %3428 = vmatpush1.xpose.msra.mxu0 0.0
      %3429 = vmatprep.subr.mxu0 0.0
      %3430 = vmatpush1.xpose.msra.mxu0 0.0
      %3431 = vmatprep.subr.mxu0 0.0
      %3432 = vmatpush1.xpose.msra.mxu0 0.0
      %3433 = vmatprep.subr.mxu0 0.0
      %3434 = vmatpush1.xpose.msra.mxu0 0.0
      %3435 = vmatprep.subr.mxu0 0.0
      %3436 = vmatpush1.xpose.msra.mxu0 0.0
      %3437 = vmatprep.subr.mxu0 0.0
      %3438 = vmatpush1.xpose.msra.mxu0 0.0
      %3439 = vmatprep.subr.mxu0 0.0
      %3440 = vmatpush1.xpose.msra.mxu0 0.0
      %3441 = vmatprep.subr.mxu0 0.0
      %3442 = vmatpush1.xpose.msra.mxu0 %v3409
      %3443 = vmatprep.subr.mxu0 0.0
      %3444 = vmatpush2.xpose.msra.mxu0 0.0
      %3445 = vmatprep.subr.mxu0 0.0
      %3446 = vmatpush2.xpose.msra.mxu0 0.0
      %3447 = vmatprep.subr.mxu0 0.0
      %3448 = vmatpush2.xpose.msra.mxu0 0.0
      %3449 = vmatprep.subr.mxu0 0.0
      %3450 = vmatpush2.xpose.msra.mxu0 0.0
      %3451 = vmatprep.subr.mxu0 0.0
      %3452 = vmatpush2.xpose.msra.mxu0 0.0
      %3453 = vmatprep.subr.mxu0 0.0
      %3454 = vmatpush2.xpose.msra.mxu0 0.0
      %3455 = vmatprep.subr.mxu0 0.0
      %3456 = vmatpush2.xpose.msra.mxu0 0.0
      %3457 = vmatprep.subr.mxu0 0.0
      %3458 = vmatpush2.xpose.msra.mxu0 0.0
      %3459 = vmatprep.subr.mxu0 0.0
      %3460 = vmatpush2.xpose.msra.mxu0 0.0
      %3461 = vmatprep.subr.mxu0 0.0
      %3462 = vmatpush2.xpose.msra.mxu0 0.0
      %3463 = vmatprep.subr.mxu0 0.0
      %3464 = vmatpush2.xpose.msra.mxu0 0.0
      %3465 = vmatprep.subr.mxu0 0.0
      %3466 = vmatpush2.xpose.msra.mxu0 0.0
      %3467 = vmatprep.subr.mxu0 0.0
      %3468 = vmatpush2.xpose.msra.mxu0 0.0
      %3469 = vmatprep.subr.mxu0 0.0
      %3470 = vmatpush2.xpose.msra.mxu0 0.0
      %3471 = vmatprep.subr.mxu0 0.0
      %3472 = vmatpush2.xpose.msra.mxu0 0.0
      %3473 = vmatprep.subr.mxu0 0.0
      %3474 = vmatpush2.xpose.msra.mxu0 0.0
      %3475 = vmatprep.mubr.f32.mxu0 0.0
      %3476 = vmatmul.mubr.f32.gmra.mxu0 %v3403
      %v3477 = vpop.f32.mrf.mxu0
      %v3478 = vadd.f32 0.0, %v3477
      %v3479 = vpop.f32.mrf.mxu0
      %3480 = vmatprep.mubr.f32.mxu0 0.0
      %3481 = vmatmul.mubr.f32.gmra.mxu0 %v3406
      %v3482 = vpop.f32.mrf.mxu0
      %v3483 = vadd.f32 0.0, %v3482
      %v3484 = vpop.f32.mrf.mxu0
      %3485 = vdwg.mxu0
      %v3487 = vsel %vm352, %v832, 0
      %v3490 = vsel %vm352, %v837, 0
      %v3493 = vsel %vm352, %v1590, 0
      %3495 = vmatprep.subr.mxu0 0.0
      %3496 = vmatpush1.xpose.msra.mxu0 0.0
      %3497 = vmatprep.subr.mxu0 0.0
      %3498 = vmatpush1.xpose.msra.mxu0 0.0
      %3499 = vmatprep.subr.mxu0 0.0
      %3500 = vmatpush1.xpose.msra.mxu0 0.0
      %3501 = vmatprep.subr.mxu0 0.0
      %3502 = vmatpush1.xpose.msra.mxu0 0.0
      %3503 = vmatprep.subr.mxu0 0.0
      %3504 = vmatpush1.xpose.msra.mxu0 0.0
      %3505 = vmatprep.subr.mxu0 0.0
      %3506 = vmatpush1.xpose.msra.mxu0 0.0
      %3507 = vmatprep.subr.mxu0 0.0
      %3508 = vmatpush1.xpose.msra.mxu0 0.0
      %3509 = vmatprep.subr.mxu0 0.0
      %3510 = vmatpush1.xpose.msra.mxu0 0.0
      %3511 = vmatprep.subr.mxu0 0.0
      %3512 = vmatpush1.xpose.msra.mxu0 0.0
      %3513 = vmatprep.subr.mxu0 0.0
      %3514 = vmatpush1.xpose.msra.mxu0 0.0
      %3515 = vmatprep.subr.mxu0 0.0
      %3516 = vmatpush1.xpose.msra.mxu0 0.0
      %3517 = vmatprep.subr.mxu0 0.0
      %3518 = vmatpush1.xpose.msra.mxu0 0.0
      %3519 = vmatprep.subr.mxu0 0.0
      %3520 = vmatpush1.xpose.msra.mxu0 0.0
      %3521 = vmatprep.subr.mxu0 0.0
      %3522 = vmatpush1.xpose.msra.mxu0 0.0
      %3523 = vmatprep.subr.mxu0 0.0
      %3524 = vmatpush1.xpose.msra.mxu0 0.0
      %3525 = vmatprep.subr.mxu0 0.0
      %3526 = vmatpush1.xpose.msra.mxu0 %v3493
      %3527 = vmatprep.subr.mxu0 0.0
      %3528 = vmatpush2.xpose.msra.mxu0 0.0
      %3529 = vmatprep.subr.mxu0 0.0
      %3530 = vmatpush2.xpose.msra.mxu0 0.0
      %3531 = vmatprep.subr.mxu0 0.0
      %3532 = vmatpush2.xpose.msra.mxu0 0.0
      %3533 = vmatprep.subr.mxu0 0.0
      %3534 = vmatpush2.xpose.msra.mxu0 0.0
      %3535 = vmatprep.subr.mxu0 0.0
      %3536 = vmatpush2.xpose.msra.mxu0 0.0
      %3537 = vmatprep.subr.mxu0 0.0
      %3538 = vmatpush2.xpose.msra.mxu0 0.0
      %3539 = vmatprep.subr.mxu0 0.0
      %3540 = vmatpush2.xpose.msra.mxu0 0.0
      %3541 = vmatprep.subr.mxu0 0.0
      %3542 = vmatpush2.xpose.msra.mxu0 0.0
      %3543 = vmatprep.subr.mxu0 0.0
      %3544 = vmatpush2.xpose.msra.mxu0 0.0
      %3545 = vmatprep.subr.mxu0 0.0
      %3546 = vmatpush2.xpose.msra.mxu0 0.0
      %3547 = vmatprep.subr.mxu0 0.0
      %3548 = vmatpush2.xpose.msra.mxu0 0.0
      %3549 = vmatprep.subr.mxu0 0.0
      %3550 = vmatpush2.xpose.msra.mxu0 0.0
      %3551 = vmatprep.subr.mxu0 0.0
      %3552 = vmatpush2.xpose.msra.mxu0 0.0
      %3553 = vmatprep.subr.mxu0 0.0
      %3554 = vmatpush2.xpose.msra.mxu0 0.0
      %3555 = vmatprep.subr.mxu0 0.0
      %3556 = vmatpush2.xpose.msra.mxu0 0.0
      %3557 = vmatprep.subr.mxu0 0.0
      %3558 = vmatpush2.xpose.msra.mxu0 0.0
      %3559 = vmatprep.mubr.f32.mxu0 0.0
      %3560 = vmatmul.mubr.f32.gmra.mxu0 %v3487
      %v3561 = vpop.f32.mrf.mxu0
      %v3562 = vadd.f32 0.0, %v3561
      %v3563 = vpop.f32.mrf.mxu0
      %3564 = vmatprep.mubr.f32.mxu0 0.0
      %3565 = vmatmul.mubr.f32.gmra.mxu0 %v3490
      %v3566 = vpop.f32.mrf.mxu0
      %v3567 = vadd.f32 0.0, %v3566
      %v3568 = vpop.f32.mrf.mxu0
      %3569 = vdwg.mxu0
      %v3571 = vsel %vm352, %v842, 0
      %v3574 = vsel %vm352, %v847, 0
      %v3577 = vsel %vm352, %v1595, 0
      %3579 = vmatprep.subr.mxu0 0.0
      %3580 = vmatpush1.xpose.msra.mxu0 0.0
      %3581 = vmatprep.subr.mxu0 0.0
      %3582 = vmatpush1.xpose.msra.mxu0 0.0
      %3583 = vmatprep.subr.mxu0 0.0
      %3584 = vmatpush1.xpose.msra.mxu0 0.0
      %3585 = vmatprep.subr.mxu0 0.0
      %3586 = vmatpush1.xpose.msra.mxu0 0.0
      %3587 = vmatprep.subr.mxu0 0.0
      %3588 = vmatpush1.xpose.msra.mxu0 0.0
      %3589 = vmatprep.subr.mxu0 0.0
      %3590 = vmatpush1.xpose.msra.mxu0 0.0
      %3591 = vmatprep.subr.mxu0 0.0
      %3592 = vmatpush1.xpose.msra.mxu0 0.0
      %3593 = vmatprep.subr.mxu0 0.0
      %3594 = vmatpush1.xpose.msra.mxu0 0.0
      %3595 = vmatprep.subr.mxu0 0.0
      %3596 = vmatpush1.xpose.msra.mxu0 0.0
      %3597 = vmatprep.subr.mxu0 0.0
      %3598 = vmatpush1.xpose.msra.mxu0 0.0
      %3599 = vmatprep.subr.mxu0 0.0
      %3600 = vmatpush1.xpose.msra.mxu0 0.0
      %3601 = vmatprep.subr.mxu0 0.0
      %3602 = vmatpush1.xpose.msra.mxu0 0.0
      %3603 = vmatprep.subr.mxu0 0.0
      %3604 = vmatpush1.xpose.msra.mxu0 0.0
      %3605 = vmatprep.subr.mxu0 0.0
      %3606 = vmatpush1.xpose.msra.mxu0 0.0
      %3607 = vmatprep.subr.mxu0 0.0
      %3608 = vmatpush1.xpose.msra.mxu0 0.0
      %3609 = vmatprep.subr.mxu0 0.0
      %3610 = vmatpush1.xpose.msra.mxu0 %v3577
      %3611 = vmatprep.subr.mxu0 0.0
      %3612 = vmatpush2.xpose.msra.mxu0 0.0
      %3613 = vmatprep.subr.mxu0 0.0
      %3614 = vmatpush2.xpose.msra.mxu0 0.0
      %3615 = vmatprep.subr.mxu0 0.0
      %3616 = vmatpush2.xpose.msra.mxu0 0.0
      %3617 = vmatprep.subr.mxu0 0.0
      %3618 = vmatpush2.xpose.msra.mxu0 0.0
      %3619 = vmatprep.subr.mxu0 0.0
      %3620 = vmatpush2.xpose.msra.mxu0 0.0
      %3621 = vmatprep.subr.mxu0 0.0
      %3622 = vmatpush2.xpose.msra.mxu0 0.0
      %3623 = vmatprep.subr.mxu0 0.0
      %3624 = vmatpush2.xpose.msra.mxu0 0.0
      %3625 = vmatprep.subr.mxu0 0.0
      %3626 = vmatpush2.xpose.msra.mxu0 0.0
      %3627 = vmatprep.subr.mxu0 0.0
      %3628 = vmatpush2.xpose.msra.mxu0 0.0
      %3629 = vmatprep.subr.mxu0 0.0
      %3630 = vmatpush2.xpose.msra.mxu0 0.0
      %3631 = vmatprep.subr.mxu0 0.0
      %3632 = vmatpush2.xpose.msra.mxu0 0.0
      %3633 = vmatprep.subr.mxu0 0.0
      %3634 = vmatpush2.xpose.msra.mxu0 0.0
      %3635 = vmatprep.subr.mxu0 0.0
      %3636 = vmatpush2.xpose.msra.mxu0 0.0
      %3637 = vmatprep.subr.mxu0 0.0
      %3638 = vmatpush2.xpose.msra.mxu0 0.0
      %3639 = vmatprep.subr.mxu0 0.0
      %3640 = vmatpush2.xpose.msra.mxu0 0.0
      %3641 = vmatprep.subr.mxu0 0.0
      %3642 = vmatpush2.xpose.msra.mxu0 0.0
      %3643 = vmatprep.mubr.f32.mxu0 0.0
      %3644 = vmatmul.mubr.f32.gmra.mxu0 %v3571
      %v3645 = vpop.f32.mrf.mxu0
      %v3646 = vadd.f32 0.0, %v3645
      %v3647 = vpop.f32.mrf.mxu0
      %3648 = vmatprep.mubr.f32.mxu0 0.0
      %3649 = vmatmul.mubr.f32.gmra.mxu0 %v3574
      %v3650 = vpop.f32.mrf.mxu0
      %v3651 = vadd.f32 0.0, %v3650
      %v3652 = vpop.f32.mrf.mxu0
      %3653 = vdwg.mxu0
      %v3655 = vsel %vm352, %v852, 0
      %v3658 = vsel %vm352, %v857, 0
      %v3661 = vsel %vm352, %v1600, 0
      %3663 = vmatprep.subr.mxu0 0.0
      %3664 = vmatpush1.xpose.msra.mxu0 0.0
      %3665 = vmatprep.subr.mxu0 0.0
      %3666 = vmatpush1.xpose.msra.mxu0 0.0
      %3667 = vmatprep.subr.mxu0 0.0
      %3668 = vmatpush1.xpose.msra.mxu0 0.0
      %3669 = vmatprep.subr.mxu0 0.0
      %3670 = vmatpush1.xpose.msra.mxu0 0.0
      %3671 = vmatprep.subr.mxu0 0.0
      %3672 = vmatpush1.xpose.msra.mxu0 0.0
      %3673 = vmatprep.subr.mxu0 0.0
      %3674 = vmatpush1.xpose.msra.mxu0 0.0
      %3675 = vmatprep.subr.mxu0 0.0
      %3676 = vmatpush1.xpose.msra.mxu0 0.0
      %3677 = vmatprep.subr.mxu0 0.0
      %3678 = vmatpush1.xpose.msra.mxu0 0.0
      %3679 = vmatprep.subr.mxu0 0.0
      %3680 = vmatpush1.xpose.msra.mxu0 0.0
      %3681 = vmatprep.subr.mxu0 0.0
      %3682 = vmatpush1.xpose.msra.mxu0 0.0
      %3683 = vmatprep.subr.mxu0 0.0
      %3684 = vmatpush1.xpose.msra.mxu0 0.0
      %3685 = vmatprep.subr.mxu0 0.0
      %3686 = vmatpush1.xpose.msra.mxu0 0.0
      %3687 = vmatprep.subr.mxu0 0.0
      %3688 = vmatpush1.xpose.msra.mxu0 0.0
      %3689 = vmatprep.subr.mxu0 0.0
      %3690 = vmatpush1.xpose.msra.mxu0 0.0
      %3691 = vmatprep.subr.mxu0 0.0
      %3692 = vmatpush1.xpose.msra.mxu0 0.0
      %3693 = vmatprep.subr.mxu0 0.0
      %3694 = vmatpush1.xpose.msra.mxu0 %v3661
      %3695 = vmatprep.subr.mxu0 0.0
      %3696 = vmatpush2.xpose.msra.mxu0 0.0
      %3697 = vmatprep.subr.mxu0 0.0
      %3698 = vmatpush2.xpose.msra.mxu0 0.0
      %3699 = vmatprep.subr.mxu0 0.0
      %3700 = vmatpush2.xpose.msra.mxu0 0.0
      %3701 = vmatprep.subr.mxu0 0.0
      %3702 = vmatpush2.xpose.msra.mxu0 0.0
      %3703 = vmatprep.subr.mxu0 0.0
      %3704 = vmatpush2.xpose.msra.mxu0 0.0
      %3705 = vmatprep.subr.mxu0 0.0
      %3706 = vmatpush2.xpose.msra.mxu0 0.0
      %3707 = vmatprep.subr.mxu0 0.0
      %3708 = vmatpush2.xpose.msra.mxu0 0.0
      %3709 = vmatprep.subr.mxu0 0.0
      %3710 = vmatpush2.xpose.msra.mxu0 0.0
      %3711 = vmatprep.subr.mxu0 0.0
      %3712 = vmatpush2.xpose.msra.mxu0 0.0
      %3713 = vmatprep.subr.mxu0 0.0
      %3714 = vmatpush2.xpose.msra.mxu0 0.0
      %3715 = vmatprep.subr.mxu0 0.0
      %3716 = vmatpush2.xpose.msra.mxu0 0.0
      %3717 = vmatprep.subr.mxu0 0.0
      %3718 = vmatpush2.xpose.msra.mxu0 0.0
      %3719 = vmatprep.subr.mxu0 0.0
      %3720 = vmatpush2.xpose.msra.mxu0 0.0
      %3721 = vmatprep.subr.mxu0 0.0
      %3722 = vmatpush2.xpose.msra.mxu0 0.0
      %3723 = vmatprep.subr.mxu0 0.0
      %3724 = vmatpush2.xpose.msra.mxu0 0.0
      %3725 = vmatprep.subr.mxu0 0.0
      %3726 = vmatpush2.xpose.msra.mxu0 0.0
      %3727 = vmatprep.mubr.f32.mxu0 0.0
      %3728 = vmatmul.mubr.f32.gmra.mxu0 %v3655
      %v3729 = vpop.f32.mrf.mxu0
      %v3730 = vadd.f32 0.0, %v3729
      %v3731 = vpop.f32.mrf.mxu0
      %3732 = vmatprep.mubr.f32.mxu0 0.0
      %3733 = vmatmul.mubr.f32.gmra.mxu0 %v3658
      %v3734 = vpop.f32.mrf.mxu0
      %v3735 = vadd.f32 0.0, %v3734
      %v3736 = vpop.f32.mrf.mxu0
      %3737 = vdwg.mxu0
      %v3739 = vsel %vm352, %v862, 0
      %v3742 = vsel %vm352, %v867, 0
      %v3745 = vsel %vm352, %v1605, 0
      %3747 = vmatprep.subr.mxu0 0.0
      %3748 = vmatpush1.xpose.msra.mxu0 0.0
      %3749 = vmatprep.subr.mxu0 0.0
      %3750 = vmatpush1.xpose.msra.mxu0 0.0
      %3751 = vmatprep.subr.mxu0 0.0
      %3752 = vmatpush1.xpose.msra.mxu0 0.0
      %3753 = vmatprep.subr.mxu0 0.0
      %3754 = vmatpush1.xpose.msra.mxu0 0.0
      %3755 = vmatprep.subr.mxu0 0.0
      %3756 = vmatpush1.xpose.msra.mxu0 0.0
      %3757 = vmatprep.subr.mxu0 0.0
      %3758 = vmatpush1.xpose.msra.mxu0 0.0
      %3759 = vmatprep.subr.mxu0 0.0
      %3760 = vmatpush1.xpose.msra.mxu0 0.0
      %3761 = vmatprep.subr.mxu0 0.0
      %3762 = vmatpush1.xpose.msra.mxu0 0.0
      %3763 = vmatprep.subr.mxu0 0.0
      %3764 = vmatpush1.xpose.msra.mxu0 0.0
      %3765 = vmatprep.subr.mxu0 0.0
      %3766 = vmatpush1.xpose.msra.mxu0 0.0
      %3767 = vmatprep.subr.mxu0 0.0
      %3768 = vmatpush1.xpose.msra.mxu0 0.0
      %3769 = vmatprep.subr.mxu0 0.0
      %3770 = vmatpush1.xpose.msra.mxu0 0.0
      %3771 = vmatprep.subr.mxu0 0.0
      %3772 = vmatpush1.xpose.msra.mxu0 0.0
      %3773 = vmatprep.subr.mxu0 0.0
      %3774 = vmatpush1.xpose.msra.mxu0 0.0
      %3775 = vmatprep.subr.mxu0 0.0
      %3776 = vmatpush1.xpose.msra.mxu0 0.0
      %3777 = vmatprep.subr.mxu0 0.0
      %3778 = vmatpush1.xpose.msra.mxu0 %v3745
      %3779 = vmatprep.subr.mxu0 0.0
      %3780 = vmatpush2.xpose.msra.mxu0 0.0
      %3781 = vmatprep.subr.mxu0 0.0
      %3782 = vmatpush2.xpose.msra.mxu0 0.0
      %3783 = vmatprep.subr.mxu0 0.0
      %3784 = vmatpush2.xpose.msra.mxu0 0.0
      %3785 = vmatprep.subr.mxu0 0.0
      %3786 = vmatpush2.xpose.msra.mxu0 0.0
      %3787 = vmatprep.subr.mxu0 0.0
      %3788 = vmatpush2.xpose.msra.mxu0 0.0
      %3789 = vmatprep.subr.mxu0 0.0
      %3790 = vmatpush2.xpose.msra.mxu0 0.0
      %3791 = vmatprep.subr.mxu0 0.0
      %3792 = vmatpush2.xpose.msra.mxu0 0.0
      %3793 = vmatprep.subr.mxu0 0.0
      %3794 = vmatpush2.xpose.msra.mxu0 0.0
      %3795 = vmatprep.subr.mxu0 0.0
      %3796 = vmatpush2.xpose.msra.mxu0 0.0
      %3797 = vmatprep.subr.mxu0 0.0
      %3798 = vmatpush2.xpose.msra.mxu0 0.0
      %3799 = vmatprep.subr.mxu0 0.0
      %3800 = vmatpush2.xpose.msra.mxu0 0.0
      %3801 = vmatprep.subr.mxu0 0.0
      %3802 = vmatpush2.xpose.msra.mxu0 0.0
      %3803 = vmatprep.subr.mxu0 0.0
      %3804 = vmatpush2.xpose.msra.mxu0 0.0
      %3805 = vmatprep.subr.mxu0 0.0
      %3806 = vmatpush2.xpose.msra.mxu0 0.0
      %3807 = vmatprep.subr.mxu0 0.0
      %3808 = vmatpush2.xpose.msra.mxu0 0.0
      %3809 = vmatprep.subr.mxu0 0.0
      %3810 = vmatpush2.xpose.msra.mxu0 0.0
      %3811 = vmatprep.mubr.f32.mxu0 0.0
      %3812 = vmatmul.mubr.f32.gmra.mxu0 %v3739
      %v3813 = vpop.f32.mrf.mxu0
      %v3814 = vadd.f32 0.0, %v3813
      %v3815 = vpop.f32.mrf.mxu0
      %3816 = vmatprep.mubr.f32.mxu0 0.0
      %3817 = vmatmul.mubr.f32.gmra.mxu0 %v3742
      %v3818 = vpop.f32.mrf.mxu0
      %v3819 = vadd.f32 0.0, %v3818
      %v3820 = vpop.f32.mrf.mxu0
      %3821 = vdwg.mxu0
      %v3823 = vsel %vm352, %v872, 0
      %v3826 = vsel %vm352, %v877, 0
      %v3829 = vsel %vm352, %v1610, 0
      %3831 = vmatprep.subr.mxu0 0.0
      %3832 = vmatpush1.xpose.msra.mxu0 0.0
      %3833 = vmatprep.subr.mxu0 0.0
      %3834 = vmatpush1.xpose.msra.mxu0 0.0
      %3835 = vmatprep.subr.mxu0 0.0
      %3836 = vmatpush1.xpose.msra.mxu0 0.0
      %3837 = vmatprep.subr.mxu0 0.0
      %3838 = vmatpush1.xpose.msra.mxu0 0.0
      %3839 = vmatprep.subr.mxu0 0.0
      %3840 = vmatpush1.xpose.msra.mxu0 0.0
      %3841 = vmatprep.subr.mxu0 0.0
      %3842 = vmatpush1.xpose.msra.mxu0 0.0
      %3843 = vmatprep.subr.mxu0 0.0
      %3844 = vmatpush1.xpose.msra.mxu0 0.0
      %3845 = vmatprep.subr.mxu0 0.0
      %3846 = vmatpush1.xpose.msra.mxu0 0.0
      %3847 = vmatprep.subr.mxu0 0.0
      %3848 = vmatpush1.xpose.msra.mxu0 0.0
      %3849 = vmatprep.subr.mxu0 0.0
      %3850 = vmatpush1.xpose.msra.mxu0 0.0
      %3851 = vmatprep.subr.mxu0 0.0
      %3852 = vmatpush1.xpose.msra.mxu0 0.0
      %3853 = vmatprep.subr.mxu0 0.0
      %3854 = vmatpush1.xpose.msra.mxu0 0.0
      %3855 = vmatprep.subr.mxu0 0.0
      %3856 = vmatpush1.xpose.msra.mxu0 0.0
      %3857 = vmatprep.subr.mxu0 0.0
      %3858 = vmatpush1.xpose.msra.mxu0 0.0
      %3859 = vmatprep.subr.mxu0 0.0
      %3860 = vmatpush1.xpose.msra.mxu0 0.0
      %3861 = vmatprep.subr.mxu0 0.0
      %3862 = vmatpush1.xpose.msra.mxu0 %v3829
      %3863 = vmatprep.subr.mxu0 0.0
      %3864 = vmatpush2.xpose.msra.mxu0 0.0
      %3865 = vmatprep.subr.mxu0 0.0
      %3866 = vmatpush2.xpose.msra.mxu0 0.0
      %3867 = vmatprep.subr.mxu0 0.0
      %3868 = vmatpush2.xpose.msra.mxu0 0.0
      %3869 = vmatprep.subr.mxu0 0.0
      %3870 = vmatpush2.xpose.msra.mxu0 0.0
      %3871 = vmatprep.subr.mxu0 0.0
      %3872 = vmatpush2.xpose.msra.mxu0 0.0
      %3873 = vmatprep.subr.mxu0 0.0
      %3874 = vmatpush2.xpose.msra.mxu0 0.0
      %3875 = vmatprep.subr.mxu0 0.0
      %3876 = vmatpush2.xpose.msra.mxu0 0.0
      %3877 = vmatprep.subr.mxu0 0.0
      %3878 = vmatpush2.xpose.msra.mxu0 0.0
      %3879 = vmatprep.subr.mxu0 0.0
      %3880 = vmatpush2.xpose.msra.mxu0 0.0
      %3881 = vmatprep.subr.mxu0 0.0
      %3882 = vmatpush2.xpose.msra.mxu0 0.0
      %3883 = vmatprep.subr.mxu0 0.0
      %3884 = vmatpush2.xpose.msra.mxu0 0.0
      %3885 = vmatprep.subr.mxu0 0.0
      %3886 = vmatpush2.xpose.msra.mxu0 0.0
      %3887 = vmatprep.subr.mxu0 0.0
      %3888 = vmatpush2.xpose.msra.mxu0 0.0
      %3889 = vmatprep.subr.mxu0 0.0
      %3890 = vmatpush2.xpose.msra.mxu0 0.0
      %3891 = vmatprep.subr.mxu0 0.0
      %3892 = vmatpush2.xpose.msra.mxu0 0.0
      %3893 = vmatprep.subr.mxu0 0.0
      %3894 = vmatpush2.xpose.msra.mxu0 0.0
      %3895 = vmatprep.mubr.f32.mxu0 0.0
      %3896 = vmatmul.mubr.f32.gmra.mxu0 %v3823
      %v3897 = vpop.f32.mrf.mxu0
      %v3898 = vadd.f32 0.0, %v3897
      %v3899 = vpop.f32.mrf.mxu0
      %3900 = vmatprep.mubr.f32.mxu0 0.0
      %3901 = vmatmul.mubr.f32.gmra.mxu0 %v3826
      %v3902 = vpop.f32.mrf.mxu0
      %v3903 = vadd.f32 0.0, %v3902
      %v3904 = vpop.f32.mrf.mxu0
      %3905 = vdwg.mxu0
      %v3907 = vsel %vm352, %v882, 0
      %v3910 = vsel %vm352, %v887, 0
      %v3913 = vsel %vm352, %v1615, 0
      %3915 = vmatprep.subr.mxu0 0.0
      %3916 = vmatpush1.xpose.msra.mxu0 0.0
      %3917 = vmatprep.subr.mxu0 0.0
      %3918 = vmatpush1.xpose.msra.mxu0 0.0
      %3919 = vmatprep.subr.mxu0 0.0
      %3920 = vmatpush1.xpose.msra.mxu0 0.0
      %3921 = vmatprep.subr.mxu0 0.0
      %3922 = vmatpush1.xpose.msra.mxu0 0.0
      %3923 = vmatprep.subr.mxu0 0.0
      %3924 = vmatpush1.xpose.msra.mxu0 0.0
      %3925 = vmatprep.subr.mxu0 0.0
      %3926 = vmatpush1.xpose.msra.mxu0 0.0
      %3927 = vmatprep.subr.mxu0 0.0
      %3928 = vmatpush1.xpose.msra.mxu0 0.0
      %3929 = vmatprep.subr.mxu0 0.0
      %3930 = vmatpush1.xpose.msra.mxu0 0.0
      %3931 = vmatprep.subr.mxu0 0.0
      %3932 = vmatpush1.xpose.msra.mxu0 0.0
      %3933 = vmatprep.subr.mxu0 0.0
      %3934 = vmatpush1.xpose.msra.mxu0 0.0
      %3935 = vmatprep.subr.mxu0 0.0
      %3936 = vmatpush1.xpose.msra.mxu0 0.0
      %3937 = vmatprep.subr.mxu0 0.0
      %3938 = vmatpush1.xpose.msra.mxu0 0.0
      %3939 = vmatprep.subr.mxu0 0.0
      %3940 = vmatpush1.xpose.msra.mxu0 0.0
      %3941 = vmatprep.subr.mxu0 0.0
      %3942 = vmatpush1.xpose.msra.mxu0 0.0
      %3943 = vmatprep.subr.mxu0 0.0
      %3944 = vmatpush1.xpose.msra.mxu0 0.0
      %3945 = vmatprep.subr.mxu0 0.0
      %3946 = vmatpush1.xpose.msra.mxu0 %v3913
      %3947 = vmatprep.subr.mxu0 0.0
      %3948 = vmatpush2.xpose.msra.mxu0 0.0
      %3949 = vmatprep.subr.mxu0 0.0
      %3950 = vmatpush2.xpose.msra.mxu0 0.0
      %3951 = vmatprep.subr.mxu0 0.0
      %3952 = vmatpush2.xpose.msra.mxu0 0.0
      %3953 = vmatprep.subr.mxu0 0.0
      %3954 = vmatpush2.xpose.msra.mxu0 0.0
      %3955 = vmatprep.subr.mxu0 0.0
      %3956 = vmatpush2.xpose.msra.mxu0 0.0
      %3957 = vmatprep.subr.mxu0 0.0
      %3958 = vmatpush2.xpose.msra.mxu0 0.0
      %3959 = vmatprep.subr.mxu0 0.0
      %3960 = vmatpush2.xpose.msra.mxu0 0.0
      %3961 = vmatprep.subr.mxu0 0.0
      %3962 = vmatpush2.xpose.msra.mxu0 0.0
      %3963 = vmatprep.subr.mxu0 0.0
      %3964 = vmatpush2.xpose.msra.mxu0 0.0
      %3965 = vmatprep.subr.mxu0 0.0
      %3966 = vmatpush2.xpose.msra.mxu0 0.0
      %3967 = vmatprep.subr.mxu0 0.0
      %3968 = vmatpush2.xpose.msra.mxu0 0.0
      %3969 = vmatprep.subr.mxu0 0.0
      %3970 = vmatpush2.xpose.msra.mxu0 0.0
      %3971 = vmatprep.subr.mxu0 0.0
      %3972 = vmatpush2.xpose.msra.mxu0 0.0
      %3973 = vmatprep.subr.mxu0 0.0
      %3974 = vmatpush2.xpose.msra.mxu0 0.0
      %3975 = vmatprep.subr.mxu0 0.0
      %3976 = vmatpush2.xpose.msra.mxu0 0.0
      %3977 = vmatprep.subr.mxu0 0.0
      %3978 = vmatpush2.xpose.msra.mxu0 0.0
      %3979 = vmatprep.mubr.f32.mxu0 0.0
      %3980 = vmatmul.mubr.f32.gmra.mxu0 %v3907
      %v3981 = vpop.f32.mrf.mxu0
      %v3982 = vadd.f32 0.0, %v3981
      %v3983 = vpop.f32.mrf.mxu0
      %3984 = vmatprep.mubr.f32.mxu0 0.0
      %3985 = vmatmul.mubr.f32.gmra.mxu0 %v3910
      %v3986 = vpop.f32.mrf.mxu0
      %v3987 = vadd.f32 0.0, %v3986
      %v3988 = vpop.f32.mrf.mxu0
      %3989 = vdwg.mxu0
      %v3991 = vsel %vm352, %v892, 0
      %v3994 = vsel %vm352, %v897, 0
      %v3997 = vsel %vm352, %v1620, 0
      %3999 = vmatprep.subr.mxu0 0.0
      %4000 = vmatpush1.xpose.msra.mxu0 0.0
      %4001 = vmatprep.subr.mxu0 0.0
      %4002 = vmatpush1.xpose.msra.mxu0 0.0
      %4003 = vmatprep.subr.mxu0 0.0
      %4004 = vmatpush1.xpose.msra.mxu0 0.0
      %4005 = vmatprep.subr.mxu0 0.0
      %4006 = vmatpush1.xpose.msra.mxu0 0.0
      %4007 = vmatprep.subr.mxu0 0.0
      %4008 = vmatpush1.xpose.msra.mxu0 0.0
      %4009 = vmatprep.subr.mxu0 0.0
      %4010 = vmatpush1.xpose.msra.mxu0 0.0
      %4011 = vmatprep.subr.mxu0 0.0
      %4012 = vmatpush1.xpose.msra.mxu0 0.0
      %4013 = vmatprep.subr.mxu0 0.0
      %4014 = vmatpush1.xpose.msra.mxu0 0.0
      %4015 = vmatprep.subr.mxu0 0.0
      %4016 = vmatpush1.xpose.msra.mxu0 0.0
      %4017 = vmatprep.subr.mxu0 0.0
      %4018 = vmatpush1.xpose.msra.mxu0 0.0
      %4019 = vmatprep.subr.mxu0 0.0
      %4020 = vmatpush1.xpose.msra.mxu0 0.0
      %4021 = vmatprep.subr.mxu0 0.0
      %4022 = vmatpush1.xpose.msra.mxu0 0.0
      %4023 = vmatprep.subr.mxu0 0.0
      %4024 = vmatpush1.xpose.msra.mxu0 0.0
      %4025 = vmatprep.subr.mxu0 0.0
      %4026 = vmatpush1.xpose.msra.mxu0 0.0
      %4027 = vmatprep.subr.mxu0 0.0
      %4028 = vmatpush1.xpose.msra.mxu0 0.0
      %4029 = vmatprep.subr.mxu0 0.0
      %4030 = vmatpush1.xpose.msra.mxu0 %v3997
      %4031 = vmatprep.subr.mxu0 0.0
      %4032 = vmatpush2.xpose.msra.mxu0 0.0
      %4033 = vmatprep.subr.mxu0 0.0
      %4034 = vmatpush2.xpose.msra.mxu0 0.0
      %4035 = vmatprep.subr.mxu0 0.0
      %4036 = vmatpush2.xpose.msra.mxu0 0.0
      %4037 = vmatprep.subr.mxu0 0.0
      %4038 = vmatpush2.xpose.msra.mxu0 0.0
      %4039 = vmatprep.subr.mxu0 0.0
      %4040 = vmatpush2.xpose.msra.mxu0 0.0
      %4041 = vmatprep.subr.mxu0 0.0
      %4042 = vmatpush2.xpose.msra.mxu0 0.0
      %4043 = vmatprep.subr.mxu0 0.0
      %4044 = vmatpush2.xpose.msra.mxu0 0.0
      %4045 = vmatprep.subr.mxu0 0.0
      %4046 = vmatpush2.xpose.msra.mxu0 0.0
      %4047 = vmatprep.subr.mxu0 0.0
      %4048 = vmatpush2.xpose.msra.mxu0 0.0
      %4049 = vmatprep.subr.mxu0 0.0
      %4050 = vmatpush2.xpose.msra.mxu0 0.0
      %4051 = vmatprep.subr.mxu0 0.0
      %4052 = vmatpush2.xpose.msra.mxu0 0.0
      %4053 = vmatprep.subr.mxu0 0.0
      %4054 = vmatpush2.xpose.msra.mxu0 0.0
      %4055 = vmatprep.subr.mxu0 0.0
      %4056 = vmatpush2.xpose.msra.mxu0 0.0
      %4057 = vmatprep.subr.mxu0 0.0
      %4058 = vmatpush2.xpose.msra.mxu0 0.0
      %4059 = vmatprep.subr.mxu0 0.0
      %4060 = vmatpush2.xpose.msra.mxu0 0.0
      %4061 = vmatprep.subr.mxu0 0.0
      %4062 = vmatpush2.xpose.msra.mxu0 0.0
      %4063 = vmatprep.mubr.f32.mxu0 0.0
      %4064 = vmatmul.mubr.f32.gmra.mxu0 %v3991
      %v4065 = vpop.f32.mrf.mxu0
      %v4066 = vadd.f32 0.0, %v4065
      %v4067 = vpop.f32.mrf.mxu0
      %4068 = vmatprep.mubr.f32.mxu0 0.0
      %4069 = vmatmul.mubr.f32.gmra.mxu0 %v3994
      %v4070 = vpop.f32.mrf.mxu0
      %v4071 = vadd.f32 0.0, %v4070
      %v4072 = vpop.f32.mrf.mxu0
      %4073 = vdwg.mxu0
      %v4075 = vsel %vm352, %v902, 0
      %v4078 = vsel %vm352, %v907, 0
      %v4081 = vsel %vm352, %v1625, 0
      %4083 = vmatprep.subr.mxu0 0.0
      %4084 = vmatpush1.xpose.msra.mxu0 0.0
      %4085 = vmatprep.subr.mxu0 0.0
      %4086 = vmatpush1.xpose.msra.mxu0 0.0
      %4087 = vmatprep.subr.mxu0 0.0
      %4088 = vmatpush1.xpose.msra.mxu0 0.0
      %4089 = vmatprep.subr.mxu0 0.0
      %4090 = vmatpush1.xpose.msra.mxu0 0.0
      %4091 = vmatprep.subr.mxu0 0.0
      %4092 = vmatpush1.xpose.msra.mxu0 0.0
      %4093 = vmatprep.subr.mxu0 0.0
      %4094 = vmatpush1.xpose.msra.mxu0 0.0
      %4095 = vmatprep.subr.mxu0 0.0
      %4096 = vmatpush1.xpose.msra.mxu0 0.0
      %4097 = vmatprep.subr.mxu0 0.0
      %4098 = vmatpush1.xpose.msra.mxu0 0.0
      %4099 = vmatprep.subr.mxu0 0.0
      %4100 = vmatpush1.xpose.msra.mxu0 0.0
      %4101 = vmatprep.subr.mxu0 0.0
      %4102 = vmatpush1.xpose.msra.mxu0 0.0
      %4103 = vmatprep.subr.mxu0 0.0
      %4104 = vmatpush1.xpose.msra.mxu0 0.0
      %4105 = vmatprep.subr.mxu0 0.0
      %4106 = vmatpush1.xpose.msra.mxu0 0.0
      %4107 = vmatprep.subr.mxu0 0.0
      %4108 = vmatpush1.xpose.msra.mxu0 0.0
      %4109 = vmatprep.subr.mxu0 0.0
      %4110 = vmatpush1.xpose.msra.mxu0 0.0
      %4111 = vmatprep.subr.mxu0 0.0
      %4112 = vmatpush1.xpose.msra.mxu0 0.0
      %4113 = vmatprep.subr.mxu0 0.0
      %4114 = vmatpush1.xpose.msra.mxu0 %v4081
      %4115 = vmatprep.subr.mxu0 0.0
      %4116 = vmatpush2.xpose.msra.mxu0 0.0
      %4117 = vmatprep.subr.mxu0 0.0
      %4118 = vmatpush2.xpose.msra.mxu0 0.0
      %4119 = vmatprep.subr.mxu0 0.0
      %4120 = vmatpush2.xpose.msra.mxu0 0.0
      %4121 = vmatprep.subr.mxu0 0.0
      %4122 = vmatpush2.xpose.msra.mxu0 0.0
      %4123 = vmatprep.subr.mxu0 0.0
      %4124 = vmatpush2.xpose.msra.mxu0 0.0
      %4125 = vmatprep.subr.mxu0 0.0
      %4126 = vmatpush2.xpose.msra.mxu0 0.0
      %4127 = vmatprep.subr.mxu0 0.0
      %4128 = vmatpush2.xpose.msra.mxu0 0.0
      %4129 = vmatprep.subr.mxu0 0.0
      %4130 = vmatpush2.xpose.msra.mxu0 0.0
      %4131 = vmatprep.subr.mxu0 0.0
      %4132 = vmatpush2.xpose.msra.mxu0 0.0
      %4133 = vmatprep.subr.mxu0 0.0
      %4134 = vmatpush2.xpose.msra.mxu0 0.0
      %4135 = vmatprep.subr.mxu0 0.0
      %4136 = vmatpush2.xpose.msra.mxu0 0.0
      %4137 = vmatprep.subr.mxu0 0.0
      %4138 = vmatpush2.xpose.msra.mxu0 0.0
      %4139 = vmatprep.subr.mxu0 0.0
      %4140 = vmatpush2.xpose.msra.mxu0 0.0
      %4141 = vmatprep.subr.mxu0 0.0
      %4142 = vmatpush2.xpose.msra.mxu0 0.0
      %4143 = vmatprep.subr.mxu0 0.0
      %4144 = vmatpush2.xpose.msra.mxu0 0.0
      %4145 = vmatprep.subr.mxu0 0.0
      %4146 = vmatpush2.xpose.msra.mxu0 0.0
      %4147 = vmatprep.mubr.f32.mxu0 0.0
      %4148 = vmatmul.mubr.f32.gmra.mxu0 %v4075
      %v4149 = vpop.f32.mrf.mxu0
      %v4150 = vadd.f32 0.0, %v4149
      %v4151 = vpop.f32.mrf.mxu0
      %4152 = vmatprep.mubr.f32.mxu0 0.0
      %4153 = vmatmul.mubr.f32.gmra.mxu0 %v4078
      %v4154 = vpop.f32.mrf.mxu0
      %v4155 = vadd.f32 0.0, %v4154
      %v4156 = vpop.f32.mrf.mxu0
      %4157 = vdwg.mxu0
      %v4159 = vsel %vm352, %v912, 0
      %v4162 = vsel %vm352, %v917, 0
      %v4165 = vsel %vm352, %v1630, 0
      %4167 = vmatprep.subr.mxu0 0.0
      %4168 = vmatpush1.xpose.msra.mxu0 0.0
      %4169 = vmatprep.subr.mxu0 0.0
      %4170 = vmatpush1.xpose.msra.mxu0 0.0
      %4171 = vmatprep.subr.mxu0 0.0
      %4172 = vmatpush1.xpose.msra.mxu0 0.0
      %4173 = vmatprep.subr.mxu0 0.0
      %4174 = vmatpush1.xpose.msra.mxu0 0.0
      %4175 = vmatprep.subr.mxu0 0.0
      %4176 = vmatpush1.xpose.msra.mxu0 0.0
      %4177 = vmatprep.subr.mxu0 0.0
      %4178 = vmatpush1.xpose.msra.mxu0 0.0
      %4179 = vmatprep.subr.mxu0 0.0
      %4180 = vmatpush1.xpose.msra.mxu0 0.0
      %4181 = vmatprep.subr.mxu0 0.0
      %4182 = vmatpush1.xpose.msra.mxu0 0.0
      %4183 = vmatprep.subr.mxu0 0.0
      %4184 = vmatpush1.xpose.msra.mxu0 0.0
      %4185 = vmatprep.subr.mxu0 0.0
      %4186 = vmatpush1.xpose.msra.mxu0 0.0
      %4187 = vmatprep.subr.mxu0 0.0
      %4188 = vmatpush1.xpose.msra.mxu0 0.0
      %4189 = vmatprep.subr.mxu0 0.0
      %4190 = vmatpush1.xpose.msra.mxu0 0.0
      %4191 = vmatprep.subr.mxu0 0.0
      %4192 = vmatpush1.xpose.msra.mxu0 0.0
      %4193 = vmatprep.subr.mxu0 0.0
      %4194 = vmatpush1.xpose.msra.mxu0 0.0
      %4195 = vmatprep.subr.mxu0 0.0
      %4196 = vmatpush1.xpose.msra.mxu0 0.0
      %4197 = vmatprep.subr.mxu0 0.0
      %4198 = vmatpush1.xpose.msra.mxu0 %v4165
      %4199 = vmatprep.subr.mxu0 0.0
      %4200 = vmatpush2.xpose.msra.mxu0 0.0
      %4201 = vmatprep.subr.mxu0 0.0
      %4202 = vmatpush2.xpose.msra.mxu0 0.0
      %4203 = vmatprep.subr.mxu0 0.0
      %4204 = vmatpush2.xpose.msra.mxu0 0.0
      %4205 = vmatprep.subr.mxu0 0.0
      %4206 = vmatpush2.xpose.msra.mxu0 0.0
      %4207 = vmatprep.subr.mxu0 0.0
      %4208 = vmatpush2.xpose.msra.mxu0 0.0
      %4209 = vmatprep.subr.mxu0 0.0
      %4210 = vmatpush2.xpose.msra.mxu0 0.0
      %4211 = vmatprep.subr.mxu0 0.0
      %4212 = vmatpush2.xpose.msra.mxu0 0.0
      %4213 = vmatprep.subr.mxu0 0.0
      %4214 = vmatpush2.xpose.msra.mxu0 0.0
      %4215 = vmatprep.subr.mxu0 0.0
      %4216 = vmatpush2.xpose.msra.mxu0 0.0
      %4217 = vmatprep.subr.mxu0 0.0
      %4218 = vmatpush2.xpose.msra.mxu0 0.0
      %4219 = vmatprep.subr.mxu0 0.0
      %4220 = vmatpush2.xpose.msra.mxu0 0.0
      %4221 = vmatprep.subr.mxu0 0.0
      %4222 = vmatpush2.xpose.msra.mxu0 0.0
      %4223 = vmatprep.subr.mxu0 0.0
      %4224 = vmatpush2.xpose.msra.mxu0 0.0
      %4225 = vmatprep.subr.mxu0 0.0
      %4226 = vmatpush2.xpose.msra.mxu0 0.0
      %4227 = vmatprep.subr.mxu0 0.0
      %4228 = vmatpush2.xpose.msra.mxu0 0.0
      %4229 = vmatprep.subr.mxu0 0.0
      %4230 = vmatpush2.xpose.msra.mxu0 0.0
      %4231 = vmatprep.mubr.f32.mxu0 0.0
      %4232 = vmatmul.mubr.f32.gmra.mxu0 %v4159
      %v4233 = vpop.f32.mrf.mxu0
      %v4234 = vadd.f32 0.0, %v4233
      %v4235 = vpop.f32.mrf.mxu0
      %4236 = vmatprep.mubr.f32.mxu0 0.0
      %4237 = vmatmul.mubr.f32.gmra.mxu0 %v4162
      %v4238 = vpop.f32.mrf.mxu0
      %v4239 = vadd.f32 0.0, %v4238
      %v4240 = vpop.f32.mrf.mxu0
      %4241 = vdwg.mxu0
      %v4243 = vsel %vm352, %v922, 0
      %v4246 = vsel %vm352, %v927, 0
      %v4249 = vsel %vm352, %v1635, 0
      %4251 = vmatprep.subr.mxu0 0.0
      %4252 = vmatpush1.xpose.msra.mxu0 0.0
      %4253 = vmatprep.subr.mxu0 0.0
      %4254 = vmatpush1.xpose.msra.mxu0 0.0
      %4255 = vmatprep.subr.mxu0 0.0
      %4256 = vmatpush1.xpose.msra.mxu0 0.0
      %4257 = vmatprep.subr.mxu0 0.0
      %4258 = vmatpush1.xpose.msra.mxu0 0.0
      %4259 = vmatprep.subr.mxu0 0.0
      %4260 = vmatpush1.xpose.msra.mxu0 0.0
      %4261 = vmatprep.subr.mxu0 0.0
      %4262 = vmatpush1.xpose.msra.mxu0 0.0
      %4263 = vmatprep.subr.mxu0 0.0
      %4264 = vmatpush1.xpose.msra.mxu0 0.0
      %4265 = vmatprep.subr.mxu0 0.0
      %4266 = vmatpush1.xpose.msra.mxu0 0.0
      %4267 = vmatprep.subr.mxu0 0.0
      %4268 = vmatpush1.xpose.msra.mxu0 0.0
      %4269 = vmatprep.subr.mxu0 0.0
      %4270 = vmatpush1.xpose.msra.mxu0 0.0
      %4271 = vmatprep.subr.mxu0 0.0
      %4272 = vmatpush1.xpose.msra.mxu0 0.0
      %4273 = vmatprep.subr.mxu0 0.0
      %4274 = vmatpush1.xpose.msra.mxu0 0.0
      %4275 = vmatprep.subr.mxu0 0.0
      %4276 = vmatpush1.xpose.msra.mxu0 0.0
      %4277 = vmatprep.subr.mxu0 0.0
      %4278 = vmatpush1.xpose.msra.mxu0 0.0
      %4279 = vmatprep.subr.mxu0 0.0
      %4280 = vmatpush1.xpose.msra.mxu0 0.0
      %4281 = vmatprep.subr.mxu0 0.0
      %4282 = vmatpush1.xpose.msra.mxu0 %v4249
      %4283 = vmatprep.subr.mxu0 0.0
      %4284 = vmatpush2.xpose.msra.mxu0 0.0
      %4285 = vmatprep.subr.mxu0 0.0
      %4286 = vmatpush2.xpose.msra.mxu0 0.0
      %4287 = vmatprep.subr.mxu0 0.0
      %4288 = vmatpush2.xpose.msra.mxu0 0.0
      %4289 = vmatprep.subr.mxu0 0.0
      %4290 = vmatpush2.xpose.msra.mxu0 0.0
      %4291 = vmatprep.subr.mxu0 0.0
      %4292 = vmatpush2.xpose.msra.mxu0 0.0
      %4293 = vmatprep.subr.mxu0 0.0
      %4294 = vmatpush2.xpose.msra.mxu0 0.0
      %4295 = vmatprep.subr.mxu0 0.0
      %4296 = vmatpush2.xpose.msra.mxu0 0.0
      %4297 = vmatprep.subr.mxu0 0.0
      %4298 = vmatpush2.xpose.msra.mxu0 0.0
      %4299 = vmatprep.subr.mxu0 0.0
      %4300 = vmatpush2.xpose.msra.mxu0 0.0
      %4301 = vmatprep.subr.mxu0 0.0
      %4302 = vmatpush2.xpose.msra.mxu0 0.0
      %4303 = vmatprep.subr.mxu0 0.0
      %4304 = vmatpush2.xpose.msra.mxu0 0.0
      %4305 = vmatprep.subr.mxu0 0.0
      %4306 = vmatpush2.xpose.msra.mxu0 0.0
      %4307 = vmatprep.subr.mxu0 0.0
      %4308 = vmatpush2.xpose.msra.mxu0 0.0
      %4309 = vmatprep.subr.mxu0 0.0
      %4310 = vmatpush2.xpose.msra.mxu0 0.0
      %4311 = vmatprep.subr.mxu0 0.0
      %4312 = vmatpush2.xpose.msra.mxu0 0.0
      %4313 = vmatprep.subr.mxu0 0.0
      %4314 = vmatpush2.xpose.msra.mxu0 0.0
      %4315 = vmatprep.mubr.f32.mxu0 0.0
      %4316 = vmatmul.mubr.f32.gmra.mxu0 %v4243
      %v4317 = vpop.f32.mrf.mxu0
      %v4318 = vadd.f32 0.0, %v4317
      %v4319 = vpop.f32.mrf.mxu0
      %4320 = vmatprep.mubr.f32.mxu0 0.0
      %4321 = vmatmul.mubr.f32.gmra.mxu0 %v4246
      %v4322 = vpop.f32.mrf.mxu0
      %v4323 = vadd.f32 0.0, %v4322
      %v4324 = vpop.f32.mrf.mxu0
      %4325 = vdwg.mxu0
      %v4326 = vmul.f32 %v1714, 0.35355338
      %v4327 = vmul.f32 %v1719, 0.35355338
      %v4328 = vmul.f32 %v1798, 0.35355338
      %v4329 = vmul.f32 %v1803, 0.35355338
      %v4330 = vmul.f32 %v1882, 0.35355338
      %v4331 = vmul.f32 %v1887, 0.35355338
      %v4332 = vmul.f32 %v1966, 0.35355338
      %v4333 = vmul.f32 %v1971, 0.35355338
      %v4334 = vmul.f32 %v2050, 0.35355338
      %v4335 = vmul.f32 %v2055, 0.35355338
      %v4336 = vmul.f32 %v2134, 0.35355338
      %v4337 = vmul.f32 %v2139, 0.35355338
      %v4338 = vmul.f32 %v2218, 0.35355338
      %v4339 = vmul.f32 %v2223, 0.35355338
      %v4340 = vmul.f32 %v2302, 0.35355338
      %v4341 = vmul.f32 %v2307, 0.35355338
      %v4342 = vmul.f32 %v2386, 0.35355338
      %v4343 = vmul.f32 %v2391, 0.35355338
      %v4344 = vmul.f32 %v2470, 0.35355338
      %v4345 = vmul.f32 %v2475, 0.35355338
      %v4346 = vmul.f32 %v2554, 0.35355338
      %v4347 = vmul.f32 %v2559, 0.35355338
      %v4348 = vmul.f32 %v2638, 0.35355338
      %v4349 = vmul.f32 %v2643, 0.35355338
      %v4350 = vmul.f32 %v2722, 0.35355338
      %v4351 = vmul.f32 %v2727, 0.35355338
      %v4352 = vmul.f32 %v2806, 0.35355338
      %v4353 = vmul.f32 %v2811, 0.35355338
      %v4354 = vmul.f32 %v2890, 0.35355338
      %v4355 = vmul.f32 %v2895, 0.35355338
      %v4356 = vmul.f32 %v2974, 0.35355338
      %v4357 = vmul.f32 %v2979, 0.35355338
      %v4358 = vmul.f32 %v3058, 0.35355338
      %v4359 = vmul.f32 %v3063, 0.35355338
      %v4360 = vmul.f32 %v3142, 0.35355338
      %v4361 = vmul.f32 %v3147, 0.35355338
      %v4362 = vmul.f32 %v3226, 0.35355338
      %v4363 = vmul.f32 %v3231, 0.35355338
      %v4364 = vmul.f32 %v3310, 0.35355338
      %v4365 = vmul.f32 %v3315, 0.35355338
      %v4366 = vmul.f32 %v3394, 0.35355338
      %v4367 = vmul.f32 %v3399, 0.35355338
      %v4368 = vmul.f32 %v3478, 0.35355338
      %v4369 = vmul.f32 %v3483, 0.35355338
      %v4370 = vmul.f32 %v3562, 0.35355338
      %v4371 = vmul.f32 %v3567, 0.35355338
      %v4372 = vmul.f32 %v3646, 0.35355338
      %v4373 = vmul.f32 %v3651, 0.35355338
      %v4374 = vmul.f32 %v3730, 0.35355338
      %v4375 = vmul.f32 %v3735, 0.35355338
      %v4376 = vmul.f32 %v3814, 0.35355338
      %v4377 = vmul.f32 %v3819, 0.35355338
      %v4378 = vmul.f32 %v3898, 0.35355338
      %v4379 = vmul.f32 %v3903, 0.35355338
      %v4380 = vmul.f32 %v3982, 0.35355338
      %v4381 = vmul.f32 %v3987, 0.35355338
      %v4382 = vmul.f32 %v4066, 0.35355338
      %v4383 = vmul.f32 %v4071, 0.35355338
      %v4384 = vmul.f32 %v4150, 0.35355338
      %v4385 = vmul.f32 %v4155, 0.35355338
      %v4386 = vmul.f32 %v4234, 0.35355338
      %v4387 = vmul.f32 %v4239, 0.35355338
      %v4388 = vmul.f32 %v4318, 0.35355338
      %v4389 = vmul.f32 %v4323, 0.35355338
      %v4390 = vsel %vm352, %v4326, -inf
      %4391 = vmax.xlane.f32.xlu0 %v4390
      %v4392 = vpop.xlane.xlu0 %4391
      %v4393 = vsel %vm352, %v4327, -inf
      %4394 = vmax.xlane.f32.xlu0 %v4393
      %v4395 = vpop.xlane.xlu0 %4394
      %v4396 = vsel %vm352, %v4328, -inf
      %4397 = vmax.xlane.f32.xlu0 %v4396
      %v4398 = vpop.xlane.xlu0 %4397
      %v4399 = vsel %vm352, %v4329, -inf
      %4400 = vmax.xlane.f32.xlu0 %v4399
      %v4401 = vpop.xlane.xlu0 %4400
      %v4402 = vsel %vm352, %v4330, -inf
      %4403 = vmax.xlane.f32.xlu0 %v4402
      %v4404 = vpop.xlane.xlu0 %4403
      %v4405 = vsel %vm352, %v4331, -inf
      %4406 = vmax.xlane.f32.xlu0 %v4405
      %v4407 = vpop.xlane.xlu0 %4406
      %v4408 = vsel %vm352, %v4332, -inf
      %4409 = vmax.xlane.f32.xlu0 %v4408
      %v4410 = vpop.xlane.xlu0 %4409
      %v4411 = vsel %vm352, %v4333, -inf
      %4412 = vmax.xlane.f32.xlu0 %v4411
      %v4413 = vpop.xlane.xlu0 %4412
      %v4414 = vsel %vm352, %v4334, -inf
      %4415 = vmax.xlane.f32.xlu0 %v4414
      %v4416 = vpop.xlane.xlu0 %4415
      %v4417 = vsel %vm352, %v4335, -inf
      %4418 = vmax.xlane.f32.xlu0 %v4417
      %v4419 = vpop.xlane.xlu0 %4418
      %v4420 = vsel %vm352, %v4336, -inf
      %4421 = vmax.xlane.f32.xlu0 %v4420
      %v4422 = vpop.xlane.xlu0 %4421
      %v4423 = vsel %vm352, %v4337, -inf
      %4424 = vmax.xlane.f32.xlu0 %v4423
      %v4425 = vpop.xlane.xlu0 %4424
      %v4426 = vsel %vm352, %v4338, -inf
      %4427 = vmax.xlane.f32.xlu0 %v4426
      %v4428 = vpop.xlane.xlu0 %4427
      %v4429 = vsel %vm352, %v4339, -inf
      %4430 = vmax.xlane.f32.xlu0 %v4429
      %v4431 = vpop.xlane.xlu0 %4430
      %v4432 = vsel %vm352, %v4340, -inf
      %4433 = vmax.xlane.f32.xlu0 %v4432
      %v4434 = vpop.xlane.xlu0 %4433
      %v4435 = vsel %vm352, %v4341, -inf
      %4436 = vmax.xlane.f32.xlu0 %v4435
      %v4437 = vpop.xlane.xlu0 %4436
      %v4438 = vsel %vm352, %v4342, -inf
      %4439 = vmax.xlane.f32.xlu0 %v4438
      %v4440 = vpop.xlane.xlu0 %4439
      %v4441 = vsel %vm352, %v4343, -inf
      %4442 = vmax.xlane.f32.xlu0 %v4441
      %v4443 = vpop.xlane.xlu0 %4442
      %v4444 = vsel %vm352, %v4344, -inf
      %4445 = vmax.xlane.f32.xlu0 %v4444
      %v4446 = vpop.xlane.xlu0 %4445
      %v4447 = vsel %vm352, %v4345, -inf
      %4448 = vmax.xlane.f32.xlu0 %v4447
      %v4449 = vpop.xlane.xlu0 %4448
      %v4450 = vsel %vm352, %v4346, -inf
      %4451 = vmax.xlane.f32.xlu0 %v4450
      %v4452 = vpop.xlane.xlu0 %4451
      %v4453 = vsel %vm352, %v4347, -inf
      %4454 = vmax.xlane.f32.xlu0 %v4453
      %v4455 = vpop.xlane.xlu0 %4454
      %v4456 = vsel %vm352, %v4348, -inf
      %4457 = vmax.xlane.f32.xlu0 %v4456
      %v4458 = vpop.xlane.xlu0 %4457
      %v4459 = vsel %vm352, %v4349, -inf
      %4460 = vmax.xlane.f32.xlu0 %v4459
      %v4461 = vpop.xlane.xlu0 %4460
      %v4462 = vsel %vm352, %v4350, -inf
      %4463 = vmax.xlane.f32.xlu0 %v4462
      %v4464 = vpop.xlane.xlu0 %4463
      %v4465 = vsel %vm352, %v4351, -inf
      %4466 = vmax.xlane.f32.xlu0 %v4465
      %v4467 = vpop.xlane.xlu0 %4466
      %v4468 = vsel %vm352, %v4352, -inf
      %4469 = vmax.xlane.f32.xlu0 %v4468
      %v4470 = vpop.xlane.xlu0 %4469
      %v4471 = vsel %vm352, %v4353, -inf
      %4472 = vmax.xlane.f32.xlu0 %v4471
      %v4473 = vpop.xlane.xlu0 %4472
      %v4474 = vsel %vm352, %v4354, -inf
      %4475 = vmax.xlane.f32.xlu0 %v4474
      %v4476 = vpop.xlane.xlu0 %4475
      %v4477 = vsel %vm352, %v4355, -inf
      %4478 = vmax.xlane.f32.xlu0 %v4477
      %v4479 = vpop.xlane.xlu0 %4478
      %v4480 = vsel %vm352, %v4356, -inf
      %4481 = vmax.xlane.f32.xlu0 %v4480
      %v4482 = vpop.xlane.xlu0 %4481
      %v4483 = vsel %vm352, %v4357, -inf
      %4484 = vmax.xlane.f32.xlu0 %v4483
      %v4485 = vpop.xlane.xlu0 %4484
      %v4486 = vsel %vm352, %v4358, -inf
      %4487 = vmax.xlane.f32.xlu0 %v4486
      %v4488 = vpop.xlane.xlu0 %4487
      %v4489 = vsel %vm352, %v4359, -inf
      %4490 = vmax.xlane.f32.xlu0 %v4489
      %v4491 = vpop.xlane.xlu0 %4490
      %v4492 = vsel %vm352, %v4360, -inf
      %4493 = vmax.xlane.f32.xlu0 %v4492
      %v4494 = vpop.xlane.xlu0 %4493
      %v4495 = vsel %vm352, %v4361, -inf
      %4496 = vmax.xlane.f32.xlu0 %v4495
      %v4497 = vpop.xlane.xlu0 %4496
      %v4498 = vsel %vm352, %v4362, -inf
      %4499 = vmax.xlane.f32.xlu0 %v4498
      %v4500 = vpop.xlane.xlu0 %4499
      %v4501 = vsel %vm352, %v4363, -inf
      %4502 = vmax.xlane.f32.xlu0 %v4501
      %v4503 = vpop.xlane.xlu0 %4502
      %v4504 = vsel %vm352, %v4364, -inf
      %4505 = vmax.xlane.f32.xlu0 %v4504
      %v4506 = vpop.xlane.xlu0 %4505
      %v4507 = vsel %vm352, %v4365, -inf
      %4508 = vmax.xlane.f32.xlu0 %v4507
      %v4509 = vpop.xlane.xlu0 %4508
      %v4510 = vsel %vm352, %v4366, -inf
      %4511 = vmax.xlane.f32.xlu0 %v4510
      %v4512 = vpop.xlane.xlu0 %4511
      %v4513 = vsel %vm352, %v4367, -inf
      %4514 = vmax.xlane.f32.xlu0 %v4513
      %v4515 = vpop.xlane.xlu0 %4514
      %v4516 = vsel %vm352, %v4368, -inf
      %4517 = vmax.xlane.f32.xlu0 %v4516
      %v4518 = vpop.xlane.xlu0 %4517
      %v4519 = vsel %vm352, %v4369, -inf
      %4520 = vmax.xlane.f32.xlu0 %v4519
      %v4521 = vpop.xlane.xlu0 %4520
      %v4522 = vsel %vm352, %v4370, -inf
      %4523 = vmax.xlane.f32.xlu0 %v4522
      %v4524 = vpop.xlane.xlu0 %4523
      %v4525 = vsel %vm352, %v4371, -inf
      %4526 = vmax.xlane.f32.xlu0 %v4525
      %v4527 = vpop.xlane.xlu0 %4526
      %v4528 = vsel %vm352, %v4372, -inf
      %4529 = vmax.xlane.f32.xlu0 %v4528
      %v4530 = vpop.xlane.xlu0 %4529
      %v4531 = vsel %vm352, %v4373, -inf
      %4532 = vmax.xlane.f32.xlu0 %v4531
      %v4533 = vpop.xlane.xlu0 %4532
      %v4534 = vsel %vm352, %v4374, -inf
      %4535 = vmax.xlane.f32.xlu0 %v4534
      %v4536 = vpop.xlane.xlu0 %4535
      %v4537 = vsel %vm352, %v4375, -inf
      %4538 = vmax.xlane.f32.xlu0 %v4537
      %v4539 = vpop.xlane.xlu0 %4538
      %v4540 = vsel %vm352, %v4376, -inf
      %4541 = vmax.xlane.f32.xlu0 %v4540
      %v4542 = vpop.xlane.xlu0 %4541
      %v4543 = vsel %vm352, %v4377, -inf
      %4544 = vmax.xlane.f32.xlu0 %v4543
      %v4545 = vpop.xlane.xlu0 %4544
      %v4546 = vsel %vm352, %v4378, -inf
      %4547 = vmax.xlane.f32.xlu0 %v4546
      %v4548 = vpop.xlane.xlu0 %4547
      %v4549 = vsel %vm352, %v4379, -inf
      %4550 = vmax.xlane.f32.xlu0 %v4549
      %v4551 = vpop.xlane.xlu0 %4550
      %v4552 = vsel %vm352, %v4380, -inf
      %4553 = vmax.xlane.f32.xlu0 %v4552
      %v4554 = vpop.xlane.xlu0 %4553
      %v4555 = vsel %vm352, %v4381, -inf
      %4556 = vmax.xlane.f32.xlu0 %v4555
      %v4557 = vpop.xlane.xlu0 %4556
      %v4558 = vsel %vm352, %v4382, -inf
      %4559 = vmax.xlane.f32.xlu0 %v4558
      %v4560 = vpop.xlane.xlu0 %4559
      %v4561 = vsel %vm352, %v4383, -inf
      %4562 = vmax.xlane.f32.xlu0 %v4561
      %v4563 = vpop.xlane.xlu0 %4562
      %v4564 = vsel %vm352, %v4384, -inf
      %4565 = vmax.xlane.f32.xlu0 %v4564
      %v4566 = vpop.xlane.xlu0 %4565
      %v4567 = vsel %vm352, %v4385, -inf
      %4568 = vmax.xlane.f32.xlu0 %v4567
      %v4569 = vpop.xlane.xlu0 %4568
      %v4570 = vsel %vm352, %v4386, -inf
      %4571 = vmax.xlane.f32.xlu0 %v4570
      %v4572 = vpop.xlane.xlu0 %4571
      %v4573 = vsel %vm352, %v4387, -inf
      %4574 = vmax.xlane.f32.xlu0 %v4573
      %v4575 = vpop.xlane.xlu0 %4574
      %v4576 = vsel %vm352, %v4388, -inf
      %4577 = vmax.xlane.f32.xlu0 %v4576
      %v4578 = vpop.xlane.xlu0 %4577
      %v4579 = vsel %vm352, %v4389, -inf
      %4580 = vmax.xlane.f32.xlu0 %v4579
      %v4581 = vpop.xlane.xlu0 %4580
      %v4582 = vsub.f32 %v4326, %v4392
      %v4583 = vsub.f32 %v4327, %v4395
      %v4584 = vsub.f32 %v4328, %v4398
      %v4585 = vsub.f32 %v4329, %v4401
      %v4586 = vsub.f32 %v4330, %v4404
      %v4587 = vsub.f32 %v4331, %v4407
      %v4588 = vsub.f32 %v4332, %v4410
      %v4589 = vsub.f32 %v4333, %v4413
      %v4590 = vsub.f32 %v4334, %v4416
      %v4591 = vsub.f32 %v4335, %v4419
      %v4592 = vsub.f32 %v4336, %v4422
      %v4593 = vsub.f32 %v4337, %v4425
      %v4594 = vsub.f32 %v4338, %v4428
      %v4595 = vsub.f32 %v4339, %v4431
      %v4596 = vsub.f32 %v4340, %v4434
      %v4597 = vsub.f32 %v4341, %v4437
      %v4598 = vsub.f32 %v4342, %v4440
      %v4599 = vsub.f32 %v4343, %v4443
      %v4600 = vsub.f32 %v4344, %v4446
      %v4601 = vsub.f32 %v4345, %v4449
      %v4602 = vsub.f32 %v4346, %v4452
      %v4603 = vsub.f32 %v4347, %v4455
      %v4604 = vsub.f32 %v4348, %v4458
      %v4605 = vsub.f32 %v4349, %v4461
      %v4606 = vsub.f32 %v4350, %v4464
      %v4607 = vsub.f32 %v4351, %v4467
      %v4608 = vsub.f32 %v4352, %v4470
      %v4609 = vsub.f32 %v4353, %v4473
      %v4610 = vsub.f32 %v4354, %v4476
      %v4611 = vsub.f32 %v4355, %v4479
      %v4612 = vsub.f32 %v4356, %v4482
      %v4613 = vsub.f32 %v4357, %v4485
      %v4614 = vsub.f32 %v4358, %v4488
      %v4615 = vsub.f32 %v4359, %v4491
      %v4616 = vsub.f32 %v4360, %v4494
      %v4617 = vsub.f32 %v4361, %v4497
      %v4618 = vsub.f32 %v4362, %v4500
      %v4619 = vsub.f32 %v4363, %v4503
      %v4620 = vsub.f32 %v4364, %v4506
      %v4621 = vsub.f32 %v4365, %v4509
      %v4622 = vsub.f32 %v4366, %v4512
      %v4623 = vsub.f32 %v4367, %v4515
      %v4624 = vsub.f32 %v4368, %v4518
      %v4625 = vsub.f32 %v4369, %v4521
      %v4626 = vsub.f32 %v4370, %v4524
      %v4627 = vsub.f32 %v4371, %v4527
      %v4628 = vsub.f32 %v4372, %v4530
      %v4629 = vsub.f32 %v4373, %v4533
      %v4630 = vsub.f32 %v4374, %v4536
      %v4631 = vsub.f32 %v4375, %v4539
      %v4632 = vsub.f32 %v4376, %v4542
      %v4633 = vsub.f32 %v4377, %v4545
      %v4634 = vsub.f32 %v4378, %v4548
      %v4635 = vsub.f32 %v4379, %v4551
      %v4636 = vsub.f32 %v4380, %v4554
      %v4637 = vsub.f32 %v4381, %v4557
      %v4638 = vsub.f32 %v4382, %v4560
      %v4639 = vsub.f32 %v4383, %v4563
      %v4640 = vsub.f32 %v4384, %v4566
      %v4641 = vsub.f32 %v4385, %v4569
      %v4642 = vsub.f32 %v4386, %v4572
      %v4643 = vsub.f32 %v4387, %v4575
      %v4644 = vsub.f32 %v4388, %v4578
      %v4645 = vsub.f32 %v4389, %v4581
      %v4646 = vmul.f32 %v4582, 1.442695
      %v4647 = vpow.pop %v4646
      %v4648 = vmul.f32 %v4583, 1.442695
      %v4649 = vpow.pop %v4648
      %v4650 = vmul.f32 %v4584, 1.442695
      %v4651 = vpow.pop %v4650
      %v4652 = vmul.f32 %v4585, 1.442695
      %v4653 = vpow.pop %v4652
      %v4654 = vmul.f32 %v4586, 1.442695
      %v4655 = vpow.pop %v4654
      %v4656 = vmul.f32 %v4587, 1.442695
      %v4657 = vpow.pop %v4656
      %v4658 = vmul.f32 %v4588, 1.442695
      %v4659 = vpow.pop %v4658
      %v4660 = vmul.f32 %v4589, 1.442695
      %v4661 = vpow.pop %v4660
      %v4662 = vmul.f32 %v4590, 1.442695
      %v4663 = vpow.pop %v4662
      %v4664 = vmul.f32 %v4591, 1.442695
      %v4665 = vpow.pop %v4664
      %v4666 = vmul.f32 %v4592, 1.442695
      %v4667 = vpow.pop %v4666
      %v4668 = vmul.f32 %v4593, 1.442695
      %v4669 = vpow.pop %v4668
      %v4670 = vmul.f32 %v4594, 1.442695
      %v4671 = vpow.pop %v4670
      %v4672 = vmul.f32 %v4595, 1.442695
      %v4673 = vpow.pop %v4672
      %v4674 = vmul.f32 %v4596, 1.442695
      %v4675 = vpow.pop %v4674
      %v4676 = vmul.f32 %v4597, 1.442695
      %v4677 = vpow.pop %v4676
      %v4678 = vmul.f32 %v4598, 1.442695
      %v4679 = vpow.pop %v4678
      %v4680 = vmul.f32 %v4599, 1.442695
      %v4681 = vpow.pop %v4680
      %v4682 = vmul.f32 %v4600, 1.442695
      %v4683 = vpow.pop %v4682
      %v4684 = vmul.f32 %v4601, 1.442695
      %v4685 = vpow.pop %v4684
      %v4686 = vmul.f32 %v4602, 1.442695
      %v4687 = vpow.pop %v4686
      %v4688 = vmul.f32 %v4603, 1.442695
      %v4689 = vpow.pop %v4688
      %v4690 = vmul.f32 %v4604, 1.442695
      %v4691 = vpow.pop %v4690
      %v4692 = vmul.f32 %v4605, 1.442695
      %v4693 = vpow.pop %v4692
      %v4694 = vmul.f32 %v4606, 1.442695
      %v4695 = vpow.pop %v4694
      %v4696 = vmul.f32 %v4607, 1.442695
      %v4697 = vpow.pop %v4696
      %v4698 = vmul.f32 %v4608, 1.442695
      %v4699 = vpow.pop %v4698
      %v4700 = vmul.f32 %v4609, 1.442695
      %v4701 = vpow.pop %v4700
      %v4702 = vmul.f32 %v4610, 1.442695
      %v4703 = vpow.pop %v4702
      %v4704 = vmul.f32 %v4611, 1.442695
      %v4705 = vpow.pop %v4704
      %v4706 = vmul.f32 %v4612, 1.442695
      %v4707 = vpow.pop %v4706
      %v4708 = vmul.f32 %v4613, 1.442695
      %v4709 = vpow.pop %v4708
      %v4710 = vmul.f32 %v4614, 1.442695
      %v4711 = vpow.pop %v4710
      %v4712 = vmul.f32 %v4615, 1.442695
      %v4713 = vpow.pop %v4712
      %v4714 = vmul.f32 %v4616, 1.442695
      %v4715 = vpow.pop %v4714
      %v4716 = vmul.f32 %v4617, 1.442695
      %v4717 = vpow.pop %v4716
      %v4718 = vmul.f32 %v4618, 1.442695
      %v4719 = vpow.pop %v4718
      %v4720 = vmul.f32 %v4619, 1.442695
      %v4721 = vpow.pop %v4720
      %v4722 = vmul.f32 %v4620, 1.442695
      %v4723 = vpow.pop %v4722
      %v4724 = vmul.f32 %v4621, 1.442695
      %v4725 = vpow.pop %v4724
      %v4726 = vmul.f32 %v4622, 1.442695
      %v4727 = vpow.pop %v4726
      %v4728 = vmul.f32 %v4623, 1.442695
      %v4729 = vpow.pop %v4728
      %v4730 = vmul.f32 %v4624, 1.442695
      %v4731 = vpow.pop %v4730
      %v4732 = vmul.f32 %v4625, 1.442695
      %v4733 = vpow.pop %v4732
      %v4734 = vmul.f32 %v4626, 1.442695
      %v4735 = vpow.pop %v4734
      %v4736 = vmul.f32 %v4627, 1.442695
      %v4737 = vpow.pop %v4736
      %v4738 = vmul.f32 %v4628, 1.442695
      %v4739 = vpow.pop %v4738
      %v4740 = vmul.f32 %v4629, 1.442695
      %v4741 = vpow.pop %v4740
      %v4742 = vmul.f32 %v4630, 1.442695
      %v4743 = vpow.pop %v4742
      %v4744 = vmul.f32 %v4631, 1.442695
      %v4745 = vpow.pop %v4744
      %v4746 = vmul.f32 %v4632, 1.442695
      %v4747 = vpow.pop %v4746
      %v4748 = vmul.f32 %v4633, 1.442695
      %v4749 = vpow.pop %v4748
      %v4750 = vmul.f32 %v4634, 1.442695
      %v4751 = vpow.pop %v4750
      %v4752 = vmul.f32 %v4635, 1.442695
      %v4753 = vpow.pop %v4752
      %v4754 = vmul.f32 %v4636, 1.442695
      %v4755 = vpow.pop %v4754
      %v4756 = vmul.f32 %v4637, 1.442695
      %v4757 = vpow.pop %v4756
      %v4758 = vmul.f32 %v4638, 1.442695
      %v4759 = vpow.pop %v4758
      %v4760 = vmul.f32 %v4639, 1.442695
      %v4761 = vpow.pop %v4760
      %v4762 = vmul.f32 %v4640, 1.442695
      %v4763 = vpow.pop %v4762
      %v4764 = vmul.f32 %v4641, 1.442695
      %v4765 = vpow.pop %v4764
      %v4766 = vmul.f32 %v4642, 1.442695
      %v4767 = vpow.pop %v4766
      %v4768 = vmul.f32 %v4643, 1.442695
      %v4769 = vpow.pop %v4768
      %v4770 = vmul.f32 %v4644, 1.442695
      %v4771 = vpow.pop %v4770
      %v4772 = vmul.f32 %v4645, 1.442695
      %v4773 = vpow.pop %v4772
      %v4774 = vsel %vm352, %v4647, 0.0
      %4775 = vadd.xlane.f32.xlu0 %v4774
      %v4776 = vpop.xlane.xlu0 %4775
      %v4777 = vsel %vm352, %v4649, 0.0
      %4778 = vadd.xlane.f32.xlu0 %v4777
      %v4779 = vpop.xlane.xlu0 %4778
      %v4780 = vsel %vm352, %v4651, 0.0
      %4781 = vadd.xlane.f32.xlu0 %v4780
      %v4782 = vpop.xlane.xlu0 %4781
      %v4783 = vsel %vm352, %v4653, 0.0
      %4784 = vadd.xlane.f32.xlu0 %v4783
      %v4785 = vpop.xlane.xlu0 %4784
      %v4786 = vsel %vm352, %v4655, 0.0
      %4787 = vadd.xlane.f32.xlu0 %v4786
      %v4788 = vpop.xlane.xlu0 %4787
      %v4789 = vsel %vm352, %v4657, 0.0
      %4790 = vadd.xlane.f32.xlu0 %v4789
      %v4791 = vpop.xlane.xlu0 %4790
      %v4792 = vsel %vm352, %v4659, 0.0
      %4793 = vadd.xlane.f32.xlu0 %v4792
      %v4794 = vpop.xlane.xlu0 %4793
      %v4795 = vsel %vm352, %v4661, 0.0
      %4796 = vadd.xlane.f32.xlu0 %v4795
      %v4797 = vpop.xlane.xlu0 %4796
      %v4798 = vsel %vm352, %v4663, 0.0
      %4799 = vadd.xlane.f32.xlu0 %v4798
      %v4800 = vpop.xlane.xlu0 %4799
      %v4801 = vsel %vm352, %v4665, 0.0
      %4802 = vadd.xlane.f32.xlu0 %v4801
      %v4803 = vpop.xlane.xlu0 %4802
      %v4804 = vsel %vm352, %v4667, 0.0
      %4805 = vadd.xlane.f32.xlu0 %v4804
      %v4806 = vpop.xlane.xlu0 %4805
      %v4807 = vsel %vm352, %v4669, 0.0
      %4808 = vadd.xlane.f32.xlu0 %v4807
      %v4809 = vpop.xlane.xlu0 %4808
      %v4810 = vsel %vm352, %v4671, 0.0
      %4811 = vadd.xlane.f32.xlu0 %v4810
      %v4812 = vpop.xlane.xlu0 %4811
      %v4813 = vsel %vm352, %v4673, 0.0
      %4814 = vadd.xlane.f32.xlu0 %v4813
      %v4815 = vpop.xlane.xlu0 %4814
      %v4816 = vsel %vm352, %v4675, 0.0
      %4817 = vadd.xlane.f32.xlu0 %v4816
      %v4818 = vpop.xlane.xlu0 %4817
      %v4819 = vsel %vm352, %v4677, 0.0
      %4820 = vadd.xlane.f32.xlu0 %v4819
      %v4821 = vpop.xlane.xlu0 %4820
      %v4822 = vsel %vm352, %v4679, 0.0
      %4823 = vadd.xlane.f32.xlu0 %v4822
      %v4824 = vpop.xlane.xlu0 %4823
      %v4825 = vsel %vm352, %v4681, 0.0
      %4826 = vadd.xlane.f32.xlu0 %v4825
      %v4827 = vpop.xlane.xlu0 %4826
      %v4828 = vsel %vm352, %v4683, 0.0
      %4829 = vadd.xlane.f32.xlu0 %v4828
      %v4830 = vpop.xlane.xlu0 %4829
      %v4831 = vsel %vm352, %v4685, 0.0
      %4832 = vadd.xlane.f32.xlu0 %v4831
      %v4833 = vpop.xlane.xlu0 %4832
      %v4834 = vsel %vm352, %v4687, 0.0
      %4835 = vadd.xlane.f32.xlu0 %v4834
      %v4836 = vpop.xlane.xlu0 %4835
      %v4837 = vsel %vm352, %v4689, 0.0
      %4838 = vadd.xlane.f32.xlu0 %v4837
      %v4839 = vpop.xlane.xlu0 %4838
      %v4840 = vsel %vm352, %v4691, 0.0
      %4841 = vadd.xlane.f32.xlu0 %v4840
      %v4842 = vpop.xlane.xlu0 %4841
      %v4843 = vsel %vm352, %v4693, 0.0
      %4844 = vadd.xlane.f32.xlu0 %v4843
      %v4845 = vpop.xlane.xlu0 %4844
      %v4846 = vsel %vm352, %v4695, 0.0
      %4847 = vadd.xlane.f32.xlu0 %v4846
      %v4848 = vpop.xlane.xlu0 %4847
      %v4849 = vsel %vm352, %v4697, 0.0
      %4850 = vadd.xlane.f32.xlu0 %v4849
      %v4851 = vpop.xlane.xlu0 %4850
      %v4852 = vsel %vm352, %v4699, 0.0
      %4853 = vadd.xlane.f32.xlu0 %v4852
      %v4854 = vpop.xlane.xlu0 %4853
      %v4855 = vsel %vm352, %v4701, 0.0
      %4856 = vadd.xlane.f32.xlu0 %v4855
      %v4857 = vpop.xlane.xlu0 %4856
      %v4858 = vsel %vm352, %v4703, 0.0
      %4859 = vadd.xlane.f32.xlu0 %v4858
      %v4860 = vpop.xlane.xlu0 %4859
      %v4861 = vsel %vm352, %v4705, 0.0
      %4862 = vadd.xlane.f32.xlu0 %v4861
      %v4863 = vpop.xlane.xlu0 %4862
      %v4864 = vsel %vm352, %v4707, 0.0
      %4865 = vadd.xlane.f32.xlu0 %v4864
      %v4866 = vpop.xlane.xlu0 %4865
      %v4867 = vsel %vm352, %v4709, 0.0
      %4868 = vadd.xlane.f32.xlu0 %v4867
      %v4869 = vpop.xlane.xlu0 %4868
      %v4870 = vsel %vm352, %v4711, 0.0
      %4871 = vadd.xlane.f32.xlu0 %v4870
      %v4872 = vpop.xlane.xlu0 %4871
      %v4873 = vsel %vm352, %v4713, 0.0
      %4874 = vadd.xlane.f32.xlu0 %v4873
      %v4875 = vpop.xlane.xlu0 %4874
      %v4876 = vsel %vm352, %v4715, 0.0
      %4877 = vadd.xlane.f32.xlu0 %v4876
      %v4878 = vpop.xlane.xlu0 %4877
      %v4879 = vsel %vm352, %v4717, 0.0
      %4880 = vadd.xlane.f32.xlu0 %v4879
      %v4881 = vpop.xlane.xlu0 %4880
      %v4882 = vsel %vm352, %v4719, 0.0
      %4883 = vadd.xlane.f32.xlu0 %v4882
      %v4884 = vpop.xlane.xlu0 %4883
      %v4885 = vsel %vm352, %v4721, 0.0
      %4886 = vadd.xlane.f32.xlu0 %v4885
      %v4887 = vpop.xlane.xlu0 %4886
      %v4888 = vsel %vm352, %v4723, 0.0
      %4889 = vadd.xlane.f32.xlu0 %v4888
      %v4890 = vpop.xlane.xlu0 %4889
      %v4891 = vsel %vm352, %v4725, 0.0
      %4892 = vadd.xlane.f32.xlu0 %v4891
      %v4893 = vpop.xlane.xlu0 %4892
      %v4894 = vsel %vm352, %v4727, 0.0
      %4895 = vadd.xlane.f32.xlu0 %v4894
      %v4896 = vpop.xlane.xlu0 %4895
      %v4897 = vsel %vm352, %v4729, 0.0
      %4898 = vadd.xlane.f32.xlu0 %v4897
      %v4899 = vpop.xlane.xlu0 %4898
      %v4900 = vsel %vm352, %v4731, 0.0
      %4901 = vadd.xlane.f32.xlu0 %v4900
      %v4902 = vpop.xlane.xlu0 %4901
      %v4903 = vsel %vm352, %v4733, 0.0
      %4904 = vadd.xlane.f32.xlu0 %v4903
      %v4905 = vpop.xlane.xlu0 %4904
      %v4906 = vsel %vm352, %v4735, 0.0
      %4907 = vadd.xlane.f32.xlu0 %v4906
      %v4908 = vpop.xlane.xlu0 %4907
      %v4909 = vsel %vm352, %v4737, 0.0
      %4910 = vadd.xlane.f32.xlu0 %v4909
      %v4911 = vpop.xlane.xlu0 %4910
      %v4912 = vsel %vm352, %v4739, 0.0
      %4913 = vadd.xlane.f32.xlu0 %v4912
      %v4914 = vpop.xlane.xlu0 %4913
      %v4915 = vsel %vm352, %v4741, 0.0
      %4916 = vadd.xlane.f32.xlu0 %v4915
      %v4917 = vpop.xlane.xlu0 %4916
      %v4918 = vsel %vm352, %v4743, 0.0
      %4919 = vadd.xlane.f32.xlu0 %v4918
      %v4920 = vpop.xlane.xlu0 %4919
      %v4921 = vsel %vm352, %v4745, 0.0
      %4922 = vadd.xlane.f32.xlu0 %v4921
      %v4923 = vpop.xlane.xlu0 %4922
      %v4924 = vsel %vm352, %v4747, 0.0
      %4925 = vadd.xlane.f32.xlu0 %v4924
      %v4926 = vpop.xlane.xlu0 %4925
      %v4927 = vsel %vm352, %v4749, 0.0
      %4928 = vadd.xlane.f32.xlu0 %v4927
      %v4929 = vpop.xlane.xlu0 %4928
      %v4930 = vsel %vm352, %v4751, 0.0
      %4931 = vadd.xlane.f32.xlu0 %v4930
      %v4932 = vpop.xlane.xlu0 %4931
      %v4933 = vsel %vm352, %v4753, 0.0
      %4934 = vadd.xlane.f32.xlu0 %v4933
      %v4935 = vpop.xlane.xlu0 %4934
      %v4936 = vsel %vm352, %v4755, 0.0
      %4937 = vadd.xlane.f32.xlu0 %v4936
      %v4938 = vpop.xlane.xlu0 %4937
      %v4939 = vsel %vm352, %v4757, 0.0
      %4940 = vadd.xlane.f32.xlu0 %v4939
      %v4941 = vpop.xlane.xlu0 %4940
      %v4942 = vsel %vm352, %v4759, 0.0
      %4943 = vadd.xlane.f32.xlu0 %v4942
      %v4944 = vpop.xlane.xlu0 %4943
      %v4945 = vsel %vm352, %v4761, 0.0
      %4946 = vadd.xlane.f32.xlu0 %v4945
      %v4947 = vpop.xlane.xlu0 %4946
      %v4948 = vsel %vm352, %v4763, 0.0
      %4949 = vadd.xlane.f32.xlu0 %v4948
      %v4950 = vpop.xlane.xlu0 %4949
      %v4951 = vsel %vm352, %v4765, 0.0
      %4952 = vadd.xlane.f32.xlu0 %v4951
      %v4953 = vpop.xlane.xlu0 %4952
      %v4954 = vsel %vm352, %v4767, 0.0
      %4955 = vadd.xlane.f32.xlu0 %v4954
      %v4956 = vpop.xlane.xlu0 %4955
      %v4957 = vsel %vm352, %v4769, 0.0
      %4958 = vadd.xlane.f32.xlu0 %v4957
      %v4959 = vpop.xlane.xlu0 %4958
      %v4960 = vsel %vm352, %v4771, 0.0
      %4961 = vadd.xlane.f32.xlu0 %v4960
      %v4962 = vpop.xlane.xlu0 %4961
      %v4963 = vsel %vm352, %v4773, 0.0
      %4964 = vadd.xlane.f32.xlu0 %v4963
      %v4965 = vpop.xlane.xlu0 %4964
      %v4966 = vrcp.pop %v4776
      %v4967 = vrcp.pop %v4779
      %v4968 = vrcp.pop %v4782
      %v4969 = vrcp.pop %v4785
      %v4970 = vrcp.pop %v4788
      %v4971 = vrcp.pop %v4791
      %v4972 = vrcp.pop %v4794
      %v4973 = vrcp.pop %v4797
      %v4974 = vrcp.pop %v4800
      %v4975 = vrcp.pop %v4803
      %v4976 = vrcp.pop %v4806
      %v4977 = vrcp.pop %v4809
      %v4978 = vrcp.pop %v4812
      %v4979 = vrcp.pop %v4815
      %v4980 = vrcp.pop %v4818
      %v4981 = vrcp.pop %v4821
      %v4982 = vrcp.pop %v4824
      %v4983 = vrcp.pop %v4827
      %v4984 = vrcp.pop %v4830
      %v4985 = vrcp.pop %v4833
      %v4986 = vrcp.pop %v4836
      %v4987 = vrcp.pop %v4839
      %v4988 = vrcp.pop %v4842
      %v4989 = vrcp.pop %v4845
      %v4990 = vrcp.pop %v4848
      %v4991 = vrcp.pop %v4851
      %v4992 = vrcp.pop %v4854
      %v4993 = vrcp.pop %v4857
      %v4994 = vrcp.pop %v4860
      %v4995 = vrcp.pop %v4863
      %v4996 = vrcp.pop %v4866
      %v4997 = vrcp.pop %v4869
      %v4998 = vrcp.pop %v4872
      %v4999 = vrcp.pop %v4875
      %v5000 = vrcp.pop %v4878
      %v5001 = vrcp.pop %v4881
      %v5002 = vrcp.pop %v4884
      %v5003 = vrcp.pop %v4887
      %v5004 = vrcp.pop %v4890
      %v5005 = vrcp.pop %v4893
      %v5006 = vrcp.pop %v4896
      %v5007 = vrcp.pop %v4899
      %v5008 = vrcp.pop %v4902
      %v5009 = vrcp.pop %v4905
      %v5010 = vrcp.pop %v4908
      %v5011 = vrcp.pop %v4911
      %v5012 = vrcp.pop %v4914
      %v5013 = vrcp.pop %v4917
      %v5014 = vrcp.pop %v4920
      %v5015 = vrcp.pop %v4923
      %v5016 = vrcp.pop %v4926
      %v5017 = vrcp.pop %v4929
      %v5018 = vrcp.pop %v4932
      %v5019 = vrcp.pop %v4935
      %v5020 = vrcp.pop %v4938
      %v5021 = vrcp.pop %v4941
      %v5022 = vrcp.pop %v4944
      %v5023 = vrcp.pop %v4947
      %v5024 = vrcp.pop %v4950
      %v5025 = vrcp.pop %v4953
      %v5026 = vrcp.pop %v4956
      %v5027 = vrcp.pop %v4959
      %v5028 = vrcp.pop %v4962
      %v5029 = vrcp.pop %v4965
      %v5030 = vmul.f32 %v4647, %v4966
      %v5031 = vmul.f32 %v4649, %v4967
      %v5032 = vmul.f32 %v4651, %v4968
      %v5033 = vmul.f32 %v4653, %v4969
      %v5034 = vmul.f32 %v4655, %v4970
      %v5035 = vmul.f32 %v4657, %v4971
      %v5036 = vmul.f32 %v4659, %v4972
      %v5037 = vmul.f32 %v4661, %v4973
      %v5038 = vmul.f32 %v4663, %v4974
      %v5039 = vmul.f32 %v4665, %v4975
      %v5040 = vmul.f32 %v4667, %v4976
      %v5041 = vmul.f32 %v4669, %v4977
      %v5042 = vmul.f32 %v4671, %v4978
      %v5043 = vmul.f32 %v4673, %v4979
      %v5044 = vmul.f32 %v4675, %v4980
      %v5045 = vmul.f32 %v4677, %v4981
      %v5046 = vmul.f32 %v4679, %v4982
      %v5047 = vmul.f32 %v4681, %v4983
      %v5048 = vmul.f32 %v4683, %v4984
      %v5049 = vmul.f32 %v4685, %v4985
      %v5050 = vmul.f32 %v4687, %v4986
      %v5051 = vmul.f32 %v4689, %v4987
      %v5052 = vmul.f32 %v4691, %v4988
      %v5053 = vmul.f32 %v4693, %v4989
      %v5054 = vmul.f32 %v4695, %v4990
      %v5055 = vmul.f32 %v4697, %v4991
      %v5056 = vmul.f32 %v4699, %v4992
      %v5057 = vmul.f32 %v4701, %v4993
      %v5058 = vmul.f32 %v4703, %v4994
      %v5059 = vmul.f32 %v4705, %v4995
      %v5060 = vmul.f32 %v4707, %v4996
      %v5061 = vmul.f32 %v4709, %v4997
      %v5062 = vmul.f32 %v4711, %v4998
      %v5063 = vmul.f32 %v4713, %v4999
      %v5064 = vmul.f32 %v4715, %v5000
      %v5065 = vmul.f32 %v4717, %v5001
      %v5066 = vmul.f32 %v4719, %v5002
      %v5067 = vmul.f32 %v4721, %v5003
      %v5068 = vmul.f32 %v4723, %v5004
      %v5069 = vmul.f32 %v4725, %v5005
      %v5070 = vmul.f32 %v4727, %v5006
      %v5071 = vmul.f32 %v4729, %v5007
      %v5072 = vmul.f32 %v4731, %v5008
      %v5073 = vmul.f32 %v4733, %v5009
      %v5074 = vmul.f32 %v4735, %v5010
      %v5075 = vmul.f32 %v4737, %v5011
      %v5076 = vmul.f32 %v4739, %v5012
      %v5077 = vmul.f32 %v4741, %v5013
      %v5078 = vmul.f32 %v4743, %v5014
      %v5079 = vmul.f32 %v4745, %v5015
      %v5080 = vmul.f32 %v4747, %v5016
      %v5081 = vmul.f32 %v4749, %v5017
      %v5082 = vmul.f32 %v4751, %v5018
      %v5083 = vmul.f32 %v4753, %v5019
      %v5084 = vmul.f32 %v4755, %v5020
      %v5085 = vmul.f32 %v4757, %v5021
      %v5086 = vmul.f32 %v4759, %v5022
      %v5087 = vmul.f32 %v4761, %v5023
      %v5088 = vmul.f32 %v4763, %v5024
      %v5089 = vmul.f32 %v4765, %v5025
      %v5090 = vmul.f32 %v4767, %v5026
      %v5091 = vmul.f32 %v4769, %v5027
      %v5092 = vmul.f32 %v4771, %v5028
      %v5093 = vmul.f32 %v4773, %v5029
      %v5094 = vmul.f32 %v998, %v5030
      %v5095 = vmul.f32 %v1003, %v5031
      %v5096 = vmul.f32 %v1008, %v5032
      %v5097 = vmul.f32 %v1013, %v5033
      %v5098 = vmul.f32 %v1018, %v5034
      %v5099 = vmul.f32 %v1023, %v5035
      %v5100 = vmul.f32 %v1028, %v5036
      %v5101 = vmul.f32 %v1033, %v5037
      %v5102 = vmul.f32 %v1038, %v5038
      %v5103 = vmul.f32 %v1043, %v5039
      %v5104 = vmul.f32 %v1048, %v5040
      %v5105 = vmul.f32 %v1053, %v5041
      %v5106 = vmul.f32 %v1058, %v5042
      %v5107 = vmul.f32 %v1063, %v5043
      %v5108 = vmul.f32 %v1068, %v5044
      %v5109 = vmul.f32 %v1073, %v5045
      %v5110 = vmul.f32 %v1078, %v5046
      %v5111 = vmul.f32 %v1083, %v5047
      %v5112 = vmul.f32 %v1088, %v5048
      %v5113 = vmul.f32 %v1093, %v5049
      %v5114 = vmul.f32 %v1098, %v5050
      %v5115 = vmul.f32 %v1103, %v5051
      %v5116 = vmul.f32 %v1108, %v5052
      %v5117 = vmul.f32 %v1113, %v5053
      %v5118 = vmul.f32 %v1118, %v5054
      %v5119 = vmul.f32 %v1123, %v5055
      %v5120 = vmul.f32 %v1128, %v5056
      %v5121 = vmul.f32 %v1133, %v5057
      %v5122 = vmul.f32 %v1138, %v5058
      %v5123 = vmul.f32 %v1143, %v5059
      %v5124 = vmul.f32 %v1148, %v5060
      %v5125 = vmul.f32 %v1153, %v5061
      %v5126 = vmul.f32 %v1158, %v5062
      %v5127 = vmul.f32 %v1163, %v5063
      %v5128 = vmul.f32 %v1168, %v5064
      %v5129 = vmul.f32 %v1173, %v5065
      %v5130 = vmul.f32 %v1178, %v5066
      %v5131 = vmul.f32 %v1183, %v5067
      %v5132 = vmul.f32 %v1188, %v5068
      %v5133 = vmul.f32 %v1193, %v5069
      %v5134 = vmul.f32 %v1198, %v5070
      %v5135 = vmul.f32 %v1203, %v5071
      %v5136 = vmul.f32 %v1208, %v5072
      %v5137 = vmul.f32 %v1213, %v5073
      %v5138 = vmul.f32 %v1218, %v5074
      %v5139 = vmul.f32 %v1223, %v5075
      %v5140 = vmul.f32 %v1228, %v5076
      %v5141 = vmul.f32 %v1233, %v5077
      %v5142 = vmul.f32 %v1238, %v5078
      %v5143 = vmul.f32 %v1243, %v5079
      %v5144 = vmul.f32 %v1248, %v5080
      %v5145 = vmul.f32 %v1253, %v5081
      %v5146 = vmul.f32 %v1258, %v5082
      %v5147 = vmul.f32 %v1263, %v5083
      %v5148 = vmul.f32 %v1268, %v5084
      %v5149 = vmul.f32 %v1273, %v5085
      %v5150 = vmul.f32 %v1278, %v5086
      %v5151 = vmul.f32 %v1283, %v5087
      %v5152 = vmul.f32 %v1288, %v5088
      %v5153 = vmul.f32 %v1293, %v5089
      %v5154 = vmul.f32 %v1298, %v5090
      %v5155 = vmul.f32 %v1303, %v5091
      %v5156 = vmul.f32 %v1308, %v5092
      %v5157 = vmul.f32 %v1313, %v5093
      %5158 = vst.msk [vmem:[%s253] sm:$0xff] %vm352, %v5094
      %5159 = vst.msk [vmem:[%s253 + $0x8] sm:$0xff] %vm352, %v5095
      %5160 = vst.msk [vmem:[%s253 + $0x10] sm:$0xff] %vm352, %v5096
      %5161 = vst.msk [vmem:[%s253 + $0x18] sm:$0xff] %vm352, %v5097
      %5162 = vst.msk [vmem:[%s253 + $0x20] sm:$0xff] %vm352, %v5098
      %5163 = vst.msk [vmem:[%s253 + $0x28] sm:$0xff] %vm352, %v5099
      %5164 = vst.msk [vmem:[%s253 + $0x30] sm:$0xff] %vm352, %v5100
      %5165 = vst.msk [vmem:[%s253 + $0x38] sm:$0xff] %vm352, %v5101
      %5166 = vst.msk [vmem:[%s253 + $0x40] sm:$0xff] %vm352, %v5102
      %5167 = vst.msk [vmem:[%s253 + $0x48] sm:$0xff] %vm352, %v5103
      %5168 = vst.msk [vmem:[%s253 + $0x50] sm:$0xff] %vm352, %v5104
      %5169 = vst.msk [vmem:[%s253 + $0x58] sm:$0xff] %vm352, %v5105
      %5170 = vst.msk [vmem:[%s253 + $0x60] sm:$0xff] %vm352, %v5106
      %5171 = vst.msk [vmem:[%s253 + $0x68] sm:$0xff] %vm352, %v5107
      %5172 = vst.msk [vmem:[%s253 + $0x70] sm:$0xff] %vm352, %v5108
      %5173 = vst.msk [vmem:[%s253 + $0x78] sm:$0xff] %vm352, %v5109
      %5174 = vst.msk [vmem:[%s253 + $0x80] sm:$0xff] %vm352, %v5110
      %5175 = vst.msk [vmem:[%s253 + $0x88] sm:$0xff] %vm352, %v5111
      %5176 = vst.msk [vmem:[%s253 + $0x90] sm:$0xff] %vm352, %v5112
      %5177 = vst.msk [vmem:[%s253 + $0x98] sm:$0xff] %vm352, %v5113
      %5178 = vst.msk [vmem:[%s253 + $0xa0] sm:$0xff] %vm352, %v5114
      %5179 = vst.msk [vmem:[%s253 + $0xa8] sm:$0xff] %vm352, %v5115
      %5180 = vst.msk [vmem:[%s253 + $0xb0] sm:$0xff] %vm352, %v5116
      %5181 = vst.msk [vmem:[%s253 + $0xb8] sm:$0xff] %vm352, %v5117
      %5182 = vst.msk [vmem:[%s253 + $0xc0] sm:$0xff] %vm352, %v5118
      %5183 = vst.msk [vmem:[%s253 + $0xc8] sm:$0xff] %vm352, %v5119
      %5184 = vst.msk [vmem:[%s253 + $0xd0] sm:$0xff] %vm352, %v5120
      %5185 = vst.msk [vmem:[%s253 + $0xd8] sm:$0xff] %vm352, %v5121
      %5186 = vst.msk [vmem:[%s253 + $0xe0] sm:$0xff] %vm352, %v5122
      %5187 = vst.msk [vmem:[%s253 + $0xe8] sm:$0xff] %vm352, %v5123
      %5188 = vst.msk [vmem:[%s253 + $0xf0] sm:$0xff] %vm352, %v5124
      %5189 = vst.msk [vmem:[%s253 + $0xf8] sm:$0xff] %vm352, %v5125
      %5190 = vst.msk [vmem:[%s253 + $0x100] sm:$0xff] %vm352, %v5126
      %5191 = vst.msk [vmem:[%s253 + $0x108] sm:$0xff] %vm352, %v5127
      %5192 = vst.msk [vmem:[%s253 + $0x110] sm:$0xff] %vm352, %v5128
      %5193 = vst.msk [vmem:[%s253 + $0x118] sm:$0xff] %vm352, %v5129
      %5194 = vst.msk [vmem:[%s253 + $0x120] sm:$0xff] %vm352, %v5130
      %5195 = vst.msk [vmem:[%s253 + $0x128] sm:$0xff] %vm352, %v5131
      %5196 = vst.msk [vmem:[%s253 + $0x130] sm:$0xff] %vm352, %v5132
      %5197 = vst.msk [vmem:[%s253 + $0x138] sm:$0xff] %vm352, %v5133
      %5198 = vst.msk [vmem:[%s253 + $0x140] sm:$0xff] %vm352, %v5134
      %5199 = vst.msk [vmem:[%s253 + $0x148] sm:$0xff] %vm352, %v5135
      %5200 = vst.msk [vmem:[%s253 + $0x150] sm:$0xff] %vm352, %v5136
      %5201 = vst.msk [vmem:[%s253 + $0x158] sm:$0xff] %vm352, %v5137
      %5202 = vst.msk [vmem:[%s253 + $0x160] sm:$0xff] %vm352, %v5138
      %5203 = vst.msk [vmem:[%s253 + $0x168] sm:$0xff] %vm352, %v5139
      %5204 = vst.msk [vmem:[%s253 + $0x170] sm:$0xff] %vm352, %v5140
      %5205 = vst.msk [vmem:[%s253 + $0x178] sm:$0xff] %vm352, %v5141
      %5206 = vst.msk [vmem:[%s253 + $0x180] sm:$0xff] %vm352, %v5142
      %5207 = vst.msk [vmem:[%s253 + $0x188] sm:$0xff] %vm352, %v5143
      %5208 = vst.msk [vmem:[%s253 + $0x190] sm:$0xff] %vm352, %v5144
      %5209 = vst.msk [vmem:[%s253 + $0x198] sm:$0xff] %vm352, %v5145
      %5210 = vst.msk [vmem:[%s253 + $0x1a0] sm:$0xff] %vm352, %v5146
      %5211 = vst.msk [vmem:[%s253 + $0x1a8] sm:$0xff] %vm352, %v5147
      %5212 = vst.msk [vmem:[%s253 + $0x1b0] sm:$0xff] %vm352, %v5148
      %5213 = vst.msk [vmem:[%s253 + $0x1b8] sm:$0xff] %vm352, %v5149
      %5214 = vst.msk [vmem:[%s253 + $0x1c0] sm:$0xff] %vm352, %v5150
      %5215 = vst.msk [vmem:[%s253 + $0x1c8] sm:$0xff] %vm352, %v5151
      %5216 = vst.msk [vmem:[%s253 + $0x1d0] sm:$0xff] %vm352, %v5152
      %5217 = vst.msk [vmem:[%s253 + $0x1d8] sm:$0xff] %vm352, %v5153
      %5218 = vst.msk [vmem:[%s253 + $0x1e0] sm:$0xff] %vm352, %v5154
      %5219 = vst.msk [vmem:[%s253 + $0x1e8] sm:$0xff] %vm352, %v5155
      %5220 = vst.msk [vmem:[%s253 + $0x1f0] sm:$0xff] %vm352, %v5156
      %5221 = vst.msk [vmem:[%s253 + $0x1f8] sm:$0xff] %vm352, %v5157
      %s5222 = smul.u32 32, %s16
      %p5223 = scmp.lt.s32.totalorder %s5222, 63
      %s5224 = scalar_select %p5223, %s5222, 63
      %s5225 = smul.addr %s5224, 2
      %s5226 = smul.addr %s5225, 8
      %s5227 = scalar_lea.vmem %s5, %s5226
      // Predicated region
      $region41: #{tpu_custom_call.1} parent=39 // pred_check
        %p5228 = pneg %p149
      $region42: #{tpu_custom_call.1} parent=39 // pred_check_branch
        %5230 = sbr.rel (%p5228) target = $region44
      $region43: #{tpu_custom_call.1} parent=39 // pred_region
        %s5231 = smul.u32 32, %s16
      $region44: #{tpu_custom_call.1} parent=39 // pred_fallthru
        _
    $region40: #{tpu_custom_call.1} parent=5 // pred_fallthru
      _
    %p5232 = scmp.le.s32.totalorder 2, %s11
    // Predicated region
    $region45: #{tpu_custom_call.1} parent=5 // pred_check
      %p5233 = pneg %p5232
    $region46: #{tpu_custom_call.1} parent=5 // pred_check_branch
      %5235 = sbr.rel (%p5233) target = $region48
    $region47: #{tpu_custom_call.1} parent=5 // pred_region
      %s5236 = ssub.s32 %s11, 2
      // Predicated region
      $region49: #{tpu_custom_call.1} parent=47 // pred_check
        %p5237 = pneg %p155
      $region50: #{tpu_custom_call.1} parent=47 // pred_check_branch
        %5239 = sbr.rel (%p5237) target = $region52
      $region51: #{tpu_custom_call.1} parent=47 // pred_region
        %s5240 = smul.u32 32, %s17
        %p5241 = scmp.lt.s32.totalorder %s5240, 63
        %s5242 = scalar_select %p5241, %s5240, 63
        %s5243 = smul.addr %s5242, 2
        %s5244 = smul.addr %s5243, 8
        %s5245 = scalar_lea.vmem %s5, %s5244
      $region52: #{tpu_custom_call.1} parent=47 // pred_fallthru
        _
    $region48: #{tpu_custom_call.1} parent=5 // pred_fallthru
      _
  $region6: #{tpu_custom_call.1} parent=0 // loop_footer
    %s15 = sadd.s32 1, %s11
  $region7: #{tpu_custom_call.1} parent=0 // loop_footer_branch
    %10 = sbr.rel target = $region3
  $region8: #{tpu_custom_call.1} parent=0 // loop_exit
    _

</llo_original>
